<compile_context>
chip_gen: v7x
topology: tpu7x:2x2x1
jax: 0.10.0
libtpu: 0.0.40
codegen_flags: <defaults>
</compile_context>

<pallas_src>
import functools

import jax
import jax.numpy as jnp
from jax.experimental import pallas as pl
from jax.experimental.pallas import tpu as pltpu


def init_params(key, *, res_num, in_kernel, in_channels, channels, out_channels):
    """Deterministic synthetic parameters, stored in PyTorch conv layouts."""
    ks = jax.random.split(key, 7)
    s = 0.05
    return dict(
        # in_cnn: MaskedCNN('A', in_channels, channels, in_kernel, bias=False)
        w_in=s * jax.random.normal(ks[0], (channels, in_channels, in_kernel, in_kernel), jnp.float32),
        # resnet_cnn11 / resnet_cnn3 / resnet_cnn12: 1x1 convs with bias
        w_res=s * jax.random.normal(ks[1], (res_num, 3, channels, channels), jnp.float32),   # (out,in)
        b_res=s * jax.random.normal(ks[2], (res_num, 3, channels), jnp.float32),
        # out_cnn1 / out_cnn2
        w_o1=s * jax.random.normal(ks[3], (channels, channels), jnp.float32),                # (out,in)
        b_o1=s * jax.random.normal(ks[4], (channels,), jnp.float32),
        w_o2=s * jax.random.normal(ks[5], (out_channels, channels), jnp.float32),            # (out,in)
        b_o2=s * jax.random.normal(ks[6], (out_channels,), jnp.float32),
    )


def local_pixelcnn_forward(x_nchw, params, *, res_num, in_kernel, tile_rows=256):
    N, Cin, H, W = x_nchw.shape
    k = in_kernel
    pad = k // 2
    C = params["w_in"].shape[0]
    Cout = params["w_o2"].shape[0]
    NHW = N * H * W

    # Mask-'A' taps: full rows above the centre, plus the centre row strictly
    # left of centre (centre excluded).
    allowed = [(ky, kx) for ky in range(k) for kx in range(k)
               if ky < pad or (ky == pad and kx < pad)]
    n_taps = len(allowed)                      # 24 for k=7
    K = n_taps * Cin                           # 72 for Cin=3
    K_pad = max(128, -(-K // 128) * 128)       # pad K once to a lane multiple
    Cout_pad = max(128, -(-Cout // 128) * 128) # lane-dense output slab

    # ---- wrapper glue: layout-only im2col of the allowed taps (plain JAX) ----
    x = jnp.transpose(x_nchw, (0, 2, 3, 1)).astype(jnp.float32)            # NHWC
    xp = jnp.pad(x, ((0, 0), (pad, pad), (pad, pad), (0, 0)))              # spatial halo only
    cols = jnp.concatenate(
        [xp[:, ky:ky + H, kx:kx + W, :] for (ky, kx) in allowed], axis=-1)  # (N,H,W,K)
    rows = -(-NHW // tile_rows) * tile_rows                                 # pad rows to tile multiple
    x_cols = jnp.pad(cols.reshape(NHW, K), ((0, rows - NHW), (0, K_pad - K)))
    x_cols = x_cols.astype(jnp.bfloat16)                                    # bf16 MXU operand

    # ---- weights: packed, bf16 for MXU; biases stay f32 ----
    w_in_packed = jnp.concatenate(
        [params["w_in"][:, :, ky, kx].T for (ky, kx) in allowed], axis=0)   # (K, C) tap-major
    w_in_packed = jnp.pad(w_in_packed, ((0, K_pad - K), (0, 0))).astype(jnp.bfloat16)

    w_res = jnp.transpose(params["w_res"], (0, 1, 3, 2)).reshape(res_num * 3, C, C).astype(jnp.bfloat16)
    b_res = params["b_res"].reshape(res_num * 3, 1, C).astype(jnp.float32)
    w_o1 = params["w_o1"].T.astype(jnp.bfloat16)                            # (C, C)
    b_o1 = params["b_o1"][None, :].astype(jnp.float32)                      # (1, C)
    w_o2 = jnp.pad(params["w_o2"].T, ((0, 0), (0, Cout_pad - Cout))).astype(jnp.bfloat16)
    b_o2 = jnp.pad(params["b_o2"], (0, Cout_pad - Cout))[None, :].astype(jnp.float32)

    # ---- Pallas kernel: all matmul / relu / residual / head compute ----
    def kernel(x_ref, win_ref, wres_ref, bres_ref, wo1_ref, bo1_ref,
               wo2_ref, bo2_ref, o_ref):
        # masked 7x7 conv == single im2col matmul (bf16 operands, f32 acc)
        h = jnp.dot(x_ref[...], win_ref[...], preferred_element_type=jnp.float32)
        h = jnp.maximum(h, 0.0)

        # residual stack of 1x1 convs (channel matmuls on the row tile)
        for i in range(res_num):
            m = h
            for j in range(3):
                idx = 3 * i + j
                m = jnp.dot(m.astype(jnp.bfloat16), wres_ref[idx],
                            preferred_element_type=jnp.float32)
                m = jnp.maximum(m + bres_ref[idx], 0.0)
            h = h + m

        # output head
        y = jnp.dot(h.astype(jnp.bfloat16), wo1_ref[...],
                    preferred_element_type=jnp.float32) + bo1_ref[...]
        y = jnp.maximum(y, 0.0)
        y = jnp.dot(y.astype(jnp.bfloat16), wo2_ref[...],
                    preferred_element_type=jnp.float32) + bo2_ref[...]
        o_ref[...] = y                                   # lane-dense (tile_rows, Cout_pad)

    grid = (rows // tile_rows,)
    out_flat = pl.pallas_call(
        kernel,
        out_shape=jax.ShapeDtypeStruct((rows, Cout_pad), jnp.float32),
        grid=grid,
        in_specs=[
            pl.BlockSpec((tile_rows, K_pad), lambda i: (i, 0)),            # activations: tiled over rows
            pl.BlockSpec((K_pad, C), lambda i: (0, 0)),                    # weights: resident
            pl.BlockSpec((res_num * 3, C, C), lambda i: (0, 0, 0)),
            pl.BlockSpec((res_num * 3, 1, C), lambda i: (0, 0, 0)),
            pl.BlockSpec((C, C), lambda i: (0, 0)),
            pl.BlockSpec((1, C), lambda i: (0, 0)),
            pl.BlockSpec((C, Cout_pad), lambda i: (0, 0)),
            pl.BlockSpec((1, Cout_pad), lambda i: (0, 0)),
        ],
        out_specs=pl.BlockSpec((tile_rows, Cout_pad), lambda i: (i, 0)),
        compiler_params=pltpu.CompilerParams(
            dimension_semantics=("parallel",),            # shards tiles across v7x's 2 TCs
            vmem_limit_bytes=32 * 1024 * 1024,            # tile footprint is << v7x's 64 MiB
        ),
    )(x_cols, w_in_packed, w_res, b_res, w_o1, b_o1, w_o2, b_o2)

    # wrapper-side layout plumbing: slice row/channel padding, back to NCHW
    y = out_flat[:NHW, :Cout].reshape(N, H, W, Cout)
    return jnp.transpose(y, (0, 3, 1, 2))


def reference_forward(x_nchw, params, *, res_num, in_kernel):
    """Pure-JAX f32 reference mirroring the PyTorch module (for validation)."""
    k = in_kernel
    pad = k // 2
    x = jnp.transpose(x_nchw, (0, 2, 3, 1)).astype(jnp.float32)
    mask = jnp.ones((k, k), jnp.float32)
    mask = mask.at[pad, pad:].set(0.0)      # mask 'A'
    mask = mask.at[pad + 1:, :].set(0.0)
    w_in = params["w_in"] * mask[None, None, :, :]
    h = jax.lax.conv_general_dilated(
        x, jnp.transpose(w_in, (2, 3, 1, 0)), window_strides=(1, 1),
        padding=[(pad, pad), (pad, pad)],
        dimension_numbers=("NHWC", "HWIO", "NHWC"))
    h = jnp.maximum(h, 0.0)
    for i in range(res_num):
        m = h
        for j in range(3):
            m = jnp.einsum("nhwc,oc->nhwo", m, params["w_res"][i, j]) + params["b_res"][i, j]
            m = jnp.maximum(m, 0.0)
        h = h + m
    y = jnp.einsum("nhwc,oc->nhwo", h, params["w_o1"]) + params["b_o1"]
    y = jnp.maximum(y, 0.0)
    y = jnp.einsum("nhwc,oc->nhwo", y, params["w_o2"]) + params["b_o2"]
    return jnp.transpose(y, (0, 3, 1, 2))


if __name__ == "__main__":
    # small shapes consistent with LocalPixelCNN (in_channels=3, 7x7 'A' conv)
    N, Cin, H, W = 2, 3, 16, 16
    res_num, in_kernel, channels, out_channels = 2, 7, 128, 128

    key = jax.random.PRNGKey(0)
    k_x, k_p = jax.random.split(key)
    params = init_params(k_p, res_num=res_num, in_kernel=in_kernel,
                         in_channels=Cin, channels=channels, out_channels=out_channels)
    x = jax.random.normal(k_x, (N, Cin, H, W), jnp.float32)

    fwd = jax.jit(functools.partial(local_pixelcnn_forward, params=params,
                                    res_num=res_num, in_kernel=in_kernel,
                                    tile_rows=256))   # NHW=512 -> grid=(2,)
    out = jax.block_until_ready(fwd(x))

    ref = jax.block_until_ready(
        reference_forward(x, params, res_num=res_num, in_kernel=in_kernel))

    assert out.shape == (N, out_channels, H, W)
    err = float(jnp.max(jnp.abs(out - ref)))
    # bf16 MXU operands with f32 accumulation: error budget well below 2e-2
    assert err < 2e-2, f"max abs error {err}"
    print("KERNEL_OK")
</pallas_src>

<mosaic_0001>
module attributes {stable_mosaic.version = 11 : i64} {
  func.func @kernel(%arg0: i32, %arg1: memref<256x128xbf16, #tpu.memory_space<vmem>>, %arg2: memref<128x128xbf16, #tpu.memory_space<vmem>>, %arg3: memref<6x128x128xbf16, #tpu.memory_space<vmem>>, %arg4: memref<6x1x128xf32, #tpu.memory_space<vmem>>, %arg5: memref<128x128xbf16, #tpu.memory_space<vmem>>, %arg6: memref<1x128xf32, #tpu.memory_space<vmem>>, %arg7: memref<128x128xbf16, #tpu.memory_space<vmem>>, %arg8: memref<1x128xf32, #tpu.memory_space<vmem>>, %arg9: memref<256x128xf32, #tpu.memory_space<vmem>>) attributes {dimension_semantics = [#tpu.dimension_semantics<parallel>], iteration_bounds = array<i64: 2>, scalar_prefetch = 0 : i64, scratch_operands = 0 : i64, tpu.core_type = #tpu.core_type<tc>, window_params = [{transform_indices = @transform_0, window_bounds = array<i64: 256, 128>}, {pipeline_mode = #tpu.pipeline_mode<synchronous>, transform_indices = @transform_1, window_bounds = array<i64: 128, 128>}, {pipeline_mode = #tpu.pipeline_mode<synchronous>, transform_indices = @transform_2, window_bounds = array<i64: 6, 128, 128>}, {pipeline_mode = #tpu.pipeline_mode<synchronous>, transform_indices = @transform_3, window_bounds = array<i64: 6, 1, 128>}, {pipeline_mode = #tpu.pipeline_mode<synchronous>, transform_indices = @transform_4, window_bounds = array<i64: 128, 128>}, {pipeline_mode = #tpu.pipeline_mode<synchronous>, transform_indices = @transform_5, window_bounds = array<i64: 1, 128>}, {pipeline_mode = #tpu.pipeline_mode<synchronous>, transform_indices = @transform_6, window_bounds = array<i64: 128, 128>}, {pipeline_mode = #tpu.pipeline_mode<synchronous>, transform_indices = @transform_7, window_bounds = array<i64: 1, 128>}, {transform_indices = @transform_8, window_bounds = array<i64: 256, 128>}]} {
    %c0 = arith.constant 0 : index
    %c0_0 = arith.constant 0 : index
    %0 = vector.load %arg1[%c0, %c0_0] : memref<256x128xbf16, #tpu.memory_space<vmem>>, vector<256x128xbf16>
    %c0_1 = arith.constant 0 : index
    %c0_2 = arith.constant 0 : index
    %1 = vector.load %arg2[%c0_1, %c0_2] : memref<128x128xbf16, #tpu.memory_space<vmem>>, vector<128x128xbf16>
    %cst = arith.constant dense<0.000000e+00> : vector<256x128xf32>
    %2 = tpu.matmul %0, %1, %cst {dimension_numbers = #tpu.dot_dimension_numbers<[1], [0], [0], [1], [0, 0, 1, 1], [], []>} : vector<256x128xbf16>, vector<128x128xbf16>, vector<256x128xf32> -> vector<256x128xf32>
    %cst_3 = arith.constant 0.000000e+00 : f32
    %3 = vector.broadcast %cst_3 : f32 to vector<256x128xf32>
    %4 = arith.maximumf %2, %3 : vector<256x128xf32>
    %5 = arith.truncf %4 : vector<256x128xf32> to vector<256x128xbf16>
    %c0_4 = arith.constant 0 : index
    %c0_5 = arith.constant 0 : index
    %c0_6 = arith.constant 0 : index
    %6 = vector.load %arg3[%c0_4, %c0_5, %c0_6] : memref<6x128x128xbf16, #tpu.memory_space<vmem>>, vector<1x128x128xbf16>
    %7 = vector.shape_cast %6 : vector<1x128x128xbf16> to vector<128x128xbf16>
    %cst_7 = arith.constant dense<0.000000e+00> : vector<256x128xf32>
    %8 = tpu.matmul %5, %7, %cst_7 {dimension_numbers = #tpu.dot_dimension_numbers<[1], [0], [0], [1], [0, 0, 1, 1], [], []>} : vector<256x128xbf16>, vector<128x128xbf16>, vector<256x128xf32> -> vector<256x128xf32>
    %c0_8 = arith.constant 0 : index
    %c0_9 = arith.constant 0 : index
    %c0_10 = arith.constant 0 : index
    %9 = vector.load %arg4[%c0_8, %c0_9, %c0_10] : memref<6x1x128xf32, #tpu.memory_space<vmem>>, vector<1x1x128xf32>
    %10 = vector.shape_cast %9 : vector<1x1x128xf32> to vector<1x128xf32>
    %11 = vector.broadcast %10 : vector<1x128xf32> to vector<256x128xf32>
    %12 = arith.addf %8, %11 : vector<256x128xf32>
    %cst_11 = arith.constant 0.000000e+00 : f32
    %13 = vector.broadcast %cst_11 : f32 to vector<256x128xf32>
    %14 = arith.maximumf %12, %13 : vector<256x128xf32>
    %15 = arith.truncf %14 : vector<256x128xf32> to vector<256x128xbf16>
    %c1 = arith.constant 1 : index
    %c0_12 = arith.constant 0 : index
    %c0_13 = arith.constant 0 : index
    %16 = vector.load %arg3[%c1, %c0_12, %c0_13] : memref<6x128x128xbf16, #tpu.memory_space<vmem>>, vector<1x128x128xbf16>
    %17 = vector.shape_cast %16 : vector<1x128x128xbf16> to vector<128x128xbf16>
    %cst_14 = arith.constant dense<0.000000e+00> : vector<256x128xf32>
    %18 = tpu.matmul %15, %17, %cst_14 {dimension_numbers = #tpu.dot_dimension_numbers<[1], [0], [0], [1], [0, 0, 1, 1], [], []>} : vector<256x128xbf16>, vector<128x128xbf16>, vector<256x128xf32> -> vector<256x128xf32>
    %c1_15 = arith.constant 1 : index
    %c0_16 = arith.constant 0 : index
    %c0_17 = arith.constant 0 : index
    %19 = vector.load %arg4[%c1_15, %c0_16, %c0_17] : memref<6x1x128xf32, #tpu.memory_space<vmem>>, vector<1x1x128xf32>
    %20 = vector.shape_cast %19 : vector<1x1x128xf32> to vector<1x128xf32>
    %21 = vector.broadcast %20 : vector<1x128xf32> to vector<256x128xf32>
    %22 = arith.addf %18, %21 : vector<256x128xf32>
    %cst_18 = arith.constant 0.000000e+00 : f32
    %23 = vector.broadcast %cst_18 : f32 to vector<256x128xf32>
    %24 = arith.maximumf %22, %23 : vector<256x128xf32>
    %25 = arith.truncf %24 : vector<256x128xf32> to vector<256x128xbf16>
    %c2 = arith.constant 2 : index
    %c0_19 = arith.constant 0 : index
    %c0_20 = arith.constant 0 : index
    %26 = vector.load %arg3[%c2, %c0_19, %c0_20] : memref<6x128x128xbf16, #tpu.memory_space<vmem>>, vector<1x128x128xbf16>
    %27 = vector.shape_cast %26 : vector<1x128x128xbf16> to vector<128x128xbf16>
    %cst_21 = arith.constant dense<0.000000e+00> : vector<256x128xf32>
    %28 = tpu.matmul %25, %27, %cst_21 {dimension_numbers = #tpu.dot_dimension_numbers<[1], [0], [0], [1], [0, 0, 1, 1], [], []>} : vector<256x128xbf16>, vector<128x128xbf16>, vector<256x128xf32> -> vector<256x128xf32>
    %c2_22 = arith.constant 2 : index
    %c0_23 = arith.constant 0 : index
    %c0_24 = arith.constant 0 : index
    %29 = vector.load %arg4[%c2_22, %c0_23, %c0_24] : memref<6x1x128xf32, #tpu.memory_space<vmem>>, vector<1x1x128xf32>
    %30 = vector.shape_cast %29 : vector<1x1x128xf32> to vector<1x128xf32>
    %31 = vector.broadcast %30 : vector<1x128xf32> to vector<256x128xf32>
    %32 = arith.addf %28, %31 : vector<256x128xf32>
    %cst_25 = arith.constant 0.000000e+00 : f32
    %33 = vector.broadcast %cst_25 : f32 to vector<256x128xf32>
    %34 = arith.maximumf %32, %33 : vector<256x128xf32>
    %35 = arith.addf %4, %34 : vector<256x128xf32>
    %36 = arith.truncf %35 : vector<256x128xf32> to vector<256x128xbf16>
    %c3 = arith.constant 3 : index
    %c0_26 = arith.constant 0 : index
    %c0_27 = arith.constant 0 : index
    %37 = vector.load %arg3[%c3, %c0_26, %c0_27] : memref<6x128x128xbf16, #tpu.memory_space<vmem>>, vector<1x128x128xbf16>
    %38 = vector.shape_cast %37 : vector<1x128x128xbf16> to vector<128x128xbf16>
    %cst_28 = arith.constant dense<0.000000e+00> : vector<256x128xf32>
    %39 = tpu.matmul %36, %38, %cst_28 {dimension_numbers = #tpu.dot_dimension_numbers<[1], [0], [0], [1], [0, 0, 1, 1], [], []>} : vector<256x128xbf16>, vector<128x128xbf16>, vector<256x128xf32> -> vector<256x128xf32>
    %c3_29 = arith.constant 3 : index
    %c0_30 = arith.constant 0 : index
    %c0_31 = arith.constant 0 : index
    %40 = vector.load %arg4[%c3_29, %c0_30, %c0_31] : memref<6x1x128xf32, #tpu.memory_space<vmem>>, vector<1x1x128xf32>
    %41 = vector.shape_cast %40 : vector<1x1x128xf32> to vector<1x128xf32>
    %42 = vector.broadcast %41 : vector<1x128xf32> to vector<256x128xf32>
    %43 = arith.addf %39, %42 : vector<256x128xf32>
    %cst_32 = arith.constant 0.000000e+00 : f32
    %44 = vector.broadcast %cst_32 : f32 to vector<256x128xf32>
    %45 = arith.maximumf %43, %44 : vector<256x128xf32>
    %46 = arith.truncf %45 : vector<256x128xf32> to vector<256x128xbf16>
    %c4 = arith.constant 4 : index
    %c0_33 = arith.constant 0 : index
    %c0_34 = arith.constant 0 : index
    %47 = vector.load %arg3[%c4, %c0_33, %c0_34] : memref<6x128x128xbf16, #tpu.memory_space<vmem>>, vector<1x128x128xbf16>
    %48 = vector.shape_cast %47 : vector<1x128x128xbf16> to vector<128x128xbf16>
    %cst_35 = arith.constant dense<0.000000e+00> : vector<256x128xf32>
    %49 = tpu.matmul %46, %48, %cst_35 {dimension_numbers = #tpu.dot_dimension_numbers<[1], [0], [0], [1], [0, 0, 1, 1], [], []>} : vector<256x128xbf16>, vector<128x128xbf16>, vector<256x128xf32> -> vector<256x128xf32>
    %c4_36 = arith.constant 4 : index
    %c0_37 = arith.constant 0 : index
    %c0_38 = arith.constant 0 : index
    %50 = vector.load %arg4[%c4_36, %c0_37, %c0_38] : memref<6x1x128xf32, #tpu.memory_space<vmem>>, vector<1x1x128xf32>
    %51 = vector.shape_cast %50 : vector<1x1x128xf32> to vector<1x128xf32>
    %52 = vector.broadcast %51 : vector<1x128xf32> to vector<256x128xf32>
    %53 = arith.addf %49, %52 : vector<256x128xf32>
    %cst_39 = arith.constant 0.000000e+00 : f32
    %54 = vector.broadcast %cst_39 : f32 to vector<256x128xf32>
    %55 = arith.maximumf %53, %54 : vector<256x128xf32>
    %56 = arith.truncf %55 : vector<256x128xf32> to vector<256x128xbf16>
    %c5 = arith.constant 5 : index
    %c0_40 = arith.constant 0 : index
    %c0_41 = arith.constant 0 : index
    %57 = vector.load %arg3[%c5, %c0_40, %c0_41] : memref<6x128x128xbf16, #tpu.memory_space<vmem>>, vector<1x128x128xbf16>
    %58 = vector.shape_cast %57 : vector<1x128x128xbf16> to vector<128x128xbf16>
    %cst_42 = arith.constant dense<0.000000e+00> : vector<256x128xf32>
    %59 = tpu.matmul %56, %58, %cst_42 {dimension_numbers = #tpu.dot_dimension_numbers<[1], [0], [0], [1], [0, 0, 1, 1], [], []>} : vector<256x128xbf16>, vector<128x128xbf16>, vector<256x128xf32> -> vector<256x128xf32>
    %c5_43 = arith.constant 5 : index
    %c0_44 = arith.constant 0 : index
    %c0_45 = arith.constant 0 : index
    %60 = vector.load %arg4[%c5_43, %c0_44, %c0_45] : memref<6x1x128xf32, #tpu.memory_space<vmem>>, vector<1x1x128xf32>
    %61 = vector.shape_cast %60 : vector<1x1x128xf32> to vector<1x128xf32>
    %62 = vector.broadcast %61 : vector<1x128xf32> to vector<256x128xf32>
    %63 = arith.addf %59, %62 : vector<256x128xf32>
    %cst_46 = arith.constant 0.000000e+00 : f32
    %64 = vector.broadcast %cst_46 : f32 to vector<256x128xf32>
    %65 = arith.maximumf %63, %64 : vector<256x128xf32>
    %66 = arith.addf %35, %65 : vector<256x128xf32>
    %67 = arith.truncf %66 : vector<256x128xf32> to vector<256x128xbf16>
    %c0_47 = arith.constant 0 : index
    %c0_48 = arith.constant 0 : index
    %68 = vector.load %arg5[%c0_47, %c0_48] : memref<128x128xbf16, #tpu.memory_space<vmem>>, vector<128x128xbf16>
    %cst_49 = arith.constant dense<0.000000e+00> : vector<256x128xf32>
    %69 = tpu.matmul %67, %68, %cst_49 {dimension_numbers = #tpu.dot_dimension_numbers<[1], [0], [0], [1], [0, 0, 1, 1], [], []>} : vector<256x128xbf16>, vector<128x128xbf16>, vector<256x128xf32> -> vector<256x128xf32>
    %c0_50 = arith.constant 0 : index
    %c0_51 = arith.constant 0 : index
    %70 = vector.load %arg6[%c0_50, %c0_51] : memref<1x128xf32, #tpu.memory_space<vmem>>, vector<1x128xf32>
    %71 = vector.broadcast %70 : vector<1x128xf32> to vector<256x128xf32>
    %72 = arith.addf %69, %71 : vector<256x128xf32>
    %cst_52 = arith.constant 0.000000e+00 : f32
    %73 = vector.broadcast %cst_52 : f32 to vector<256x128xf32>
    %74 = arith.maximumf %72, %73 : vector<256x128xf32>
    %75 = arith.truncf %74 : vector<256x128xf32> to vector<256x128xbf16>
    %c0_53 = arith.constant 0 : index
    %c0_54 = arith.constant 0 : index
    %76 = vector.load %arg7[%c0_53, %c0_54] : memref<128x128xbf16, #tpu.memory_space<vmem>>, vector<128x128xbf16>
    %cst_55 = arith.constant dense<0.000000e+00> : vector<256x128xf32>
    %77 = tpu.matmul %75, %76, %cst_55 {dimension_numbers = #tpu.dot_dimension_numbers<[1], [0], [0], [1], [0, 0, 1, 1], [], []>} : vector<256x128xbf16>, vector<128x128xbf16>, vector<256x128xf32> -> vector<256x128xf32>
    %c0_56 = arith.constant 0 : index
    %c0_57 = arith.constant 0 : index
    %78 = vector.load %arg8[%c0_56, %c0_57] : memref<1x128xf32, #tpu.memory_space<vmem>>, vector<1x128xf32>
    %79 = vector.broadcast %78 : vector<1x128xf32> to vector<256x128xf32>
    %80 = arith.addf %77, %79 : vector<256x128xf32>
    %c0_58 = arith.constant 0 : index
    %c0_59 = arith.constant 0 : index
    %81 = vector.load %arg9[%c0_58, %c0_59] : memref<256x128xf32, #tpu.memory_space<vmem>>, vector<256x128xf32>
    tpu.vector_store %arg9[%c0_58, %c0_59], %80 {strides = array<i32>} : memref<256x128xf32, #tpu.memory_space<vmem>>, vector<256x128xf32>,
    return
  }
  func.func @transform_0(%arg0: i32) -> (i32, i32) {
    %c0_i32 = arith.constant 0 : i32
    %c0_i32_0 = arith.constant 0 : i32
    return %arg0, %c0_i32 : i32, i32
  }
  func.func @transform_1(%arg0: i32) -> (i32, i32) {
    %c0_i32 = arith.constant 0 : i32
    %c0_i32_0 = arith.constant 0 : i32
    %c0_i32_1 = arith.constant 0 : i32
    return %c0_i32, %c0_i32_0 : i32, i32
  }
  func.func @transform_2(%arg0: i32) -> (i32, i32, i32) {
    %c0_i32 = arith.constant 0 : i32
    %c0_i32_0 = arith.constant 0 : i32
    %c0_i32_1 = arith.constant 0 : i32
    %c0_i32_2 = arith.constant 0 : i32
    return %c0_i32, %c0_i32_0, %c0_i32_1 : i32, i32, i32
  }
  func.func @transform_3(%arg0: i32) -> (i32, i32, i32) {
    %c0_i32 = arith.constant 0 : i32
    %c0_i32_0 = arith.constant 0 : i32
    %c0_i32_1 = arith.constant 0 : i32
    %c0_i32_2 = arith.constant 0 : i32
    return %c0_i32, %c0_i32_0, %c0_i32_1 : i32, i32, i32
  }
  func.func @transform_4(%arg0: i32) -> (i32, i32) {
    %c0_i32 = arith.constant 0 : i32
    %c0_i32_0 = arith.constant 0 : i32
    %c0_i32_1 = arith.constant 0 : i32
    return %c0_i32, %c0_i32_0 : i32, i32
  }
  func.func @transform_5(%arg0: i32) -> (i32, i32) {
    %c0_i32 = arith.constant 0 : i32
    %c0_i32_0 = arith.constant 0 : i32
    %c0_i32_1 = arith.constant 0 : i32
    return %c0_i32, %c0_i32_0 : i32, i32
  }
  func.func @transform_6(%arg0: i32) -> (i32, i32) {
    %c0_i32 = arith.constant 0 : i32
    %c0_i32_0 = arith.constant 0 : i32
    %c0_i32_1 = arith.constant 0 : i32
    return %c0_i32, %c0_i32_0 : i32, i32
  }
  func.func @transform_7(%arg0: i32) -> (i32, i32) {
    %c0_i32 = arith.constant 0 : i32
    %c0_i32_0 = arith.constant 0 : i32
    %c0_i32_1 = arith.constant 0 : i32
    return %c0_i32, %c0_i32_0 : i32, i32
  }
  func.func @transform_8(%arg0: i32) -> (i32, i32) {
    %c0_i32 = arith.constant 0 : i32
    %c0_i32_0 = arith.constant 0 : i32
    return %arg0, %c0_i32 : i32, i32
  }
}

</mosaic_0001>

<llo_original>
// kernel: local_pixelcnn_forward.1
$region0: #{local_pixelcnn_forward.1}
  #allocation0 [shape = 'u32[]', space=smem, size = 0x4, offset = 0x4, fixed_abs, tag = 'smem constant byte address 0x4 - core index']
  #allocation1 [shape = 'u32[144,128]{1,0:T(1,128)}', space=vmem, size = 0x12000, scoped, tag = 'internal scratch']
  %s0 = inlined_call_operand.vmem [shape: bf16[512,128], index: 0, kind: input, shape index: {}]
  %s1 = inlined_call_operand.vmem [shape: bf16[128,128], index: 1, kind: input, shape index: {}]
  %s2 = inlined_call_operand.vmem [shape: bf16[6,128,128], index: 2, kind: input, shape index: {}]
  %s3 = inlined_call_operand.vmem [shape: f32[6,1,128], index: 3, kind: input, shape index: {}]
  %s4 = inlined_call_operand.vmem [shape: bf16[128,128], index: 4, kind: input, shape index: {}]
  %s5 = inlined_call_operand.vmem [shape: f32[1,128], index: 5, kind: input, shape index: {}]
  %s6 = inlined_call_operand.vmem [shape: bf16[128,128], index: 6, kind: input, shape index: {}]
  %s7 = inlined_call_operand.vmem [shape: f32[1,128], index: 7, kind: input, shape index: {}]
  %s8 = inlined_call_operand.hbm [shape: f32[512,128], index: 8, kind: output, shape index: {}]
  %s9 = sld [smem:[#allocation0]]
  $region65: #{local_pixelcnn_forward.1} parent=0
    _
  %s11 = ssub.s32 1, %s9
  %s12 = scalar_select 0, %s11, %s9
  $region1: #{local_pixelcnn_forward.1} parent=0
    #allocation2 [shape = 'u8[262144]{0}', space=vmem, size = 0x40000, scoped, tag = 'output window, operand 0']
    #allocation3 [shape = 's32[2]{0}', space=sflag, size = 0x8, scoped, tag = 'scoped memory for local_pixelcnn_forward.1']
    %13 = vsyncpa [#allocation3], 0
    %s14 = scalar_lea.sflag [#allocation3], 1
    %15 = vsyncpa %s14, 0
    loop: start=0, step=1, limit=4
    $region2: #{local_pixelcnn_forward.1} parent=1 // loop_pre_header
      _
    $region3: #{local_pixelcnn_forward.1} parent=1 // loop_header
      %s17 = sphi 0, %s21
      %p18 = scmp.ge.s32.totalorder %s17, 4
      %s27 = sphi 0, %s29
      %s30 = sphi 0, %s27
      %s31 = sphi 0, %s30
      %s47 = sphi 0, %s31
      %s51 = sphi 0, %s51
      %s53 = sphi 0, %s51
      %s54 = sphi 0, %s53
      %s68 = sphi 0, %s54
      %s72 = sphi 0, %s72
      %s74 = sphi 0, %s72
      %s75 = sphi 0, %s74
      %s89 = sphi 0, %s75
      %s93 = sphi 0, %s93
      %s95 = sphi 0, %s93
      %s96 = sphi 0, %s95
      %s110 = sphi 0, %s96
      %s114 = sphi 0, %s114
      %s116 = sphi 0, %s114
      %s117 = sphi 0, %s116
      %s131 = sphi 0, %s117
      %s135 = sphi 0, %s135
      %s137 = sphi 0, %s135
      %s138 = sphi 0, %s137
      %s152 = sphi 0, %s138
      %s156 = sphi 0, %s156
      %s158 = sphi 0, %s156
      %s159 = sphi 0, %s158
      %s173 = sphi 0, %s159
      %s177 = sphi 0, %s177
      %s179 = sphi 0, %s177
      %s180 = sphi 0, %s179
      %s194 = sphi 0, %s180
      %s200 = sphi 0, %s202
      %s203 = sphi 0, %s200
      %s204 = sphi 0, %s203
      %s220 = sphi 0, %s204
    $region4: #{local_pixelcnn_forward.1} parent=1 // loop_header_branch
      %20 = sbr.rel (%p18) target = $region8
    $region5: #{local_pixelcnn_forward.1} parent=1 // loop_body
      %s22 = ssub.s32 %s17, 1
      %s23 = ssub.s32 %s17, 2
      %s24 = sadd.s32 %s17, 1
      %s25 = ssub.s32 %s17, %s24
      %p26 = scmp.eq.s32.totalorder %s25, 0
      %s28 = sadd.s32 %s27, 1
      %s29 = scalar_select %p26, %s27, %s28
      %p32 = pneg %p26
      %p33 = scmp.eq.s32.totalorder %s17, 1
      %p34 = por %p32, %p33
      %p35 = scmp.ne.s32.totalorder %s27, %s30
      %p36 = scmp.eq.s32.totalorder %s17, 0
      %p37 = por %p35, %p36
      %p38 = scmp.ne.s32.totalorder %s27, %s30
      %p39 = scmp.eq.s32.totalorder %s22, 1
      %p40 = por %p38, %p39
      %p41 = scmp.ne.s32.totalorder %s30, %s31
      %p42 = scmp.eq.s32.totalorder %s22, 0
      %p43 = por %p41, %p42
      %p44 = scmp.ne.s32.totalorder %s30, %s31
      %p45 = scmp.eq.s32.totalorder %s23, 1
      %p46 = por %p44, %p45
      %p48 = scmp.ne.s32.totalorder %s31, %s47
      %p49 = scmp.eq.s32.totalorder %s23, 0
      %p50 = por %p48, %p49
      %s52 = sadd.s32 %s51, 1
      %p55 = scmp.eq.s32.totalorder %s17, 1
      %p56 = scmp.ne.s32.totalorder %s51, %s53
      %p57 = scmp.eq.s32.totalorder %s17, 0
      %p58 = por %p56, %p57
      %p59 = scmp.ne.s32.totalorder %s51, %s53
      %p60 = scmp.eq.s32.totalorder %s22, 1
      %p61 = por %p59, %p60
      %p62 = scmp.ne.s32.totalorder %s53, %s54
      %p63 = scmp.eq.s32.totalorder %s22, 0
      %p64 = por %p62, %p63
      %p65 = scmp.ne.s32.totalorder %s53, %s54
      %p66 = scmp.eq.s32.totalorder %s23, 1
      %p67 = por %p65, %p66
      %p69 = scmp.ne.s32.totalorder %s54, %s68
      %p70 = scmp.eq.s32.totalorder %s23, 0
      %p71 = por %p69, %p70
      %s73 = sadd.s32 %s72, 1
      %p76 = scmp.eq.s32.totalorder %s17, 1
      %p77 = scmp.ne.s32.totalorder %s72, %s74
      %p78 = scmp.eq.s32.totalorder %s17, 0
      %p79 = por %p77, %p78
      %p80 = scmp.ne.s32.totalorder %s72, %s74
      %p81 = scmp.eq.s32.totalorder %s22, 1
      %p82 = por %p80, %p81
      %p83 = scmp.ne.s32.totalorder %s74, %s75
      %p84 = scmp.eq.s32.totalorder %s22, 0
      %p85 = por %p83, %p84
      %p86 = scmp.ne.s32.totalorder %s74, %s75
      %p87 = scmp.eq.s32.totalorder %s23, 1
      %p88 = por %p86, %p87
      %p90 = scmp.ne.s32.totalorder %s75, %s89
      %p91 = scmp.eq.s32.totalorder %s23, 0
      %p92 = por %p90, %p91
      %s94 = sadd.s32 %s93, 1
      %p97 = scmp.eq.s32.totalorder %s17, 1
      %p98 = scmp.ne.s32.totalorder %s93, %s95
      %p99 = scmp.eq.s32.totalorder %s17, 0
      %p100 = por %p98, %p99
      %p101 = scmp.ne.s32.totalorder %s93, %s95
      %p102 = scmp.eq.s32.totalorder %s22, 1
      %p103 = por %p101, %p102
      %p104 = scmp.ne.s32.totalorder %s95, %s96
      %p105 = scmp.eq.s32.totalorder %s22, 0
      %p106 = por %p104, %p105
      %p107 = scmp.ne.s32.totalorder %s95, %s96
      %p108 = scmp.eq.s32.totalorder %s23, 1
      %p109 = por %p107, %p108
      %p111 = scmp.ne.s32.totalorder %s96, %s110
      %p112 = scmp.eq.s32.totalorder %s23, 0
      %p113 = por %p111, %p112
      %s115 = sadd.s32 %s114, 1
      %p118 = scmp.eq.s32.totalorder %s17, 1
      %p119 = scmp.ne.s32.totalorder %s114, %s116
      %p120 = scmp.eq.s32.totalorder %s17, 0
      %p121 = por %p119, %p120
      %p122 = scmp.ne.s32.totalorder %s114, %s116
      %p123 = scmp.eq.s32.totalorder %s22, 1
      %p124 = por %p122, %p123
      %p125 = scmp.ne.s32.totalorder %s116, %s117
      %p126 = scmp.eq.s32.totalorder %s22, 0
      %p127 = por %p125, %p126
      %p128 = scmp.ne.s32.totalorder %s116, %s117
      %p129 = scmp.eq.s32.totalorder %s23, 1
      %p130 = por %p128, %p129
      %p132 = scmp.ne.s32.totalorder %s117, %s131
      %p133 = scmp.eq.s32.totalorder %s23, 0
      %p134 = por %p132, %p133
      %s136 = sadd.s32 %s135, 1
      %p139 = scmp.eq.s32.totalorder %s17, 1
      %p140 = scmp.ne.s32.totalorder %s135, %s137
      %p141 = scmp.eq.s32.totalorder %s17, 0
      %p142 = por %p140, %p141
      %p143 = scmp.ne.s32.totalorder %s135, %s137
      %p144 = scmp.eq.s32.totalorder %s22, 1
      %p145 = por %p143, %p144
      %p146 = scmp.ne.s32.totalorder %s137, %s138
      %p147 = scmp.eq.s32.totalorder %s22, 0
      %p148 = por %p146, %p147
      %p149 = scmp.ne.s32.totalorder %s137, %s138
      %p150 = scmp.eq.s32.totalorder %s23, 1
      %p151 = por %p149, %p150
      %p153 = scmp.ne.s32.totalorder %s138, %s152
      %p154 = scmp.eq.s32.totalorder %s23, 0
      %p155 = por %p153, %p154
      %s157 = sadd.s32 %s156, 1
      %p160 = scmp.eq.s32.totalorder %s17, 1
      %p161 = scmp.ne.s32.totalorder %s156, %s158
      %p162 = scmp.eq.s32.totalorder %s17, 0
      %p163 = por %p161, %p162
      %p164 = scmp.ne.s32.totalorder %s156, %s158
      %p165 = scmp.eq.s32.totalorder %s22, 1
      %p166 = por %p164, %p165
      %p167 = scmp.ne.s32.totalorder %s158, %s159
      %p168 = scmp.eq.s32.totalorder %s22, 0
      %p169 = por %p167, %p168
      %p170 = scmp.ne.s32.totalorder %s158, %s159
      %p171 = scmp.eq.s32.totalorder %s23, 1
      %p172 = por %p170, %p171
      %p174 = scmp.ne.s32.totalorder %s159, %s173
      %p175 = scmp.eq.s32.totalorder %s23, 0
      %p176 = por %p174, %p175
      %s178 = sadd.s32 %s177, 1
      %p181 = scmp.eq.s32.totalorder %s17, 1
      %p182 = scmp.ne.s32.totalorder %s177, %s179
      %p183 = scmp.eq.s32.totalorder %s17, 0
      %p184 = por %p182, %p183
      %p185 = scmp.ne.s32.totalorder %s177, %s179
      %p186 = scmp.eq.s32.totalorder %s22, 1
      %p187 = por %p185, %p186
      %p188 = scmp.ne.s32.totalorder %s179, %s180
      %p189 = scmp.eq.s32.totalorder %s22, 0
      %p190 = por %p188, %p189
      %p191 = scmp.ne.s32.totalorder %s179, %s180
      %p192 = scmp.eq.s32.totalorder %s23, 1
      %p193 = por %p191, %p192
      %p195 = scmp.ne.s32.totalorder %s180, %s194
      %p196 = scmp.eq.s32.totalorder %s23, 0
      %p197 = por %p195, %p196
      %s198 = ssub.s32 %s17, %s24
      %p199 = scmp.eq.s32.totalorder %s198, 0
      %s201 = sadd.s32 %s200, 1
      %s202 = scalar_select %p199, %s200, %s201
      %p205 = pneg %p199
      %p206 = scmp.eq.s32.totalorder %s17, 1
      %p207 = por %p205, %p206
      %p208 = scmp.ne.s32.totalorder %s200, %s203
      %p209 = scmp.eq.s32.totalorder %s17, 0
      %p210 = por %p208, %p209
      %p211 = scmp.ne.s32.totalorder %s200, %s203
      %p212 = scmp.eq.s32.totalorder %s22, 1
      %p213 = por %p211, %p212
      %p214 = scmp.ne.s32.totalorder %s203, %s204
      %p215 = scmp.eq.s32.totalorder %s22, 0
      %p216 = por %p214, %p215
      %p217 = scmp.ne.s32.totalorder %s203, %s204
      %p218 = scmp.eq.s32.totalorder %s23, 1
      %p219 = por %p217, %p218
      %p221 = scmp.ne.s32.totalorder %s204, %s220
      %p222 = scmp.eq.s32.totalorder %s23, 0
      %p223 = por %p221, %p222
      %p224 = scmp.le.s32.totalorder 1, %s17
      %p225 = scmp.lt.s32.totalorder %s17, 3
      %p226 = pnand %p224, %p225
      %p227 = pneg %p226
      // Predicated region
      $region9: #{local_pixelcnn_forward.1} parent=5 // pred_check
        _
      $region10: #{local_pixelcnn_forward.1} parent=5 // pred_check_branch
        %229 = sbr.rel (%p226) target = $region12
      $region11: #{local_pixelcnn_forward.1} parent=5 // pred_region
        %s230 = ssub.s32 %s17, 1
        // Predicated region
        $region13: #{local_pixelcnn_forward.1} parent=11 // pred_check
          %p231 = pneg %p64
        $region14: #{local_pixelcnn_forward.1} parent=11 // pred_check_branch
          %233 = sbr.rel (%p231) target = $region16
        $region15: #{local_pixelcnn_forward.1} parent=11 // pred_region
          _
        $region16: #{local_pixelcnn_forward.1} parent=11 // pred_fallthru
          _
        // Predicated region
        $region17: #{local_pixelcnn_forward.1} parent=11 // pred_check
          %p234 = pneg %p85
        $region18: #{local_pixelcnn_forward.1} parent=11 // pred_check_branch
          %236 = sbr.rel (%p234) target = $region20
        $region19: #{local_pixelcnn_forward.1} parent=11 // pred_region
          _
        $region20: #{local_pixelcnn_forward.1} parent=11 // pred_fallthru
          _
        // Predicated region
        $region21: #{local_pixelcnn_forward.1} parent=11 // pred_check
          %p237 = pneg %p106
        $region22: #{local_pixelcnn_forward.1} parent=11 // pred_check_branch
          %239 = sbr.rel (%p237) target = $region24
        $region23: #{local_pixelcnn_forward.1} parent=11 // pred_region
          _
        $region24: #{local_pixelcnn_forward.1} parent=11 // pred_fallthru
          _
        // Predicated region
        $region25: #{local_pixelcnn_forward.1} parent=11 // pred_check
          %p240 = pneg %p127
        $region26: #{local_pixelcnn_forward.1} parent=11 // pred_check_branch
          %242 = sbr.rel (%p240) target = $region28
        $region27: #{local_pixelcnn_forward.1} parent=11 // pred_region
          _
        $region28: #{local_pixelcnn_forward.1} parent=11 // pred_fallthru
          _
        // Predicated region
        $region29: #{local_pixelcnn_forward.1} parent=11 // pred_check
          %p243 = pneg %p148
        $region30: #{local_pixelcnn_forward.1} parent=11 // pred_check_branch
          %245 = sbr.rel (%p243) target = $region32
        $region31: #{local_pixelcnn_forward.1} parent=11 // pred_region
          _
        $region32: #{local_pixelcnn_forward.1} parent=11 // pred_fallthru
          _
        // Predicated region
        $region33: #{local_pixelcnn_forward.1} parent=11 // pred_check
          %p246 = pneg %p169
        $region34: #{local_pixelcnn_forward.1} parent=11 // pred_check_branch
          %248 = sbr.rel (%p246) target = $region36
        $region35: #{local_pixelcnn_forward.1} parent=11 // pred_region
          _
        $region36: #{local_pixelcnn_forward.1} parent=11 // pred_fallthru
          _
        // Predicated region
        $region37: #{local_pixelcnn_forward.1} parent=11 // pred_check
          %p249 = pneg %p190
        $region38: #{local_pixelcnn_forward.1} parent=11 // pred_check_branch
          %251 = sbr.rel (%p249) target = $region40
        $region39: #{local_pixelcnn_forward.1} parent=11 // pred_region
          _
        $region40: #{local_pixelcnn_forward.1} parent=11 // pred_fallthru
          _
      $region12: #{local_pixelcnn_forward.1} parent=5 // pred_fallthru
        _
      %p252 = scmp.lt.s32.totalorder %s17, 2
      // Predicated region
      $region41: #{local_pixelcnn_forward.1} parent=5 // pred_check
        %p253 = pneg %p252
      $region42: #{local_pixelcnn_forward.1} parent=5 // pred_check_branch
        %255 = sbr.rel (%p253) target = $region44
      $region43: #{local_pixelcnn_forward.1} parent=5 // pred_region
        // Predicated region
        $region45: #{local_pixelcnn_forward.1} parent=43 // pred_check
          %p256 = pneg %p37
        $region46: #{local_pixelcnn_forward.1} parent=43 // pred_check_branch
          %258 = sbr.rel (%p256) target = $region48
        $region47: #{local_pixelcnn_forward.1} parent=43 // pred_region
          %s259 = smul.u32 32, %s17
          %p260 = scmp.lt.s32.totalorder %s259, 63
          %s261 = scalar_select %p260, %s259, 63
          %s262 = smul.addr %s261, 4
          %s263 = scalar_lea.vmem %s0, %s262
          %s264 = smul.u32 32, %s17
        $region48: #{local_pixelcnn_forward.1} parent=43 // pred_fallthru
          _
      $region44: #{local_pixelcnn_forward.1} parent=5 // pred_fallthru
        _
      %p265 = scmp.le.s32.totalorder 1, %s17
      %p266 = scmp.lt.s32.totalorder %s17, 3
      %p267 = pnand %p265, %p266
      %p268 = pneg %p267
      // Predicated region
      $region49: #{local_pixelcnn_forward.1} parent=5 // pred_check
        _
      $region50: #{local_pixelcnn_forward.1} parent=5 // pred_check_branch
        %270 = sbr.rel (%p267) target = $region52
      $region51: #{local_pixelcnn_forward.1} parent=5 // pred_region
        %s271 = ssub.s32 %s17, 1
        %s272 = smul.u32 32, %s22
        %p273 = scmp.lt.s32.totalorder %s272, 63
        %s274 = scalar_select %p273, %s272, 63
        %s275 = smul.addr %s274, 4
        %s276 = scalar_lea.vmem %s0, %s275
        %p277 = pneg %p43
        %p278 = pneg %p40
        %p279 = pneg %p64
        %p280 = pneg %p61
        %p281 = pneg %p85
        %p282 = pneg %p82
        %p283 = pneg %p106
        %p284 = pneg %p103
        %p285 = pneg %p127
        %p286 = pneg %p124
        %p287 = pneg %p148
        %p288 = pneg %p145
        %p289 = pneg %p169
        %p290 = pneg %p166
        %p291 = pneg %p190
        %p292 = pneg %p187
        %p293 = pneg %p216
        %p294 = pneg %p213
        %s295 = sand.u32 %s203, 1
        %s296 = scalar_lea.sflag [#allocation3], %s295
        %s297 = sand.u32 %s203, 1
        %s298 = smul.addr %s297, 256
        %s299 = scalar_lea.vmem [#allocation2], %s298
        %s300 = smul.u32 32, %s22
        %p301 = scmp.lt.s32.totalorder %s300, 63
        %s302 = scalar_select %p301, %s300, 63
        %s303 = smul.addr %s302, 4
        %s304 = scalar_lea.vmem %s0, %s303
        %s305 = smul.u32 32, %s22
        %s306 = smul.u32 32, %s22
        %v308 = vld [vmem:[%s304] sm:$0xf]
        %v309 = vld [vmem:[%s304 + $0x4] sm:$0xf]
        %v310 = vld [vmem:[%s304 + $0x8] sm:$0xf]
        %v311 = vld [vmem:[%s304 + $0xc] sm:$0xf]
        %v312 = vld [vmem:[%s304 + $0x10] sm:$0xf]
        %v313 = vld [vmem:[%s304 + $0x14] sm:$0xf]
        %v314 = vld [vmem:[%s304 + $0x18] sm:$0xf]
        %v315 = vld [vmem:[%s304 + $0x1c] sm:$0xf]
        %v316 = vld [vmem:[%s304 + $0x20] sm:$0xf]
        %v317 = vld [vmem:[%s304 + $0x24] sm:$0xf]
        %v318 = vld [vmem:[%s304 + $0x28] sm:$0xf]
        %v319 = vld [vmem:[%s304 + $0x2c] sm:$0xf]
        %v320 = vld [vmem:[%s304 + $0x30] sm:$0xf]
        %v321 = vld [vmem:[%s304 + $0x34] sm:$0xf]
        %v322 = vld [vmem:[%s304 + $0x38] sm:$0xf]
        %v323 = vld [vmem:[%s304 + $0x3c] sm:$0xf]
        %v324 = vld [vmem:[%s304 + $0x40] sm:$0xf]
        %v325 = vld [vmem:[%s304 + $0x44] sm:$0xf]
        %v326 = vld [vmem:[%s304 + $0x48] sm:$0xf]
        %v327 = vld [vmem:[%s304 + $0x4c] sm:$0xf]
        %v328 = vld [vmem:[%s304 + $0x50] sm:$0xf]
        %v329 = vld [vmem:[%s304 + $0x54] sm:$0xf]
        %v330 = vld [vmem:[%s304 + $0x58] sm:$0xf]
        %v331 = vld [vmem:[%s304 + $0x5c] sm:$0xf]
        %v332 = vld [vmem:[%s304 + $0x60] sm:$0xf]
        %v333 = vld [vmem:[%s304 + $0x64] sm:$0xf]
        %v334 = vld [vmem:[%s304 + $0x68] sm:$0xf]
        %v335 = vld [vmem:[%s304 + $0x6c] sm:$0xf]
        %v336 = vld [vmem:[%s304 + $0x70] sm:$0xf]
        %v337 = vld [vmem:[%s304 + $0x74] sm:$0xf]
        %v338 = vld [vmem:[%s304 + $0x78] sm:$0xf]
        %v339 = vld [vmem:[%s304 + $0x7c] sm:$0xf]
        %v340 = vld [vmem:[%s1] sm:$0xf]
        %v341 = vld [vmem:[%s1 + $0x4] sm:$0xf]
        %v342 = vld [vmem:[%s1 + $0x8] sm:$0xf]
        %v343 = vld [vmem:[%s1 + $0xc] sm:$0xf]
        %v344 = vld [vmem:[%s1 + $0x10] sm:$0xf]
        %v345 = vld [vmem:[%s1 + $0x14] sm:$0xf]
        %v346 = vld [vmem:[%s1 + $0x18] sm:$0xf]
        %v347 = vld [vmem:[%s1 + $0x1c] sm:$0xf]
        %v348 = vld [vmem:[%s1 + $0x20] sm:$0xf]
        %v349 = vld [vmem:[%s1 + $0x24] sm:$0xf]
        %v350 = vld [vmem:[%s1 + $0x28] sm:$0xf]
        %v351 = vld [vmem:[%s1 + $0x2c] sm:$0xf]
        %v352 = vld [vmem:[%s1 + $0x30] sm:$0xf]
        %v353 = vld [vmem:[%s1 + $0x34] sm:$0xf]
        %v354 = vld [vmem:[%s1 + $0x38] sm:$0xf]
        %v355 = vld [vmem:[%s1 + $0x3c] sm:$0xf]
        %v388 = vunpack.c.l.b16 %v308
        %v389 = vunpack.c.l.b16 %v309
        %v390 = vunpack.c.l.b16 %v310
        %v391 = vunpack.c.l.b16 %v311
        %v392 = vunpack.c.l.b16 %v312
        %v393 = vunpack.c.l.b16 %v313
        %v394 = vunpack.c.l.b16 %v314
        %v395 = vunpack.c.l.b16 %v315
        %v396 = vunpack.c.l.b16 %v316
        %v397 = vunpack.c.l.b16 %v317
        %v398 = vunpack.c.l.b16 %v318
        %v399 = vunpack.c.l.b16 %v319
        %v400 = vunpack.c.l.b16 %v320
        %v401 = vunpack.c.l.b16 %v321
        %v402 = vunpack.c.l.b16 %v322
        %v403 = vunpack.c.l.b16 %v323
        %v404 = vunpack.c.l.b16 %v324
        %v405 = vunpack.c.l.b16 %v325
        %v406 = vunpack.c.l.b16 %v326
        %v407 = vunpack.c.l.b16 %v327
        %v408 = vunpack.c.l.b16 %v328
        %v409 = vunpack.c.l.b16 %v329
        %v410 = vunpack.c.l.b16 %v330
        %v411 = vunpack.c.l.b16 %v331
        %v412 = vunpack.c.l.b16 %v332
        %v413 = vunpack.c.l.b16 %v333
        %v414 = vunpack.c.l.b16 %v334
        %v415 = vunpack.c.l.b16 %v335
        %v416 = vunpack.c.l.b16 %v336
        %v417 = vunpack.c.l.b16 %v337
        %v418 = vunpack.c.l.b16 %v338
        %v419 = vunpack.c.l.b16 %v339
        %v420 = vpack.c.b16 %v389, %v388
        %v421 = vpack.c.b16 %v391, %v390
        %v422 = vpack.c.b16 %v393, %v392
        %v423 = vpack.c.b16 %v395, %v394
        %v424 = vpack.c.b16 %v397, %v396
        %v425 = vpack.c.b16 %v399, %v398
        %v426 = vpack.c.b16 %v401, %v400
        %v427 = vpack.c.b16 %v403, %v402
        %v428 = vpack.c.b16 %v405, %v404
        %v429 = vpack.c.b16 %v407, %v406
        %v430 = vpack.c.b16 %v409, %v408
        %v431 = vpack.c.b16 %v411, %v410
        %v432 = vpack.c.b16 %v413, %v412
        %v433 = vpack.c.b16 %v415, %v414
        %v434 = vpack.c.b16 %v417, %v416
        %v435 = vpack.c.b16 %v419, %v418
        %v468 = vunpack.c.l.b16 %v340
        %v469 = vunpack.c.l.b16 %v341
        %v470 = vunpack.c.l.b16 %v342
        %v471 = vunpack.c.l.b16 %v343
        %v472 = vunpack.c.l.b16 %v344
        %v473 = vunpack.c.l.b16 %v345
        %v474 = vunpack.c.l.b16 %v346
        %v475 = vunpack.c.l.b16 %v347
        %v476 = vunpack.c.l.b16 %v348
        %v477 = vunpack.c.l.b16 %v349
        %v478 = vunpack.c.l.b16 %v350
        %v479 = vunpack.c.l.b16 %v351
        %v480 = vunpack.c.l.b16 %v352
        %v481 = vunpack.c.l.b16 %v353
        %v482 = vunpack.c.l.b16 %v354
        %v483 = vunpack.c.l.b16 %v355
        %v484 = vpack.c.b16 %v469, %v468
        %v485 = vpack.c.b16 %v471, %v470
        %v486 = vpack.c.b16 %v473, %v472
        %v487 = vpack.c.b16 %v475, %v474
        %v488 = vpack.c.b16 %v477, %v476
        %v489 = vpack.c.b16 %v479, %v478
        %v490 = vpack.c.b16 %v481, %v480
        %v491 = vpack.c.b16 %v483, %v482
        %500 = vmatprep.subr.bf16.mxu0 0
        %501 = vmatpush1.bf16.msra.mxu0 %v484
        %502 = vmatprep.subr.bf16.mxu0 0
        %503 = vmatpush1.bf16.msra.mxu0 %v485
        %504 = vmatprep.subr.bf16.mxu0 0
        %505 = vmatpush1.bf16.msra.mxu0 %v486
        %506 = vmatprep.subr.bf16.mxu0 0
        %507 = vmatpush1.bf16.msra.mxu0 %v487
        %508 = vmatprep.subr.bf16.mxu0 0
        %509 = vmatpush1.bf16.msra.mxu0 %v488
        %510 = vmatprep.subr.bf16.mxu0 0
        %511 = vmatpush1.bf16.msra.mxu0 %v489
        %512 = vmatprep.subr.bf16.mxu0 0
        %513 = vmatpush1.bf16.msra.mxu0 %v490
        %514 = vmatprep.subr.bf16.mxu0 0
        %515 = vmatpush1.bf16.msra.mxu0 %v491
        %516 = vmatprep.subr.bf16.mxu0 0
        %517 = vmatpush1.bf16.msra.mxu0 0
        %518 = vmatprep.subr.bf16.mxu0 0
        %519 = vmatpush1.bf16.msra.mxu0 0
        %520 = vmatprep.subr.bf16.mxu0 0
        %521 = vmatpush1.bf16.msra.mxu0 0
        %522 = vmatprep.subr.bf16.mxu0 0
        %523 = vmatpush1.bf16.msra.mxu0 0
        %524 = vmatprep.subr.bf16.mxu0 0
        %525 = vmatpush1.bf16.msra.mxu0 0
        %526 = vmatprep.subr.bf16.mxu0 0
        %527 = vmatpush1.bf16.msra.mxu0 0
        %528 = vmatprep.subr.bf16.mxu0 0
        %529 = vmatpush1.bf16.msra.mxu0 0
        %530 = vmatprep.subr.bf16.mxu0 0
        %531 = vmatpush1.bf16.msra.mxu0 0
        %532 = vmatprep.mubr.bf16.mxu0 0
        %533 = vmatmul.mubr.bf16.gmra.mrb[0].mxu0 %v420
        %v534 = vpop.f32.mrb[0].mxu0
        %v535 = vadd.f32 0.0, %v534
        %v536 = vpop.f32.mrb[0].mxu0
        %v537 = vpop.f32.mrb[0].mxu0
        %v538 = vadd.f32 0.0, %v537
        %v539 = vpop.f32.mrb[0].mxu0
        %540 = vmatprep.mubr.bf16.mxu0 0
        %541 = vmatmul.mubr.bf16.gmra.mrb[0].mxu0 %v421
        %v542 = vpop.f32.mrb[0].mxu0
        %v543 = vadd.f32 0.0, %v542
        %v544 = vpop.f32.mrb[0].mxu0
        %v545 = vpop.f32.mrb[0].mxu0
        %v546 = vadd.f32 0.0, %v545
        %v547 = vpop.f32.mrb[0].mxu0
        %548 = vmatprep.mubr.bf16.mxu0 0
        %549 = vmatmul.mubr.bf16.gmra.mrb[0].mxu0 %v422
        %v550 = vpop.f32.mrb[0].mxu0
        %v551 = vadd.f32 0.0, %v550
        %v552 = vpop.f32.mrb[0].mxu0
        %v553 = vpop.f32.mrb[0].mxu0
        %v554 = vadd.f32 0.0, %v553
        %v555 = vpop.f32.mrb[0].mxu0
        %556 = vmatprep.mubr.bf16.mxu0 0
        %557 = vmatmul.mubr.bf16.gmra.mrb[0].mxu0 %v423
        %v558 = vpop.f32.mrb[0].mxu0
        %v559 = vadd.f32 0.0, %v558
        %v560 = vpop.f32.mrb[0].mxu0
        %v561 = vpop.f32.mrb[0].mxu0
        %v562 = vadd.f32 0.0, %v561
        %v563 = vpop.f32.mrb[0].mxu0
        %564 = vmatprep.mubr.bf16.mxu0 0
        %565 = vmatmul.mubr.bf16.gmra.mrb[0].mxu0 %v424
        %v566 = vpop.f32.mrb[0].mxu0
        %v567 = vadd.f32 0.0, %v566
        %v568 = vpop.f32.mrb[0].mxu0
        %v569 = vpop.f32.mrb[0].mxu0
        %v570 = vadd.f32 0.0, %v569
        %v571 = vpop.f32.mrb[0].mxu0
        %572 = vmatprep.mubr.bf16.mxu0 0
        %573 = vmatmul.mubr.bf16.gmra.mrb[0].mxu0 %v425
        %v574 = vpop.f32.mrb[0].mxu0
        %v575 = vadd.f32 0.0, %v574
        %v576 = vpop.f32.mrb[0].mxu0
        %v577 = vpop.f32.mrb[0].mxu0
        %v578 = vadd.f32 0.0, %v577
        %v579 = vpop.f32.mrb[0].mxu0
        %580 = vmatprep.mubr.bf16.mxu0 0
        %581 = vmatmul.mubr.bf16.gmra.mrb[0].mxu0 %v426
        %v582 = vpop.f32.mrb[0].mxu0
        %v583 = vadd.f32 0.0, %v582
        %v584 = vpop.f32.mrb[0].mxu0
        %v585 = vpop.f32.mrb[0].mxu0
        %v586 = vadd.f32 0.0, %v585
        %v587 = vpop.f32.mrb[0].mxu0
        %588 = vmatprep.mubr.bf16.mxu0 0
        %589 = vmatmul.mubr.bf16.gmra.mrb[0].mxu0 %v427
        %v590 = vpop.f32.mrb[0].mxu0
        %v591 = vadd.f32 0.0, %v590
        %v592 = vpop.f32.mrb[0].mxu0
        %v593 = vpop.f32.mrb[0].mxu0
        %v594 = vadd.f32 0.0, %v593
        %v595 = vpop.f32.mrb[0].mxu0
        %596 = vmatprep.mubr.bf16.mxu0 0
        %597 = vmatmul.mubr.bf16.gmra.mrb[0].mxu0 %v428
        %v598 = vpop.f32.mrb[0].mxu0
        %v599 = vadd.f32 0.0, %v598
        %v600 = vpop.f32.mrb[0].mxu0
        %v601 = vpop.f32.mrb[0].mxu0
        %v602 = vadd.f32 0.0, %v601
        %v603 = vpop.f32.mrb[0].mxu0
        %604 = vmatprep.mubr.bf16.mxu0 0
        %605 = vmatmul.mubr.bf16.gmra.mrb[0].mxu0 %v429
        %v606 = vpop.f32.mrb[0].mxu0
        %v607 = vadd.f32 0.0, %v606
        %v608 = vpop.f32.mrb[0].mxu0
        %v609 = vpop.f32.mrb[0].mxu0
        %v610 = vadd.f32 0.0, %v609
        %v611 = vpop.f32.mrb[0].mxu0
        %612 = vmatprep.mubr.bf16.mxu0 0
        %613 = vmatmul.mubr.bf16.gmra.mrb[0].mxu0 %v430
        %v614 = vpop.f32.mrb[0].mxu0
        %v615 = vadd.f32 0.0, %v614
        %v616 = vpop.f32.mrb[0].mxu0
        %v617 = vpop.f32.mrb[0].mxu0
        %v618 = vadd.f32 0.0, %v617
        %v619 = vpop.f32.mrb[0].mxu0
        %620 = vmatprep.mubr.bf16.mxu0 0
        %621 = vmatmul.mubr.bf16.gmra.mrb[0].mxu0 %v431
        %v622 = vpop.f32.mrb[0].mxu0
        %v623 = vadd.f32 0.0, %v622
        %v624 = vpop.f32.mrb[0].mxu0
        %v625 = vpop.f32.mrb[0].mxu0
        %v626 = vadd.f32 0.0, %v625
        %v627 = vpop.f32.mrb[0].mxu0
        %628 = vmatprep.mubr.bf16.mxu0 0
        %629 = vmatmul.mubr.bf16.gmra.mrb[0].mxu0 %v432
        %v630 = vpop.f32.mrb[0].mxu0
        %v631 = vadd.f32 0.0, %v630
        %v632 = vpop.f32.mrb[0].mxu0
        %v633 = vpop.f32.mrb[0].mxu0
        %v634 = vadd.f32 0.0, %v633
        %v635 = vpop.f32.mrb[0].mxu0
        %636 = vmatprep.mubr.bf16.mxu0 0
        %637 = vmatmul.mubr.bf16.gmra.mrb[0].mxu0 %v433
        %v638 = vpop.f32.mrb[0].mxu0
        %v639 = vadd.f32 0.0, %v638
        %v640 = vpop.f32.mrb[0].mxu0
        %v641 = vpop.f32.mrb[0].mxu0
        %v642 = vadd.f32 0.0, %v641
        %v643 = vpop.f32.mrb[0].mxu0
        %644 = vmatprep.mubr.bf16.mxu0 0
        %645 = vmatmul.mubr.bf16.gmra.mrb[0].mxu0 %v434
        %v646 = vpop.f32.mrb[0].mxu0
        %v647 = vadd.f32 0.0, %v646
        %v648 = vpop.f32.mrb[0].mxu0
        %v649 = vpop.f32.mrb[0].mxu0
        %v650 = vadd.f32 0.0, %v649
        %v651 = vpop.f32.mrb[0].mxu0
        %652 = vmatprep.mubr.bf16.mxu0 0
        %653 = vmatmul.mubr.bf16.gmra.mrb[0].mxu0 %v435
        %v654 = vpop.f32.mrb[0].mxu0
        %v655 = vadd.f32 0.0, %v654
        %v656 = vpop.f32.mrb[0].mxu0
        %v657 = vpop.f32.mrb[0].mxu0
        %v658 = vadd.f32 0.0, %v657
        %v659 = vpop.f32.mrb[0].mxu0
        %660 = vdwg.mxu0
        %v661 = vmax.f32 %v535, 0.0
        %v662 = vmax.f32 %v538, 0.0
        %v663 = vmax.f32 %v543, 0.0
        %v664 = vmax.f32 %v546, 0.0
        %v665 = vmax.f32 %v551, 0.0
        %v666 = vmax.f32 %v554, 0.0
        %v667 = vmax.f32 %v559, 0.0
        %v668 = vmax.f32 %v562, 0.0
        %v669 = vmax.f32 %v567, 0.0
        %v670 = vmax.f32 %v570, 0.0
        %v671 = vmax.f32 %v575, 0.0
        %v672 = vmax.f32 %v578, 0.0
        %v673 = vmax.f32 %v583, 0.0
        %v674 = vmax.f32 %v586, 0.0
        %v675 = vmax.f32 %v591, 0.0
        %v676 = vmax.f32 %v594, 0.0
        %v677 = vmax.f32 %v599, 0.0
        %v678 = vmax.f32 %v602, 0.0
        %v679 = vmax.f32 %v607, 0.0
        %v680 = vmax.f32 %v610, 0.0
        %v681 = vmax.f32 %v615, 0.0
        %v682 = vmax.f32 %v618, 0.0
        %v683 = vmax.f32 %v623, 0.0
        %v684 = vmax.f32 %v626, 0.0
        %v685 = vmax.f32 %v631, 0.0
        %v686 = vmax.f32 %v634, 0.0
        %v687 = vmax.f32 %v639, 0.0
        %v688 = vmax.f32 %v642, 0.0
        %v689 = vmax.f32 %v647, 0.0
        %v690 = vmax.f32 %v650, 0.0
        %v691 = vmax.f32 %v655, 0.0
        %v692 = vmax.f32 %v658, 0.0
        %v693 = vpack.c.bf16 %v662, %v661
        %v694 = vpack.c.bf16 %v664, %v663
        %v695 = vpack.c.bf16 %v666, %v665
        %v696 = vpack.c.bf16 %v668, %v667
        %v697 = vpack.c.bf16 %v670, %v669
        %v698 = vpack.c.bf16 %v672, %v671
        %v699 = vpack.c.bf16 %v674, %v673
        %v700 = vpack.c.bf16 %v676, %v675
        %v701 = vpack.c.bf16 %v678, %v677
        %v702 = vpack.c.bf16 %v680, %v679
        %v703 = vpack.c.bf16 %v682, %v681
        %v704 = vpack.c.bf16 %v684, %v683
        %v705 = vpack.c.bf16 %v686, %v685
        %v706 = vpack.c.bf16 %v688, %v687
        %v707 = vpack.c.bf16 %v690, %v689
        %v708 = vpack.c.bf16 %v692, %v691
        %v709 = vld [vmem:[%s2] sm:$0xf]
        %v710 = vld [vmem:[%s2 + $0x4] sm:$0xf]
        %v711 = vld [vmem:[%s2 + $0x8] sm:$0xf]
        %v712 = vld [vmem:[%s2 + $0xc] sm:$0xf]
        %v713 = vld [vmem:[%s2 + $0x10] sm:$0xf]
        %v714 = vld [vmem:[%s2 + $0x14] sm:$0xf]
        %v715 = vld [vmem:[%s2 + $0x18] sm:$0xf]
        %v716 = vld [vmem:[%s2 + $0x1c] sm:$0xf]
        %v717 = vld [vmem:[%s2 + $0x20] sm:$0xf]
        %v718 = vld [vmem:[%s2 + $0x24] sm:$0xf]
        %v719 = vld [vmem:[%s2 + $0x28] sm:$0xf]
        %v720 = vld [vmem:[%s2 + $0x2c] sm:$0xf]
        %v721 = vld [vmem:[%s2 + $0x30] sm:$0xf]
        %v722 = vld [vmem:[%s2 + $0x34] sm:$0xf]
        %v723 = vld [vmem:[%s2 + $0x38] sm:$0xf]
        %v724 = vld [vmem:[%s2 + $0x3c] sm:$0xf]
        %v725 = vld [vmem:[%s3] sm:$0x1]
        %v727 = vlaneseq
        %v728 = vshrl.u32 %v727, 7
        %v729 = vsub.s32 0, %v728
        %v730 = vrot.slane %v725, %v729
        %v748 = vunpack.c.l.b16 %v709
        %v749 = vunpack.c.l.b16 %v710
        %v750 = vunpack.c.l.b16 %v711
        %v751 = vunpack.c.l.b16 %v712
        %v752 = vunpack.c.l.b16 %v713
        %v753 = vunpack.c.l.b16 %v714
        %v754 = vunpack.c.l.b16 %v715
        %v755 = vunpack.c.l.b16 %v716
        %v756 = vunpack.c.l.b16 %v717
        %v757 = vunpack.c.l.b16 %v718
        %v758 = vunpack.c.l.b16 %v719
        %v759 = vunpack.c.l.b16 %v720
        %v760 = vunpack.c.l.b16 %v721
        %v761 = vunpack.c.l.b16 %v722
        %v762 = vunpack.c.l.b16 %v723
        %v763 = vunpack.c.l.b16 %v724
        %v764 = vpack.c.b16 %v749, %v748
        %v765 = vpack.c.b16 %v751, %v750
        %v766 = vpack.c.b16 %v753, %v752
        %v767 = vpack.c.b16 %v755, %v754
        %v768 = vpack.c.b16 %v757, %v756
        %v769 = vpack.c.b16 %v759, %v758
        %v770 = vpack.c.b16 %v761, %v760
        %v771 = vpack.c.b16 %v763, %v762
        %780 = vmatprep.subr.bf16.mxu0 0
        %781 = vmatpush1.bf16.msra.mxu0 %v764
        %782 = vmatprep.subr.bf16.mxu0 0
        %783 = vmatpush1.bf16.msra.mxu0 %v765
        %784 = vmatprep.subr.bf16.mxu0 0
        %785 = vmatpush1.bf16.msra.mxu0 %v766
        %786 = vmatprep.subr.bf16.mxu0 0
        %787 = vmatpush1.bf16.msra.mxu0 %v767
        %788 = vmatprep.subr.bf16.mxu0 0
        %789 = vmatpush1.bf16.msra.mxu0 %v768
        %790 = vmatprep.subr.bf16.mxu0 0
        %791 = vmatpush1.bf16.msra.mxu0 %v769
        %792 = vmatprep.subr.bf16.mxu0 0
        %793 = vmatpush1.bf16.msra.mxu0 %v770
        %794 = vmatprep.subr.bf16.mxu0 0
        %795 = vmatpush1.bf16.msra.mxu0 %v771
        %796 = vmatprep.subr.bf16.mxu0 0
        %797 = vmatpush1.bf16.msra.mxu0 0
        %798 = vmatprep.subr.bf16.mxu0 0
        %799 = vmatpush1.bf16.msra.mxu0 0
        %800 = vmatprep.subr.bf16.mxu0 0
        %801 = vmatpush1.bf16.msra.mxu0 0
        %802 = vmatprep.subr.bf16.mxu0 0
        %803 = vmatpush1.bf16.msra.mxu0 0
        %804 = vmatprep.subr.bf16.mxu0 0
        %805 = vmatpush1.bf16.msra.mxu0 0
        %806 = vmatprep.subr.bf16.mxu0 0
        %807 = vmatpush1.bf16.msra.mxu0 0
        %808 = vmatprep.subr.bf16.mxu0 0
        %809 = vmatpush1.bf16.msra.mxu0 0
        %810 = vmatprep.subr.bf16.mxu0 0
        %811 = vmatpush1.bf16.msra.mxu0 0
        %812 = vmatprep.mubr.bf16.mxu0 0
        %813 = vmatmul.mubr.bf16.gmra.mrb[0].mxu0 %v693
        %v814 = vpop.f32.mrb[0].mxu0
        %v815 = vadd.f32 %v730, %v814
        %v816 = vpop.f32.mrb[0].mxu0
        %v817 = vpop.f32.mrb[0].mxu0
        %v818 = vadd.f32 %v730, %v817
        %v819 = vpop.f32.mrb[0].mxu0
        %820 = vmatprep.mubr.bf16.mxu0 0
        %821 = vmatmul.mubr.bf16.gmra.mrb[0].mxu0 %v694
        %v822 = vpop.f32.mrb[0].mxu0
        %v823 = vadd.f32 %v730, %v822
        %v824 = vpop.f32.mrb[0].mxu0
        %v825 = vpop.f32.mrb[0].mxu0
        %v826 = vadd.f32 %v730, %v825
        %v827 = vpop.f32.mrb[0].mxu0
        %828 = vmatprep.mubr.bf16.mxu0 0
        %829 = vmatmul.mubr.bf16.gmra.mrb[0].mxu0 %v695
        %v830 = vpop.f32.mrb[0].mxu0
        %v831 = vadd.f32 %v730, %v830
        %v832 = vpop.f32.mrb[0].mxu0
        %v833 = vpop.f32.mrb[0].mxu0
        %v834 = vadd.f32 %v730, %v833
        %v835 = vpop.f32.mrb[0].mxu0
        %836 = vmatprep.mubr.bf16.mxu0 0
        %837 = vmatmul.mubr.bf16.gmra.mrb[0].mxu0 %v696
        %v838 = vpop.f32.mrb[0].mxu0
        %v839 = vadd.f32 %v730, %v838
        %v840 = vpop.f32.mrb[0].mxu0
        %v841 = vpop.f32.mrb[0].mxu0
        %v842 = vadd.f32 %v730, %v841
        %v843 = vpop.f32.mrb[0].mxu0
        %844 = vmatprep.mubr.bf16.mxu0 0
        %845 = vmatmul.mubr.bf16.gmra.mrb[0].mxu0 %v697
        %v846 = vpop.f32.mrb[0].mxu0
        %v847 = vadd.f32 %v730, %v846
        %v848 = vpop.f32.mrb[0].mxu0
        %v849 = vpop.f32.mrb[0].mxu0
        %v850 = vadd.f32 %v730, %v849
        %v851 = vpop.f32.mrb[0].mxu0
        %852 = vmatprep.mubr.bf16.mxu0 0
        %853 = vmatmul.mubr.bf16.gmra.mrb[0].mxu0 %v698
        %v854 = vpop.f32.mrb[0].mxu0
        %v855 = vadd.f32 %v730, %v854
        %v856 = vpop.f32.mrb[0].mxu0
        %v857 = vpop.f32.mrb[0].mxu0
        %v858 = vadd.f32 %v730, %v857
        %v859 = vpop.f32.mrb[0].mxu0
        %860 = vmatprep.mubr.bf16.mxu0 0
        %861 = vmatmul.mubr.bf16.gmra.mrb[0].mxu0 %v699
        %v862 = vpop.f32.mrb[0].mxu0
        %v863 = vadd.f32 %v730, %v862
        %v864 = vpop.f32.mrb[0].mxu0
        %v865 = vpop.f32.mrb[0].mxu0
        %v866 = vadd.f32 %v730, %v865
        %v867 = vpop.f32.mrb[0].mxu0
        %868 = vmatprep.mubr.bf16.mxu0 0
        %869 = vmatmul.mubr.bf16.gmra.mrb[0].mxu0 %v700
        %v870 = vpop.f32.mrb[0].mxu0
        %v871 = vadd.f32 %v730, %v870
        %v872 = vpop.f32.mrb[0].mxu0
        %v873 = vpop.f32.mrb[0].mxu0
        %v874 = vadd.f32 %v730, %v873
        %v875 = vpop.f32.mrb[0].mxu0
        %876 = vmatprep.mubr.bf16.mxu0 0
        %877 = vmatmul.mubr.bf16.gmra.mrb[0].mxu0 %v701
        %v878 = vpop.f32.mrb[0].mxu0
        %v879 = vadd.f32 %v730, %v878
        %v880 = vpop.f32.mrb[0].mxu0
        %v881 = vpop.f32.mrb[0].mxu0
        %v882 = vadd.f32 %v730, %v881
        %v883 = vpop.f32.mrb[0].mxu0
        %884 = vmatprep.mubr.bf16.mxu0 0
        %885 = vmatmul.mubr.bf16.gmra.mrb[0].mxu0 %v702
        %v886 = vpop.f32.mrb[0].mxu0
        %v887 = vadd.f32 %v730, %v886
        %v888 = vpop.f32.mrb[0].mxu0
        %v889 = vpop.f32.mrb[0].mxu0
        %v890 = vadd.f32 %v730, %v889
        %v891 = vpop.f32.mrb[0].mxu0
        %892 = vmatprep.mubr.bf16.mxu0 0
        %893 = vmatmul.mubr.bf16.gmra.mrb[0].mxu0 %v703
        %v894 = vpop.f32.mrb[0].mxu0
        %v895 = vadd.f32 %v730, %v894
        %v896 = vpop.f32.mrb[0].mxu0
        %v897 = vpop.f32.mrb[0].mxu0
        %v898 = vadd.f32 %v730, %v897
        %v899 = vpop.f32.mrb[0].mxu0
        %900 = vmatprep.mubr.bf16.mxu0 0
        %901 = vmatmul.mubr.bf16.gmra.mrb[0].mxu0 %v704
        %v902 = vpop.f32.mrb[0].mxu0
        %v903 = vadd.f32 %v730, %v902
        %v904 = vpop.f32.mrb[0].mxu0
        %v905 = vpop.f32.mrb[0].mxu0
        %v906 = vadd.f32 %v730, %v905
        %v907 = vpop.f32.mrb[0].mxu0
        %908 = vmatprep.mubr.bf16.mxu0 0
        %909 = vmatmul.mubr.bf16.gmra.mrb[0].mxu0 %v705
        %v910 = vpop.f32.mrb[0].mxu0
        %v911 = vadd.f32 %v730, %v910
        %v912 = vpop.f32.mrb[0].mxu0
        %v913 = vpop.f32.mrb[0].mxu0
        %v914 = vadd.f32 %v730, %v913
        %v915 = vpop.f32.mrb[0].mxu0
        %916 = vmatprep.mubr.bf16.mxu0 0
        %917 = vmatmul.mubr.bf16.gmra.mrb[0].mxu0 %v706
        %v918 = vpop.f32.mrb[0].mxu0
        %v919 = vadd.f32 %v730, %v918
        %v920 = vpop.f32.mrb[0].mxu0
        %v921 = vpop.f32.mrb[0].mxu0
        %v922 = vadd.f32 %v730, %v921
        %v923 = vpop.f32.mrb[0].mxu0
        %924 = vmatprep.mubr.bf16.mxu0 0
        %925 = vmatmul.mubr.bf16.gmra.mrb[0].mxu0 %v707
        %v926 = vpop.f32.mrb[0].mxu0
        %v927 = vadd.f32 %v730, %v926
        %v928 = vpop.f32.mrb[0].mxu0
        %v929 = vpop.f32.mrb[0].mxu0
        %v930 = vadd.f32 %v730, %v929
        %v931 = vpop.f32.mrb[0].mxu0
        %932 = vmatprep.mubr.bf16.mxu0 0
        %933 = vmatmul.mubr.bf16.gmra.mrb[0].mxu0 %v708
        %v934 = vpop.f32.mrb[0].mxu0
        %v935 = vadd.f32 %v730, %v934
        %v936 = vpop.f32.mrb[0].mxu0
        %v937 = vpop.f32.mrb[0].mxu0
        %v938 = vadd.f32 %v730, %v937
        %v939 = vpop.f32.mrb[0].mxu0
        %940 = vdwg.mxu0
        %v941 = vmax.f32 %v815, 0.0
        %v942 = vmax.f32 %v818, 0.0
        %v943 = vmax.f32 %v823, 0.0
        %v944 = vmax.f32 %v826, 0.0
        %v945 = vmax.f32 %v831, 0.0
        %v946 = vmax.f32 %v834, 0.0
        %v947 = vmax.f32 %v839, 0.0
        %v948 = vmax.f32 %v842, 0.0
        %v949 = vmax.f32 %v847, 0.0
        %v950 = vmax.f32 %v850, 0.0
        %v951 = vmax.f32 %v855, 0.0
        %v952 = vmax.f32 %v858, 0.0
        %v953 = vmax.f32 %v863, 0.0
        %v954 = vmax.f32 %v866, 0.0
        %v955 = vmax.f32 %v871, 0.0
        %v956 = vmax.f32 %v874, 0.0
        %v957 = vmax.f32 %v879, 0.0
        %v958 = vmax.f32 %v882, 0.0
        %v959 = vmax.f32 %v887, 0.0
        %v960 = vmax.f32 %v890, 0.0
        %v961 = vmax.f32 %v895, 0.0
        %v962 = vmax.f32 %v898, 0.0
        %v963 = vmax.f32 %v903, 0.0
        %v964 = vmax.f32 %v906, 0.0
        %v965 = vmax.f32 %v911, 0.0
        %v966 = vmax.f32 %v914, 0.0
        %v967 = vmax.f32 %v919, 0.0
        %v968 = vmax.f32 %v922, 0.0
        %v969 = vmax.f32 %v927, 0.0
        %v970 = vmax.f32 %v930, 0.0
        %v971 = vmax.f32 %v935, 0.0
        %v972 = vmax.f32 %v938, 0.0
        %v973 = vpack.c.bf16 %v942, %v941
        %v974 = vpack.c.bf16 %v944, %v943
        %v975 = vpack.c.bf16 %v946, %v945
        %v976 = vpack.c.bf16 %v948, %v947
        %v977 = vpack.c.bf16 %v950, %v949
        %v978 = vpack.c.bf16 %v952, %v951
        %v979 = vpack.c.bf16 %v954, %v953
        %v980 = vpack.c.bf16 %v956, %v955
        %v981 = vpack.c.bf16 %v958, %v957
        %v982 = vpack.c.bf16 %v960, %v959
        %v983 = vpack.c.bf16 %v962, %v961
        %v984 = vpack.c.bf16 %v964, %v963
        %v985 = vpack.c.bf16 %v966, %v965
        %v986 = vpack.c.bf16 %v968, %v967
        %v987 = vpack.c.bf16 %v970, %v969
        %v988 = vpack.c.bf16 %v972, %v971
        %s989 = scalar_lea.vmem %s2, 64
        %v990 = vld [vmem:[%s989] sm:$0xf]
        %v991 = vld [vmem:[%s989 + $0x4] sm:$0xf]
        %v992 = vld [vmem:[%s989 + $0x8] sm:$0xf]
        %v993 = vld [vmem:[%s989 + $0xc] sm:$0xf]
        %v994 = vld [vmem:[%s989 + $0x10] sm:$0xf]
        %v995 = vld [vmem:[%s989 + $0x14] sm:$0xf]
        %v996 = vld [vmem:[%s989 + $0x18] sm:$0xf]
        %v997 = vld [vmem:[%s989 + $0x1c] sm:$0xf]
        %v998 = vld [vmem:[%s989 + $0x20] sm:$0xf]
        %v999 = vld [vmem:[%s989 + $0x24] sm:$0xf]
        %v1000 = vld [vmem:[%s989 + $0x28] sm:$0xf]
        %v1001 = vld [vmem:[%s989 + $0x2c] sm:$0xf]
        %v1002 = vld [vmem:[%s989 + $0x30] sm:$0xf]
        %v1003 = vld [vmem:[%s989 + $0x34] sm:$0xf]
        %v1004 = vld [vmem:[%s989 + $0x38] sm:$0xf]
        %v1005 = vld [vmem:[%s989 + $0x3c] sm:$0xf]
        %s1006 = scalar_lea.vmem %s3, 1
        %v1007 = vld [vmem:[%s1006] sm:$0x1]
        %v1009 = vlaneseq
        %v1010 = vshrl.u32 %v1009, 7
        %v1011 = vsub.s32 0, %v1010
        %v1012 = vrot.slane %v1007, %v1011
        %v1030 = vunpack.c.l.b16 %v990
        %v1031 = vunpack.c.l.b16 %v991
        %v1032 = vunpack.c.l.b16 %v992
        %v1033 = vunpack.c.l.b16 %v993
        %v1034 = vunpack.c.l.b16 %v994
        %v1035 = vunpack.c.l.b16 %v995
        %v1036 = vunpack.c.l.b16 %v996
        %v1037 = vunpack.c.l.b16 %v997
        %v1038 = vunpack.c.l.b16 %v998
        %v1039 = vunpack.c.l.b16 %v999
        %v1040 = vunpack.c.l.b16 %v1000
        %v1041 = vunpack.c.l.b16 %v1001
        %v1042 = vunpack.c.l.b16 %v1002
        %v1043 = vunpack.c.l.b16 %v1003
        %v1044 = vunpack.c.l.b16 %v1004
        %v1045 = vunpack.c.l.b16 %v1005
        %v1046 = vpack.c.b16 %v1031, %v1030
        %v1047 = vpack.c.b16 %v1033, %v1032
        %v1048 = vpack.c.b16 %v1035, %v1034
        %v1049 = vpack.c.b16 %v1037, %v1036
        %v1050 = vpack.c.b16 %v1039, %v1038
        %v1051 = vpack.c.b16 %v1041, %v1040
        %v1052 = vpack.c.b16 %v1043, %v1042
        %v1053 = vpack.c.b16 %v1045, %v1044
        %1062 = vmatprep.subr.bf16.mxu0 0
        %1063 = vmatpush1.bf16.msra.mxu0 %v1046
        %1064 = vmatprep.subr.bf16.mxu0 0
        %1065 = vmatpush1.bf16.msra.mxu0 %v1047
        %1066 = vmatprep.subr.bf16.mxu0 0
        %1067 = vmatpush1.bf16.msra.mxu0 %v1048
        %1068 = vmatprep.subr.bf16.mxu0 0
        %1069 = vmatpush1.bf16.msra.mxu0 %v1049
        %1070 = vmatprep.subr.bf16.mxu0 0
        %1071 = vmatpush1.bf16.msra.mxu0 %v1050
        %1072 = vmatprep.subr.bf16.mxu0 0
        %1073 = vmatpush1.bf16.msra.mxu0 %v1051
        %1074 = vmatprep.subr.bf16.mxu0 0
        %1075 = vmatpush1.bf16.msra.mxu0 %v1052
        %1076 = vmatprep.subr.bf16.mxu0 0
        %1077 = vmatpush1.bf16.msra.mxu0 %v1053
        %1078 = vmatprep.subr.bf16.mxu0 0
        %1079 = vmatpush1.bf16.msra.mxu0 0
        %1080 = vmatprep.subr.bf16.mxu0 0
        %1081 = vmatpush1.bf16.msra.mxu0 0
        %1082 = vmatprep.subr.bf16.mxu0 0
        %1083 = vmatpush1.bf16.msra.mxu0 0
        %1084 = vmatprep.subr.bf16.mxu0 0
        %1085 = vmatpush1.bf16.msra.mxu0 0
        %1086 = vmatprep.subr.bf16.mxu0 0
        %1087 = vmatpush1.bf16.msra.mxu0 0
        %1088 = vmatprep.subr.bf16.mxu0 0
        %1089 = vmatpush1.bf16.msra.mxu0 0
        %1090 = vmatprep.subr.bf16.mxu0 0
        %1091 = vmatpush1.bf16.msra.mxu0 0
        %1092 = vmatprep.subr.bf16.mxu0 0
        %1093 = vmatpush1.bf16.msra.mxu0 0
        %1094 = vmatprep.mubr.bf16.mxu0 0
        %1095 = vmatmul.mubr.bf16.gmra.mrb[0].mxu0 %v973
        %v1096 = vpop.f32.mrb[0].mxu0
        %v1097 = vadd.f32 %v1012, %v1096
        %v1098 = vpop.f32.mrb[0].mxu0
        %v1099 = vpop.f32.mrb[0].mxu0
        %v1100 = vadd.f32 %v1012, %v1099
        %v1101 = vpop.f32.mrb[0].mxu0
        %1102 = vmatprep.mubr.bf16.mxu0 0
        %1103 = vmatmul.mubr.bf16.gmra.mrb[0].mxu0 %v974
        %v1104 = vpop.f32.mrb[0].mxu0
        %v1105 = vadd.f32 %v1012, %v1104
        %v1106 = vpop.f32.mrb[0].mxu0
        %v1107 = vpop.f32.mrb[0].mxu0
        %v1108 = vadd.f32 %v1012, %v1107
        %v1109 = vpop.f32.mrb[0].mxu0
        %1110 = vmatprep.mubr.bf16.mxu0 0
        %1111 = vmatmul.mubr.bf16.gmra.mrb[0].mxu0 %v975
        %v1112 = vpop.f32.mrb[0].mxu0
        %v1113 = vadd.f32 %v1012, %v1112
        %v1114 = vpop.f32.mrb[0].mxu0
        %v1115 = vpop.f32.mrb[0].mxu0
        %v1116 = vadd.f32 %v1012, %v1115
        %v1117 = vpop.f32.mrb[0].mxu0
        %1118 = vmatprep.mubr.bf16.mxu0 0
        %1119 = vmatmul.mubr.bf16.gmra.mrb[0].mxu0 %v976
        %v1120 = vpop.f32.mrb[0].mxu0
        %v1121 = vadd.f32 %v1012, %v1120
        %v1122 = vpop.f32.mrb[0].mxu0
        %v1123 = vpop.f32.mrb[0].mxu0
        %v1124 = vadd.f32 %v1012, %v1123
        %v1125 = vpop.f32.mrb[0].mxu0
        %1126 = vmatprep.mubr.bf16.mxu0 0
        %1127 = vmatmul.mubr.bf16.gmra.mrb[0].mxu0 %v977
        %v1128 = vpop.f32.mrb[0].mxu0
        %v1129 = vadd.f32 %v1012, %v1128
        %v1130 = vpop.f32.mrb[0].mxu0
        %v1131 = vpop.f32.mrb[0].mxu0
        %v1132 = vadd.f32 %v1012, %v1131
        %v1133 = vpop.f32.mrb[0].mxu0
        %1134 = vmatprep.mubr.bf16.mxu0 0
        %1135 = vmatmul.mubr.bf16.gmra.mrb[0].mxu0 %v978
        %v1136 = vpop.f32.mrb[0].mxu0
        %v1137 = vadd.f32 %v1012, %v1136
        %v1138 = vpop.f32.mrb[0].mxu0
        %v1139 = vpop.f32.mrb[0].mxu0
        %v1140 = vadd.f32 %v1012, %v1139
        %v1141 = vpop.f32.mrb[0].mxu0
        %1142 = vmatprep.mubr.bf16.mxu0 0
        %1143 = vmatmul.mubr.bf16.gmra.mrb[0].mxu0 %v979
        %v1144 = vpop.f32.mrb[0].mxu0
        %v1145 = vadd.f32 %v1012, %v1144
        %v1146 = vpop.f32.mrb[0].mxu0
        %v1147 = vpop.f32.mrb[0].mxu0
        %v1148 = vadd.f32 %v1012, %v1147
        %v1149 = vpop.f32.mrb[0].mxu0
        %1150 = vmatprep.mubr.bf16.mxu0 0
        %1151 = vmatmul.mubr.bf16.gmra.mrb[0].mxu0 %v980
        %v1152 = vpop.f32.mrb[0].mxu0
        %v1153 = vadd.f32 %v1012, %v1152
        %v1154 = vpop.f32.mrb[0].mxu0
        %v1155 = vpop.f32.mrb[0].mxu0
        %v1156 = vadd.f32 %v1012, %v1155
        %v1157 = vpop.f32.mrb[0].mxu0
        %1158 = vmatprep.mubr.bf16.mxu0 0
        %1159 = vmatmul.mubr.bf16.gmra.mrb[0].mxu0 %v981
        %v1160 = vpop.f32.mrb[0].mxu0
        %v1161 = vadd.f32 %v1012, %v1160
        %v1162 = vpop.f32.mrb[0].mxu0
        %v1163 = vpop.f32.mrb[0].mxu0
        %v1164 = vadd.f32 %v1012, %v1163
        %v1165 = vpop.f32.mrb[0].mxu0
        %1166 = vmatprep.mubr.bf16.mxu0 0
        %1167 = vmatmul.mubr.bf16.gmra.mrb[0].mxu0 %v982
        %v1168 = vpop.f32.mrb[0].mxu0
        %v1169 = vadd.f32 %v1012, %v1168
        %v1170 = vpop.f32.mrb[0].mxu0
        %v1171 = vpop.f32.mrb[0].mxu0
        %v1172 = vadd.f32 %v1012, %v1171
        %v1173 = vpop.f32.mrb[0].mxu0
        %1174 = vmatprep.mubr.bf16.mxu0 0
        %1175 = vmatmul.mubr.bf16.gmra.mrb[0].mxu0 %v983
        %v1176 = vpop.f32.mrb[0].mxu0
        %v1177 = vadd.f32 %v1012, %v1176
        %v1178 = vpop.f32.mrb[0].mxu0
        %v1179 = vpop.f32.mrb[0].mxu0
        %v1180 = vadd.f32 %v1012, %v1179
        %v1181 = vpop.f32.mrb[0].mxu0
        %1182 = vmatprep.mubr.bf16.mxu0 0
        %1183 = vmatmul.mubr.bf16.gmra.mrb[0].mxu0 %v984
        %v1184 = vpop.f32.mrb[0].mxu0
        %v1185 = vadd.f32 %v1012, %v1184
        %v1186 = vpop.f32.mrb[0].mxu0
        %v1187 = vpop.f32.mrb[0].mxu0
        %v1188 = vadd.f32 %v1012, %v1187
        %v1189 = vpop.f32.mrb[0].mxu0
        %1190 = vmatprep.mubr.bf16.mxu0 0
        %1191 = vmatmul.mubr.bf16.gmra.mrb[0].mxu0 %v985
        %v1192 = vpop.f32.mrb[0].mxu0
        %v1193 = vadd.f32 %v1012, %v1192
        %v1194 = vpop.f32.mrb[0].mxu0
        %v1195 = vpop.f32.mrb[0].mxu0
        %v1196 = vadd.f32 %v1012, %v1195
        %v1197 = vpop.f32.mrb[0].mxu0
        %1198 = vmatprep.mubr.bf16.mxu0 0
        %1199 = vmatmul.mubr.bf16.gmra.mrb[0].mxu0 %v986
        %v1200 = vpop.f32.mrb[0].mxu0
        %v1201 = vadd.f32 %v1012, %v1200
        %v1202 = vpop.f32.mrb[0].mxu0
        %v1203 = vpop.f32.mrb[0].mxu0
        %v1204 = vadd.f32 %v1012, %v1203
        %v1205 = vpop.f32.mrb[0].mxu0
        %1206 = vmatprep.mubr.bf16.mxu0 0
        %1207 = vmatmul.mubr.bf16.gmra.mrb[0].mxu0 %v987
        %v1208 = vpop.f32.mrb[0].mxu0
        %v1209 = vadd.f32 %v1012, %v1208
        %v1210 = vpop.f32.mrb[0].mxu0
        %v1211 = vpop.f32.mrb[0].mxu0
        %v1212 = vadd.f32 %v1012, %v1211
        %v1213 = vpop.f32.mrb[0].mxu0
        %1214 = vmatprep.mubr.bf16.mxu0 0
        %1215 = vmatmul.mubr.bf16.gmra.mrb[0].mxu0 %v988
        %v1216 = vpop.f32.mrb[0].mxu0
        %v1217 = vadd.f32 %v1012, %v1216
        %v1218 = vpop.f32.mrb[0].mxu0
        %v1219 = vpop.f32.mrb[0].mxu0
        %v1220 = vadd.f32 %v1012, %v1219
        %v1221 = vpop.f32.mrb[0].mxu0
        %1222 = vdwg.mxu0
        %v1223 = vmax.f32 %v1097, 0.0
        %v1224 = vmax.f32 %v1100, 0.0
        %v1225 = vmax.f32 %v1105, 0.0
        %v1226 = vmax.f32 %v1108, 0.0
        %v1227 = vmax.f32 %v1113, 0.0
        %v1228 = vmax.f32 %v1116, 0.0
        %v1229 = vmax.f32 %v1121, 0.0
        %v1230 = vmax.f32 %v1124, 0.0
        %v1231 = vmax.f32 %v1129, 0.0
        %v1232 = vmax.f32 %v1132, 0.0
        %v1233 = vmax.f32 %v1137, 0.0
        %v1234 = vmax.f32 %v1140, 0.0
        %v1235 = vmax.f32 %v1145, 0.0
        %v1236 = vmax.f32 %v1148, 0.0
        %v1237 = vmax.f32 %v1153, 0.0
        %v1238 = vmax.f32 %v1156, 0.0
        %v1239 = vmax.f32 %v1161, 0.0
        %v1240 = vmax.f32 %v1164, 0.0
        %v1241 = vmax.f32 %v1169, 0.0
        %v1242 = vmax.f32 %v1172, 0.0
        %v1243 = vmax.f32 %v1177, 0.0
        %v1244 = vmax.f32 %v1180, 0.0
        %v1245 = vmax.f32 %v1185, 0.0
        %v1246 = vmax.f32 %v1188, 0.0
        %v1247 = vmax.f32 %v1193, 0.0
        %v1248 = vmax.f32 %v1196, 0.0
        %v1249 = vmax.f32 %v1201, 0.0
        %v1250 = vmax.f32 %v1204, 0.0
        %v1251 = vmax.f32 %v1209, 0.0
        %v1252 = vmax.f32 %v1212, 0.0
        %v1253 = vmax.f32 %v1217, 0.0
        %v1254 = vmax.f32 %v1220, 0.0
        %v1255 = vpack.c.bf16 %v1224, %v1223
        %v1256 = vpack.c.bf16 %v1226, %v1225
        %v1257 = vpack.c.bf16 %v1228, %v1227
        %v1258 = vpack.c.bf16 %v1230, %v1229
        %v1259 = vpack.c.bf16 %v1232, %v1231
        %v1260 = vpack.c.bf16 %v1234, %v1233
        %v1261 = vpack.c.bf16 %v1236, %v1235
        %v1262 = vpack.c.bf16 %v1238, %v1237
        %v1263 = vpack.c.bf16 %v1240, %v1239
        %v1264 = vpack.c.bf16 %v1242, %v1241
        %v1265 = vpack.c.bf16 %v1244, %v1243
        %v1266 = vpack.c.bf16 %v1246, %v1245
        %v1267 = vpack.c.bf16 %v1248, %v1247
        %v1268 = vpack.c.bf16 %v1250, %v1249
        %v1269 = vpack.c.bf16 %v1252, %v1251
        %v1270 = vpack.c.bf16 %v1254, %v1253
        %s1271 = scalar_lea.vmem %s2, 128
        %v1272 = vld [vmem:[%s1271] sm:$0xf]
        %v1273 = vld [vmem:[%s1271 + $0x4] sm:$0xf]
        %v1274 = vld [vmem:[%s1271 + $0x8] sm:$0xf]
        %v1275 = vld [vmem:[%s1271 + $0xc] sm:$0xf]
        %v1276 = vld [vmem:[%s1271 + $0x10] sm:$0xf]
        %v1277 = vld [vmem:[%s1271 + $0x14] sm:$0xf]
        %v1278 = vld [vmem:[%s1271 + $0x18] sm:$0xf]
        %v1279 = vld [vmem:[%s1271 + $0x1c] sm:$0xf]
        %v1280 = vld [vmem:[%s1271 + $0x20] sm:$0xf]
        %v1281 = vld [vmem:[%s1271 + $0x24] sm:$0xf]
        %v1282 = vld [vmem:[%s1271 + $0x28] sm:$0xf]
        %v1283 = vld [vmem:[%s1271 + $0x2c] sm:$0xf]
        %v1284 = vld [vmem:[%s1271 + $0x30] sm:$0xf]
        %v1285 = vld [vmem:[%s1271 + $0x34] sm:$0xf]
        %v1286 = vld [vmem:[%s1271 + $0x38] sm:$0xf]
        %v1287 = vld [vmem:[%s1271 + $0x3c] sm:$0xf]
        %s1288 = scalar_lea.vmem %s3, 2
        %v1289 = vld [vmem:[%s1288] sm:$0x1]
        %v1291 = vlaneseq
        %v1292 = vshrl.u32 %v1291, 7
        %v1293 = vsub.s32 0, %v1292
        %v1294 = vrot.slane %v1289, %v1293
        %v1312 = vunpack.c.l.b16 %v1272
        %v1313 = vunpack.c.l.b16 %v1273
        %v1314 = vunpack.c.l.b16 %v1274
        %v1315 = vunpack.c.l.b16 %v1275
        %v1316 = vunpack.c.l.b16 %v1276
        %v1317 = vunpack.c.l.b16 %v1277
        %v1318 = vunpack.c.l.b16 %v1278
        %v1319 = vunpack.c.l.b16 %v1279
        %v1320 = vunpack.c.l.b16 %v1280
        %v1321 = vunpack.c.l.b16 %v1281
        %v1322 = vunpack.c.l.b16 %v1282
        %v1323 = vunpack.c.l.b16 %v1283
        %v1324 = vunpack.c.l.b16 %v1284
        %v1325 = vunpack.c.l.b16 %v1285
        %v1326 = vunpack.c.l.b16 %v1286
        %v1327 = vunpack.c.l.b16 %v1287
        %v1328 = vpack.c.b16 %v1313, %v1312
        %v1329 = vpack.c.b16 %v1315, %v1314
        %v1330 = vpack.c.b16 %v1317, %v1316
        %v1331 = vpack.c.b16 %v1319, %v1318
        %v1332 = vpack.c.b16 %v1321, %v1320
        %v1333 = vpack.c.b16 %v1323, %v1322
        %v1334 = vpack.c.b16 %v1325, %v1324
        %v1335 = vpack.c.b16 %v1327, %v1326
        %1344 = vmatprep.subr.bf16.mxu0 0
        %1345 = vmatpush1.bf16.msra.mxu0 %v1328
        %1346 = vmatprep.subr.bf16.mxu0 0
        %1347 = vmatpush1.bf16.msra.mxu0 %v1329
        %1348 = vmatprep.subr.bf16.mxu0 0
        %1349 = vmatpush1.bf16.msra.mxu0 %v1330
        %1350 = vmatprep.subr.bf16.mxu0 0
        %1351 = vmatpush1.bf16.msra.mxu0 %v1331
        %1352 = vmatprep.subr.bf16.mxu0 0
        %1353 = vmatpush1.bf16.msra.mxu0 %v1332
        %1354 = vmatprep.subr.bf16.mxu0 0
        %1355 = vmatpush1.bf16.msra.mxu0 %v1333
        %1356 = vmatprep.subr.bf16.mxu0 0
        %1357 = vmatpush1.bf16.msra.mxu0 %v1334
        %1358 = vmatprep.subr.bf16.mxu0 0
        %1359 = vmatpush1.bf16.msra.mxu0 %v1335
        %1360 = vmatprep.subr.bf16.mxu0 0
        %1361 = vmatpush1.bf16.msra.mxu0 0
        %1362 = vmatprep.subr.bf16.mxu0 0
        %1363 = vmatpush1.bf16.msra.mxu0 0
        %1364 = vmatprep.subr.bf16.mxu0 0
        %1365 = vmatpush1.bf16.msra.mxu0 0
        %1366 = vmatprep.subr.bf16.mxu0 0
        %1367 = vmatpush1.bf16.msra.mxu0 0
        %1368 = vmatprep.subr.bf16.mxu0 0
        %1369 = vmatpush1.bf16.msra.mxu0 0
        %1370 = vmatprep.subr.bf16.mxu0 0
        %1371 = vmatpush1.bf16.msra.mxu0 0
        %1372 = vmatprep.subr.bf16.mxu0 0
        %1373 = vmatpush1.bf16.msra.mxu0 0
        %1374 = vmatprep.subr.bf16.mxu0 0
        %1375 = vmatpush1.bf16.msra.mxu0 0
        %1376 = vmatprep.mubr.bf16.mxu0 0
        %1377 = vmatmul.mubr.bf16.gmra.mrb[0].mxu0 %v1255
        %v1378 = vpop.f32.mrb[0].mxu0
        %v1379 = vadd.f32 %v1294, %v1378
        %v1380 = vpop.f32.mrb[0].mxu0
        %v1381 = vpop.f32.mrb[0].mxu0
        %v1382 = vadd.f32 %v1294, %v1381
        %v1383 = vpop.f32.mrb[0].mxu0
        %1384 = vmatprep.mubr.bf16.mxu0 0
        %1385 = vmatmul.mubr.bf16.gmra.mrb[0].mxu0 %v1256
        %v1386 = vpop.f32.mrb[0].mxu0
        %v1387 = vadd.f32 %v1294, %v1386
        %v1388 = vpop.f32.mrb[0].mxu0
        %v1389 = vpop.f32.mrb[0].mxu0
        %v1390 = vadd.f32 %v1294, %v1389
        %v1391 = vpop.f32.mrb[0].mxu0
        %1392 = vmatprep.mubr.bf16.mxu0 0
        %1393 = vmatmul.mubr.bf16.gmra.mrb[0].mxu0 %v1257
        %v1394 = vpop.f32.mrb[0].mxu0
        %v1395 = vadd.f32 %v1294, %v1394
        %v1396 = vpop.f32.mrb[0].mxu0
        %v1397 = vpop.f32.mrb[0].mxu0
        %v1398 = vadd.f32 %v1294, %v1397
        %v1399 = vpop.f32.mrb[0].mxu0
        %1400 = vmatprep.mubr.bf16.mxu0 0
        %1401 = vmatmul.mubr.bf16.gmra.mrb[0].mxu0 %v1258
        %v1402 = vpop.f32.mrb[0].mxu0
        %v1403 = vadd.f32 %v1294, %v1402
        %v1404 = vpop.f32.mrb[0].mxu0
        %v1405 = vpop.f32.mrb[0].mxu0
        %v1406 = vadd.f32 %v1294, %v1405
        %v1407 = vpop.f32.mrb[0].mxu0
        %1408 = vmatprep.mubr.bf16.mxu0 0
        %1409 = vmatmul.mubr.bf16.gmra.mrb[0].mxu0 %v1259
        %v1410 = vpop.f32.mrb[0].mxu0
        %v1411 = vadd.f32 %v1294, %v1410
        %v1412 = vpop.f32.mrb[0].mxu0
        %v1413 = vpop.f32.mrb[0].mxu0
        %v1414 = vadd.f32 %v1294, %v1413
        %v1415 = vpop.f32.mrb[0].mxu0
        %1416 = vmatprep.mubr.bf16.mxu0 0
        %1417 = vmatmul.mubr.bf16.gmra.mrb[0].mxu0 %v1260
        %v1418 = vpop.f32.mrb[0].mxu0
        %v1419 = vadd.f32 %v1294, %v1418
        %v1420 = vpop.f32.mrb[0].mxu0
        %v1421 = vpop.f32.mrb[0].mxu0
        %v1422 = vadd.f32 %v1294, %v1421
        %v1423 = vpop.f32.mrb[0].mxu0
        %1424 = vmatprep.mubr.bf16.mxu0 0
        %1425 = vmatmul.mubr.bf16.gmra.mrb[0].mxu0 %v1261
        %v1426 = vpop.f32.mrb[0].mxu0
        %v1427 = vadd.f32 %v1294, %v1426
        %v1428 = vpop.f32.mrb[0].mxu0
        %v1429 = vpop.f32.mrb[0].mxu0
        %v1430 = vadd.f32 %v1294, %v1429
        %v1431 = vpop.f32.mrb[0].mxu0
        %1432 = vmatprep.mubr.bf16.mxu0 0
        %1433 = vmatmul.mubr.bf16.gmra.mrb[0].mxu0 %v1262
        %v1434 = vpop.f32.mrb[0].mxu0
        %v1435 = vadd.f32 %v1294, %v1434
        %v1436 = vpop.f32.mrb[0].mxu0
        %v1437 = vpop.f32.mrb[0].mxu0
        %v1438 = vadd.f32 %v1294, %v1437
        %v1439 = vpop.f32.mrb[0].mxu0
        %1440 = vmatprep.mubr.bf16.mxu0 0
        %1441 = vmatmul.mubr.bf16.gmra.mrb[0].mxu0 %v1263
        %v1442 = vpop.f32.mrb[0].mxu0
        %v1443 = vadd.f32 %v1294, %v1442
        %v1444 = vpop.f32.mrb[0].mxu0
        %v1445 = vpop.f32.mrb[0].mxu0
        %v1446 = vadd.f32 %v1294, %v1445
        %v1447 = vpop.f32.mrb[0].mxu0
        %1448 = vmatprep.mubr.bf16.mxu0 0
        %1449 = vmatmul.mubr.bf16.gmra.mrb[0].mxu0 %v1264
        %v1450 = vpop.f32.mrb[0].mxu0
        %v1451 = vadd.f32 %v1294, %v1450
        %v1452 = vpop.f32.mrb[0].mxu0
        %v1453 = vpop.f32.mrb[0].mxu0
        %v1454 = vadd.f32 %v1294, %v1453
        %v1455 = vpop.f32.mrb[0].mxu0
        %1456 = vmatprep.mubr.bf16.mxu0 0
        %1457 = vmatmul.mubr.bf16.gmra.mrb[0].mxu0 %v1265
        %v1458 = vpop.f32.mrb[0].mxu0
        %v1459 = vadd.f32 %v1294, %v1458
        %v1460 = vpop.f32.mrb[0].mxu0
        %v1461 = vpop.f32.mrb[0].mxu0
        %v1462 = vadd.f32 %v1294, %v1461
        %v1463 = vpop.f32.mrb[0].mxu0
        %1464 = vmatprep.mubr.bf16.mxu0 0
        %1465 = vmatmul.mubr.bf16.gmra.mrb[0].mxu0 %v1266
        %v1466 = vpop.f32.mrb[0].mxu0
        %v1467 = vadd.f32 %v1294, %v1466
        %v1468 = vpop.f32.mrb[0].mxu0
        %v1469 = vpop.f32.mrb[0].mxu0
        %v1470 = vadd.f32 %v1294, %v1469
        %v1471 = vpop.f32.mrb[0].mxu0
        %1472 = vmatprep.mubr.bf16.mxu0 0
        %1473 = vmatmul.mubr.bf16.gmra.mrb[0].mxu0 %v1267
        %v1474 = vpop.f32.mrb[0].mxu0
        %v1475 = vadd.f32 %v1294, %v1474
        %v1476 = vpop.f32.mrb[0].mxu0
        %v1477 = vpop.f32.mrb[0].mxu0
        %v1478 = vadd.f32 %v1294, %v1477
        %v1479 = vpop.f32.mrb[0].mxu0
        %1480 = vmatprep.mubr.bf16.mxu0 0
        %1481 = vmatmul.mubr.bf16.gmra.mrb[0].mxu0 %v1268
        %v1482 = vpop.f32.mrb[0].mxu0
        %v1483 = vadd.f32 %v1294, %v1482
        %v1484 = vpop.f32.mrb[0].mxu0
        %v1485 = vpop.f32.mrb[0].mxu0
        %v1486 = vadd.f32 %v1294, %v1485
        %v1487 = vpop.f32.mrb[0].mxu0
        %1488 = vmatprep.mubr.bf16.mxu0 0
        %1489 = vmatmul.mubr.bf16.gmra.mrb[0].mxu0 %v1269
        %v1490 = vpop.f32.mrb[0].mxu0
        %v1491 = vadd.f32 %v1294, %v1490
        %v1492 = vpop.f32.mrb[0].mxu0
        %v1493 = vpop.f32.mrb[0].mxu0
        %v1494 = vadd.f32 %v1294, %v1493
        %v1495 = vpop.f32.mrb[0].mxu0
        %1496 = vmatprep.mubr.bf16.mxu0 0
        %1497 = vmatmul.mubr.bf16.gmra.mrb[0].mxu0 %v1270
        %v1498 = vpop.f32.mrb[0].mxu0
        %v1499 = vadd.f32 %v1294, %v1498
        %v1500 = vpop.f32.mrb[0].mxu0
        %v1501 = vpop.f32.mrb[0].mxu0
        %v1502 = vadd.f32 %v1294, %v1501
        %v1503 = vpop.f32.mrb[0].mxu0
        %1504 = vdwg.mxu0
        %v1505 = vmax.f32 %v1379, 0.0
        %v1506 = vmax.f32 %v1382, 0.0
        %v1507 = vmax.f32 %v1387, 0.0
        %v1508 = vmax.f32 %v1390, 0.0
        %v1509 = vmax.f32 %v1395, 0.0
        %v1510 = vmax.f32 %v1398, 0.0
        %v1511 = vmax.f32 %v1403, 0.0
        %v1512 = vmax.f32 %v1406, 0.0
        %v1513 = vmax.f32 %v1411, 0.0
        %v1514 = vmax.f32 %v1414, 0.0
        %v1515 = vmax.f32 %v1419, 0.0
        %v1516 = vmax.f32 %v1422, 0.0
        %v1517 = vmax.f32 %v1427, 0.0
        %v1518 = vmax.f32 %v1430, 0.0
        %v1519 = vmax.f32 %v1435, 0.0
        %v1520 = vmax.f32 %v1438, 0.0
        %v1521 = vmax.f32 %v1443, 0.0
        %v1522 = vmax.f32 %v1446, 0.0
        %v1523 = vmax.f32 %v1451, 0.0
        %v1524 = vmax.f32 %v1454, 0.0
        %v1525 = vmax.f32 %v1459, 0.0
        %v1526 = vmax.f32 %v1462, 0.0
        %v1527 = vmax.f32 %v1467, 0.0
        %v1528 = vmax.f32 %v1470, 0.0
        %v1529 = vmax.f32 %v1475, 0.0
        %v1530 = vmax.f32 %v1478, 0.0
        %v1531 = vmax.f32 %v1483, 0.0
        %v1532 = vmax.f32 %v1486, 0.0
        %v1533 = vmax.f32 %v1491, 0.0
        %v1534 = vmax.f32 %v1494, 0.0
        %v1535 = vmax.f32 %v1499, 0.0
        %v1536 = vmax.f32 %v1502, 0.0
        %v1537 = vadd.f32 %v661, %v1505
        %v1538 = vadd.f32 %v662, %v1506
        %v1539 = vadd.f32 %v663, %v1507
        %v1540 = vadd.f32 %v664, %v1508
        %v1541 = vadd.f32 %v665, %v1509
        %v1542 = vadd.f32 %v666, %v1510
        %v1543 = vadd.f32 %v667, %v1511
        %v1544 = vadd.f32 %v668, %v1512
        %v1545 = vadd.f32 %v669, %v1513
        %v1546 = vadd.f32 %v670, %v1514
        %v1547 = vadd.f32 %v671, %v1515
        %v1548 = vadd.f32 %v672, %v1516
        %v1549 = vadd.f32 %v673, %v1517
        %v1550 = vadd.f32 %v674, %v1518
        %v1551 = vadd.f32 %v675, %v1519
        %v1552 = vadd.f32 %v676, %v1520
        %v1553 = vadd.f32 %v677, %v1521
        %v1554 = vadd.f32 %v678, %v1522
        %v1555 = vadd.f32 %v679, %v1523
        %v1556 = vadd.f32 %v680, %v1524
        %v1557 = vadd.f32 %v681, %v1525
        %v1558 = vadd.f32 %v682, %v1526
        %v1559 = vadd.f32 %v683, %v1527
        %v1560 = vadd.f32 %v684, %v1528
        %v1561 = vadd.f32 %v685, %v1529
        %v1562 = vadd.f32 %v686, %v1530
        %v1563 = vadd.f32 %v687, %v1531
        %v1564 = vadd.f32 %v688, %v1532
        %v1565 = vadd.f32 %v689, %v1533
        %v1566 = vadd.f32 %v690, %v1534
        %v1567 = vadd.f32 %v691, %v1535
        %v1568 = vadd.f32 %v692, %v1536
        %v1569 = vpack.c.bf16 %v1538, %v1537
        %v1570 = vpack.c.bf16 %v1540, %v1539
        %v1571 = vpack.c.bf16 %v1542, %v1541
        %v1572 = vpack.c.bf16 %v1544, %v1543
        %v1573 = vpack.c.bf16 %v1546, %v1545
        %v1574 = vpack.c.bf16 %v1548, %v1547
        %v1575 = vpack.c.bf16 %v1550, %v1549
        %v1576 = vpack.c.bf16 %v1552, %v1551
        %v1577 = vpack.c.bf16 %v1554, %v1553
        %v1578 = vpack.c.bf16 %v1556, %v1555
        %v1579 = vpack.c.bf16 %v1558, %v1557
        %v1580 = vpack.c.bf16 %v1560, %v1559
        %v1581 = vpack.c.bf16 %v1562, %v1561
        %v1582 = vpack.c.bf16 %v1564, %v1563
        %v1583 = vpack.c.bf16 %v1566, %v1565
        %v1584 = vpack.c.bf16 %v1568, %v1567
        %s1585 = scalar_lea.vmem %s2, 192
        %v1586 = vld [vmem:[%s1585] sm:$0xf]
        %v1587 = vld [vmem:[%s1585 + $0x4] sm:$0xf]
        %v1588 = vld [vmem:[%s1585 + $0x8] sm:$0xf]
        %v1589 = vld [vmem:[%s1585 + $0xc] sm:$0xf]
        %v1590 = vld [vmem:[%s1585 + $0x10] sm:$0xf]
        %v1591 = vld [vmem:[%s1585 + $0x14] sm:$0xf]
        %v1592 = vld [vmem:[%s1585 + $0x18] sm:$0xf]
        %v1593 = vld [vmem:[%s1585 + $0x1c] sm:$0xf]
        %v1594 = vld [vmem:[%s1585 + $0x20] sm:$0xf]
        %v1595 = vld [vmem:[%s1585 + $0x24] sm:$0xf]
        %v1596 = vld [vmem:[%s1585 + $0x28] sm:$0xf]
        %v1597 = vld [vmem:[%s1585 + $0x2c] sm:$0xf]
        %v1598 = vld [vmem:[%s1585 + $0x30] sm:$0xf]
        %v1599 = vld [vmem:[%s1585 + $0x34] sm:$0xf]
        %v1600 = vld [vmem:[%s1585 + $0x38] sm:$0xf]
        %v1601 = vld [vmem:[%s1585 + $0x3c] sm:$0xf]
        %s1602 = scalar_lea.vmem %s3, 3
        %v1603 = vld [vmem:[%s1602] sm:$0x1]
        %v1605 = vlaneseq
        %v1606 = vshrl.u32 %v1605, 7
        %v1607 = vsub.s32 0, %v1606
        %v1608 = vrot.slane %v1603, %v1607
        %v1626 = vunpack.c.l.b16 %v1586
        %v1627 = vunpack.c.l.b16 %v1587
        %v1628 = vunpack.c.l.b16 %v1588
        %v1629 = vunpack.c.l.b16 %v1589
        %v1630 = vunpack.c.l.b16 %v1590
        %v1631 = vunpack.c.l.b16 %v1591
        %v1632 = vunpack.c.l.b16 %v1592
        %v1633 = vunpack.c.l.b16 %v1593
        %v1634 = vunpack.c.l.b16 %v1594
        %v1635 = vunpack.c.l.b16 %v1595
        %v1636 = vunpack.c.l.b16 %v1596
        %v1637 = vunpack.c.l.b16 %v1597
        %v1638 = vunpack.c.l.b16 %v1598
        %v1639 = vunpack.c.l.b16 %v1599
        %v1640 = vunpack.c.l.b16 %v1600
        %v1641 = vunpack.c.l.b16 %v1601
        %v1642 = vpack.c.b16 %v1627, %v1626
        %v1643 = vpack.c.b16 %v1629, %v1628
        %v1644 = vpack.c.b16 %v1631, %v1630
        %v1645 = vpack.c.b16 %v1633, %v1632
        %v1646 = vpack.c.b16 %v1635, %v1634
        %v1647 = vpack.c.b16 %v1637, %v1636
        %v1648 = vpack.c.b16 %v1639, %v1638
        %v1649 = vpack.c.b16 %v1641, %v1640
        %1658 = vmatprep.subr.bf16.mxu0 0
        %1659 = vmatpush1.bf16.msra.mxu0 %v1642
        %1660 = vmatprep.subr.bf16.mxu0 0
        %1661 = vmatpush1.bf16.msra.mxu0 %v1643
        %1662 = vmatprep.subr.bf16.mxu0 0
        %1663 = vmatpush1.bf16.msra.mxu0 %v1644
        %1664 = vmatprep.subr.bf16.mxu0 0
        %1665 = vmatpush1.bf16.msra.mxu0 %v1645
        %1666 = vmatprep.subr.bf16.mxu0 0
        %1667 = vmatpush1.bf16.msra.mxu0 %v1646
        %1668 = vmatprep.subr.bf16.mxu0 0
        %1669 = vmatpush1.bf16.msra.mxu0 %v1647
        %1670 = vmatprep.subr.bf16.mxu0 0
        %1671 = vmatpush1.bf16.msra.mxu0 %v1648
        %1672 = vmatprep.subr.bf16.mxu0 0
        %1673 = vmatpush1.bf16.msra.mxu0 %v1649
        %1674 = vmatprep.subr.bf16.mxu0 0
        %1675 = vmatpush1.bf16.msra.mxu0 0
        %1676 = vmatprep.subr.bf16.mxu0 0
        %1677 = vmatpush1.bf16.msra.mxu0 0
        %1678 = vmatprep.subr.bf16.mxu0 0
        %1679 = vmatpush1.bf16.msra.mxu0 0
        %1680 = vmatprep.subr.bf16.mxu0 0
        %1681 = vmatpush1.bf16.msra.mxu0 0
        %1682 = vmatprep.subr.bf16.mxu0 0
        %1683 = vmatpush1.bf16.msra.mxu0 0
        %1684 = vmatprep.subr.bf16.mxu0 0
        %1685 = vmatpush1.bf16.msra.mxu0 0
        %1686 = vmatprep.subr.bf16.mxu0 0
        %1687 = vmatpush1.bf16.msra.mxu0 0
        %1688 = vmatprep.subr.bf16.mxu0 0
        %1689 = vmatpush1.bf16.msra.mxu0 0
        %1690 = vmatprep.mubr.bf16.mxu0 0
        %1691 = vmatmul.mubr.bf16.gmra.mrb[0].mxu0 %v1569
        %v1692 = vpop.f32.mrb[0].mxu0
        %v1693 = vadd.f32 %v1608, %v1692
        %v1694 = vpop.f32.mrb[0].mxu0
        %v1695 = vpop.f32.mrb[0].mxu0
        %v1696 = vadd.f32 %v1608, %v1695
        %v1697 = vpop.f32.mrb[0].mxu0
        %1698 = vmatprep.mubr.bf16.mxu0 0
        %1699 = vmatmul.mubr.bf16.gmra.mrb[0].mxu0 %v1570
        %v1700 = vpop.f32.mrb[0].mxu0
        %v1701 = vadd.f32 %v1608, %v1700
        %v1702 = vpop.f32.mrb[0].mxu0
        %v1703 = vpop.f32.mrb[0].mxu0
        %v1704 = vadd.f32 %v1608, %v1703
        %v1705 = vpop.f32.mrb[0].mxu0
        %1706 = vmatprep.mubr.bf16.mxu0 0
        %1707 = vmatmul.mubr.bf16.gmra.mrb[0].mxu0 %v1571
        %v1708 = vpop.f32.mrb[0].mxu0
        %v1709 = vadd.f32 %v1608, %v1708
        %v1710 = vpop.f32.mrb[0].mxu0
        %v1711 = vpop.f32.mrb[0].mxu0
        %v1712 = vadd.f32 %v1608, %v1711
        %v1713 = vpop.f32.mrb[0].mxu0
        %1714 = vmatprep.mubr.bf16.mxu0 0
        %1715 = vmatmul.mubr.bf16.gmra.mrb[0].mxu0 %v1572
        %v1716 = vpop.f32.mrb[0].mxu0
        %v1717 = vadd.f32 %v1608, %v1716
        %v1718 = vpop.f32.mrb[0].mxu0
        %v1719 = vpop.f32.mrb[0].mxu0
        %v1720 = vadd.f32 %v1608, %v1719
        %v1721 = vpop.f32.mrb[0].mxu0
        %1722 = vmatprep.mubr.bf16.mxu0 0
        %1723 = vmatmul.mubr.bf16.gmra.mrb[0].mxu0 %v1573
        %v1724 = vpop.f32.mrb[0].mxu0
        %v1725 = vadd.f32 %v1608, %v1724
        %v1726 = vpop.f32.mrb[0].mxu0
        %v1727 = vpop.f32.mrb[0].mxu0
        %v1728 = vadd.f32 %v1608, %v1727
        %v1729 = vpop.f32.mrb[0].mxu0
        %1730 = vmatprep.mubr.bf16.mxu0 0
        %1731 = vmatmul.mubr.bf16.gmra.mrb[0].mxu0 %v1574
        %v1732 = vpop.f32.mrb[0].mxu0
        %v1733 = vadd.f32 %v1608, %v1732
        %v1734 = vpop.f32.mrb[0].mxu0
        %v1735 = vpop.f32.mrb[0].mxu0
        %v1736 = vadd.f32 %v1608, %v1735
        %v1737 = vpop.f32.mrb[0].mxu0
        %1738 = vmatprep.mubr.bf16.mxu0 0
        %1739 = vmatmul.mubr.bf16.gmra.mrb[0].mxu0 %v1575
        %v1740 = vpop.f32.mrb[0].mxu0
        %v1741 = vadd.f32 %v1608, %v1740
        %v1742 = vpop.f32.mrb[0].mxu0
        %v1743 = vpop.f32.mrb[0].mxu0
        %v1744 = vadd.f32 %v1608, %v1743
        %v1745 = vpop.f32.mrb[0].mxu0
        %1746 = vmatprep.mubr.bf16.mxu0 0
        %1747 = vmatmul.mubr.bf16.gmra.mrb[0].mxu0 %v1576
        %v1748 = vpop.f32.mrb[0].mxu0
        %v1749 = vadd.f32 %v1608, %v1748
        %v1750 = vpop.f32.mrb[0].mxu0
        %v1751 = vpop.f32.mrb[0].mxu0
        %v1752 = vadd.f32 %v1608, %v1751
        %v1753 = vpop.f32.mrb[0].mxu0
        %1754 = vmatprep.mubr.bf16.mxu0 0
        %1755 = vmatmul.mubr.bf16.gmra.mrb[0].mxu0 %v1577
        %v1756 = vpop.f32.mrb[0].mxu0
        %v1757 = vadd.f32 %v1608, %v1756
        %v1758 = vpop.f32.mrb[0].mxu0
        %v1759 = vpop.f32.mrb[0].mxu0
        %v1760 = vadd.f32 %v1608, %v1759
        %v1761 = vpop.f32.mrb[0].mxu0
        %1762 = vmatprep.mubr.bf16.mxu0 0
        %1763 = vmatmul.mubr.bf16.gmra.mrb[0].mxu0 %v1578
        %v1764 = vpop.f32.mrb[0].mxu0
        %v1765 = vadd.f32 %v1608, %v1764
        %v1766 = vpop.f32.mrb[0].mxu0
        %v1767 = vpop.f32.mrb[0].mxu0
        %v1768 = vadd.f32 %v1608, %v1767
        %v1769 = vpop.f32.mrb[0].mxu0
        %1770 = vmatprep.mubr.bf16.mxu0 0
        %1771 = vmatmul.mubr.bf16.gmra.mrb[0].mxu0 %v1579
        %v1772 = vpop.f32.mrb[0].mxu0
        %v1773 = vadd.f32 %v1608, %v1772
        %v1774 = vpop.f32.mrb[0].mxu0
        %v1775 = vpop.f32.mrb[0].mxu0
        %v1776 = vadd.f32 %v1608, %v1775
        %v1777 = vpop.f32.mrb[0].mxu0
        %1778 = vmatprep.mubr.bf16.mxu0 0
        %1779 = vmatmul.mubr.bf16.gmra.mrb[0].mxu0 %v1580
        %v1780 = vpop.f32.mrb[0].mxu0
        %v1781 = vadd.f32 %v1608, %v1780
        %v1782 = vpop.f32.mrb[0].mxu0
        %v1783 = vpop.f32.mrb[0].mxu0
        %v1784 = vadd.f32 %v1608, %v1783
        %v1785 = vpop.f32.mrb[0].mxu0
        %1786 = vmatprep.mubr.bf16.mxu0 0
        %1787 = vmatmul.mubr.bf16.gmra.mrb[0].mxu0 %v1581
        %v1788 = vpop.f32.mrb[0].mxu0
        %v1789 = vadd.f32 %v1608, %v1788
        %v1790 = vpop.f32.mrb[0].mxu0
        %v1791 = vpop.f32.mrb[0].mxu0
        %v1792 = vadd.f32 %v1608, %v1791
        %v1793 = vpop.f32.mrb[0].mxu0
        %1794 = vmatprep.mubr.bf16.mxu0 0
        %1795 = vmatmul.mubr.bf16.gmra.mrb[0].mxu0 %v1582
        %v1796 = vpop.f32.mrb[0].mxu0
        %v1797 = vadd.f32 %v1608, %v1796
        %v1798 = vpop.f32.mrb[0].mxu0
        %v1799 = vpop.f32.mrb[0].mxu0
        %v1800 = vadd.f32 %v1608, %v1799
        %v1801 = vpop.f32.mrb[0].mxu0
        %1802 = vmatprep.mubr.bf16.mxu0 0
        %1803 = vmatmul.mubr.bf16.gmra.mrb[0].mxu0 %v1583
        %v1804 = vpop.f32.mrb[0].mxu0
        %v1805 = vadd.f32 %v1608, %v1804
        %v1806 = vpop.f32.mrb[0].mxu0
        %v1807 = vpop.f32.mrb[0].mxu0
        %v1808 = vadd.f32 %v1608, %v1807
        %v1809 = vpop.f32.mrb[0].mxu0
        %1810 = vmatprep.mubr.bf16.mxu0 0
        %1811 = vmatmul.mubr.bf16.gmra.mrb[0].mxu0 %v1584
        %v1812 = vpop.f32.mrb[0].mxu0
        %v1813 = vadd.f32 %v1608, %v1812
        %v1814 = vpop.f32.mrb[0].mxu0
        %v1815 = vpop.f32.mrb[0].mxu0
        %v1816 = vadd.f32 %v1608, %v1815
        %v1817 = vpop.f32.mrb[0].mxu0
        %1818 = vdwg.mxu0
        %v1819 = vmax.f32 %v1693, 0.0
        %v1820 = vmax.f32 %v1696, 0.0
        %v1821 = vmax.f32 %v1701, 0.0
        %v1822 = vmax.f32 %v1704, 0.0
        %v1823 = vmax.f32 %v1709, 0.0
        %v1824 = vmax.f32 %v1712, 0.0
        %v1825 = vmax.f32 %v1717, 0.0
        %v1826 = vmax.f32 %v1720, 0.0
        %v1827 = vmax.f32 %v1725, 0.0
        %v1828 = vmax.f32 %v1728, 0.0
        %v1829 = vmax.f32 %v1733, 0.0
        %v1830 = vmax.f32 %v1736, 0.0
        %v1831 = vmax.f32 %v1741, 0.0
        %v1832 = vmax.f32 %v1744, 0.0
        %v1833 = vmax.f32 %v1749, 0.0
        %v1834 = vmax.f32 %v1752, 0.0
        %v1835 = vmax.f32 %v1757, 0.0
        %v1836 = vmax.f32 %v1760, 0.0
        %v1837 = vmax.f32 %v1765, 0.0
        %v1838 = vmax.f32 %v1768, 0.0
        %v1839 = vmax.f32 %v1773, 0.0
        %v1840 = vmax.f32 %v1776, 0.0
        %v1841 = vmax.f32 %v1781, 0.0
        %v1842 = vmax.f32 %v1784, 0.0
        %v1843 = vmax.f32 %v1789, 0.0
        %v1844 = vmax.f32 %v1792, 0.0
        %v1845 = vmax.f32 %v1797, 0.0
        %v1846 = vmax.f32 %v1800, 0.0
        %v1847 = vmax.f32 %v1805, 0.0
        %v1848 = vmax.f32 %v1808, 0.0
        %v1849 = vmax.f32 %v1813, 0.0
        %v1850 = vmax.f32 %v1816, 0.0
        %v1851 = vpack.c.bf16 %v1820, %v1819
        %v1852 = vpack.c.bf16 %v1822, %v1821
        %v1853 = vpack.c.bf16 %v1824, %v1823
        %v1854 = vpack.c.bf16 %v1826, %v1825
        %v1855 = vpack.c.bf16 %v1828, %v1827
        %v1856 = vpack.c.bf16 %v1830, %v1829
        %v1857 = vpack.c.bf16 %v1832, %v1831
        %v1858 = vpack.c.bf16 %v1834, %v1833
        %v1859 = vpack.c.bf16 %v1836, %v1835
        %v1860 = vpack.c.bf16 %v1838, %v1837
        %v1861 = vpack.c.bf16 %v1840, %v1839
        %v1862 = vpack.c.bf16 %v1842, %v1841
        %v1863 = vpack.c.bf16 %v1844, %v1843
        %v1864 = vpack.c.bf16 %v1846, %v1845
        %v1865 = vpack.c.bf16 %v1848, %v1847
        %v1866 = vpack.c.bf16 %v1850, %v1849
        %s1867 = scalar_lea.vmem %s2, 256
        %v1868 = vld [vmem:[%s1867] sm:$0xf]
        %v1869 = vld [vmem:[%s1867 + $0x4] sm:$0xf]
        %v1870 = vld [vmem:[%s1867 + $0x8] sm:$0xf]
        %v1871 = vld [vmem:[%s1867 + $0xc] sm:$0xf]
        %v1872 = vld [vmem:[%s1867 + $0x10] sm:$0xf]
        %v1873 = vld [vmem:[%s1867 + $0x14] sm:$0xf]
        %v1874 = vld [vmem:[%s1867 + $0x18] sm:$0xf]
        %v1875 = vld [vmem:[%s1867 + $0x1c] sm:$0xf]
        %v1876 = vld [vmem:[%s1867 + $0x20] sm:$0xf]
        %v1877 = vld [vmem:[%s1867 + $0x24] sm:$0xf]
        %v1878 = vld [vmem:[%s1867 + $0x28] sm:$0xf]
        %v1879 = vld [vmem:[%s1867 + $0x2c] sm:$0xf]
        %v1880 = vld [vmem:[%s1867 + $0x30] sm:$0xf]
        %v1881 = vld [vmem:[%s1867 + $0x34] sm:$0xf]
        %v1882 = vld [vmem:[%s1867 + $0x38] sm:$0xf]
        %v1883 = vld [vmem:[%s1867 + $0x3c] sm:$0xf]
        %s1884 = scalar_lea.vmem %s3, 4
        %v1885 = vld [vmem:[%s1884] sm:$0x1]
        %v1887 = vlaneseq
        %v1888 = vshrl.u32 %v1887, 7
        %v1889 = vsub.s32 0, %v1888
        %v1890 = vrot.slane %v1885, %v1889
        %v1908 = vunpack.c.l.b16 %v1868
        %v1909 = vunpack.c.l.b16 %v1869
        %v1910 = vunpack.c.l.b16 %v1870
        %v1911 = vunpack.c.l.b16 %v1871
        %v1912 = vunpack.c.l.b16 %v1872
        %v1913 = vunpack.c.l.b16 %v1873
        %v1914 = vunpack.c.l.b16 %v1874
        %v1915 = vunpack.c.l.b16 %v1875
        %v1916 = vunpack.c.l.b16 %v1876
        %v1917 = vunpack.c.l.b16 %v1877
        %v1918 = vunpack.c.l.b16 %v1878
        %v1919 = vunpack.c.l.b16 %v1879
        %v1920 = vunpack.c.l.b16 %v1880
        %v1921 = vunpack.c.l.b16 %v1881
        %v1922 = vunpack.c.l.b16 %v1882
        %v1923 = vunpack.c.l.b16 %v1883
        %v1924 = vpack.c.b16 %v1909, %v1908
        %v1925 = vpack.c.b16 %v1911, %v1910
        %v1926 = vpack.c.b16 %v1913, %v1912
        %v1927 = vpack.c.b16 %v1915, %v1914
        %v1928 = vpack.c.b16 %v1917, %v1916
        %v1929 = vpack.c.b16 %v1919, %v1918
        %v1930 = vpack.c.b16 %v1921, %v1920
        %v1931 = vpack.c.b16 %v1923, %v1922
        %1940 = vmatprep.subr.bf16.mxu0 0
        %1941 = vmatpush1.bf16.msra.mxu0 %v1924
        %1942 = vmatprep.subr.bf16.mxu0 0
        %1943 = vmatpush1.bf16.msra.mxu0 %v1925
        %1944 = vmatprep.subr.bf16.mxu0 0
        %1945 = vmatpush1.bf16.msra.mxu0 %v1926
        %1946 = vmatprep.subr.bf16.mxu0 0
        %1947 = vmatpush1.bf16.msra.mxu0 %v1927
        %1948 = vmatprep.subr.bf16.mxu0 0
        %1949 = vmatpush1.bf16.msra.mxu0 %v1928
        %1950 = vmatprep.subr.bf16.mxu0 0
        %1951 = vmatpush1.bf16.msra.mxu0 %v1929
        %1952 = vmatprep.subr.bf16.mxu0 0
        %1953 = vmatpush1.bf16.msra.mxu0 %v1930
        %1954 = vmatprep.subr.bf16.mxu0 0
        %1955 = vmatpush1.bf16.msra.mxu0 %v1931
        %1956 = vmatprep.subr.bf16.mxu0 0
        %1957 = vmatpush1.bf16.msra.mxu0 0
        %1958 = vmatprep.subr.bf16.mxu0 0
        %1959 = vmatpush1.bf16.msra.mxu0 0
        %1960 = vmatprep.subr.bf16.mxu0 0
        %1961 = vmatpush1.bf16.msra.mxu0 0
        %1962 = vmatprep.subr.bf16.mxu0 0
        %1963 = vmatpush1.bf16.msra.mxu0 0
        %1964 = vmatprep.subr.bf16.mxu0 0
        %1965 = vmatpush1.bf16.msra.mxu0 0
        %1966 = vmatprep.subr.bf16.mxu0 0
        %1967 = vmatpush1.bf16.msra.mxu0 0
        %1968 = vmatprep.subr.bf16.mxu0 0
        %1969 = vmatpush1.bf16.msra.mxu0 0
        %1970 = vmatprep.subr.bf16.mxu0 0
        %1971 = vmatpush1.bf16.msra.mxu0 0
        %1972 = vmatprep.mubr.bf16.mxu0 0
        %1973 = vmatmul.mubr.bf16.gmra.mrb[0].mxu0 %v1851
        %v1974 = vpop.f32.mrb[0].mxu0
        %v1975 = vadd.f32 %v1890, %v1974
        %v1976 = vpop.f32.mrb[0].mxu0
        %v1977 = vpop.f32.mrb[0].mxu0
        %v1978 = vadd.f32 %v1890, %v1977
        %v1979 = vpop.f32.mrb[0].mxu0
        %1980 = vmatprep.mubr.bf16.mxu0 0
        %1981 = vmatmul.mubr.bf16.gmra.mrb[0].mxu0 %v1852
        %v1982 = vpop.f32.mrb[0].mxu0
        %v1983 = vadd.f32 %v1890, %v1982
        %v1984 = vpop.f32.mrb[0].mxu0
        %v1985 = vpop.f32.mrb[0].mxu0
        %v1986 = vadd.f32 %v1890, %v1985
        %v1987 = vpop.f32.mrb[0].mxu0
        %1988 = vmatprep.mubr.bf16.mxu0 0
        %1989 = vmatmul.mubr.bf16.gmra.mrb[0].mxu0 %v1853
        %v1990 = vpop.f32.mrb[0].mxu0
        %v1991 = vadd.f32 %v1890, %v1990
        %v1992 = vpop.f32.mrb[0].mxu0
        %v1993 = vpop.f32.mrb[0].mxu0
        %v1994 = vadd.f32 %v1890, %v1993
        %v1995 = vpop.f32.mrb[0].mxu0
        %1996 = vmatprep.mubr.bf16.mxu0 0
        %1997 = vmatmul.mubr.bf16.gmra.mrb[0].mxu0 %v1854
        %v1998 = vpop.f32.mrb[0].mxu0
        %v1999 = vadd.f32 %v1890, %v1998
        %v2000 = vpop.f32.mrb[0].mxu0
        %v2001 = vpop.f32.mrb[0].mxu0
        %v2002 = vadd.f32 %v1890, %v2001
        %v2003 = vpop.f32.mrb[0].mxu0
        %2004 = vmatprep.mubr.bf16.mxu0 0
        %2005 = vmatmul.mubr.bf16.gmra.mrb[0].mxu0 %v1855
        %v2006 = vpop.f32.mrb[0].mxu0
        %v2007 = vadd.f32 %v1890, %v2006
        %v2008 = vpop.f32.mrb[0].mxu0
        %v2009 = vpop.f32.mrb[0].mxu0
        %v2010 = vadd.f32 %v1890, %v2009
        %v2011 = vpop.f32.mrb[0].mxu0
        %2012 = vmatprep.mubr.bf16.mxu0 0
        %2013 = vmatmul.mubr.bf16.gmra.mrb[0].mxu0 %v1856
        %v2014 = vpop.f32.mrb[0].mxu0
        %v2015 = vadd.f32 %v1890, %v2014
        %v2016 = vpop.f32.mrb[0].mxu0
        %v2017 = vpop.f32.mrb[0].mxu0
        %v2018 = vadd.f32 %v1890, %v2017
        %v2019 = vpop.f32.mrb[0].mxu0
        %2020 = vmatprep.mubr.bf16.mxu0 0
        %2021 = vmatmul.mubr.bf16.gmra.mrb[0].mxu0 %v1857
        %v2022 = vpop.f32.mrb[0].mxu0
        %v2023 = vadd.f32 %v1890, %v2022
        %v2024 = vpop.f32.mrb[0].mxu0
        %v2025 = vpop.f32.mrb[0].mxu0
        %v2026 = vadd.f32 %v1890, %v2025
        %v2027 = vpop.f32.mrb[0].mxu0
        %2028 = vmatprep.mubr.bf16.mxu0 0
        %2029 = vmatmul.mubr.bf16.gmra.mrb[0].mxu0 %v1858
        %v2030 = vpop.f32.mrb[0].mxu0
        %v2031 = vadd.f32 %v1890, %v2030
        %v2032 = vpop.f32.mrb[0].mxu0
        %v2033 = vpop.f32.mrb[0].mxu0
        %v2034 = vadd.f32 %v1890, %v2033
        %v2035 = vpop.f32.mrb[0].mxu0
        %2036 = vmatprep.mubr.bf16.mxu0 0
        %2037 = vmatmul.mubr.bf16.gmra.mrb[0].mxu0 %v1859
        %v2038 = vpop.f32.mrb[0].mxu0
        %v2039 = vadd.f32 %v1890, %v2038
        %v2040 = vpop.f32.mrb[0].mxu0
        %v2041 = vpop.f32.mrb[0].mxu0
        %v2042 = vadd.f32 %v1890, %v2041
        %v2043 = vpop.f32.mrb[0].mxu0
        %2044 = vmatprep.mubr.bf16.mxu0 0
        %2045 = vmatmul.mubr.bf16.gmra.mrb[0].mxu0 %v1860
        %v2046 = vpop.f32.mrb[0].mxu0
        %v2047 = vadd.f32 %v1890, %v2046
        %v2048 = vpop.f32.mrb[0].mxu0
        %v2049 = vpop.f32.mrb[0].mxu0
        %v2050 = vadd.f32 %v1890, %v2049
        %v2051 = vpop.f32.mrb[0].mxu0
        %2052 = vmatprep.mubr.bf16.mxu0 0
        %2053 = vmatmul.mubr.bf16.gmra.mrb[0].mxu0 %v1861
        %v2054 = vpop.f32.mrb[0].mxu0
        %v2055 = vadd.f32 %v1890, %v2054
        %v2056 = vpop.f32.mrb[0].mxu0
        %v2057 = vpop.f32.mrb[0].mxu0
        %v2058 = vadd.f32 %v1890, %v2057
        %v2059 = vpop.f32.mrb[0].mxu0
        %2060 = vmatprep.mubr.bf16.mxu0 0
        %2061 = vmatmul.mubr.bf16.gmra.mrb[0].mxu0 %v1862
        %v2062 = vpop.f32.mrb[0].mxu0
        %v2063 = vadd.f32 %v1890, %v2062
        %v2064 = vpop.f32.mrb[0].mxu0
        %v2065 = vpop.f32.mrb[0].mxu0
        %v2066 = vadd.f32 %v1890, %v2065
        %v2067 = vpop.f32.mrb[0].mxu0
        %2068 = vmatprep.mubr.bf16.mxu0 0
        %2069 = vmatmul.mubr.bf16.gmra.mrb[0].mxu0 %v1863
        %v2070 = vpop.f32.mrb[0].mxu0
        %v2071 = vadd.f32 %v1890, %v2070
        %v2072 = vpop.f32.mrb[0].mxu0
        %v2073 = vpop.f32.mrb[0].mxu0
        %v2074 = vadd.f32 %v1890, %v2073
        %v2075 = vpop.f32.mrb[0].mxu0
        %2076 = vmatprep.mubr.bf16.mxu0 0
        %2077 = vmatmul.mubr.bf16.gmra.mrb[0].mxu0 %v1864
        %v2078 = vpop.f32.mrb[0].mxu0
        %v2079 = vadd.f32 %v1890, %v2078
        %v2080 = vpop.f32.mrb[0].mxu0
        %v2081 = vpop.f32.mrb[0].mxu0
        %v2082 = vadd.f32 %v1890, %v2081
        %v2083 = vpop.f32.mrb[0].mxu0
        %2084 = vmatprep.mubr.bf16.mxu0 0
        %2085 = vmatmul.mubr.bf16.gmra.mrb[0].mxu0 %v1865
        %v2086 = vpop.f32.mrb[0].mxu0
        %v2087 = vadd.f32 %v1890, %v2086
        %v2088 = vpop.f32.mrb[0].mxu0
        %v2089 = vpop.f32.mrb[0].mxu0
        %v2090 = vadd.f32 %v1890, %v2089
        %v2091 = vpop.f32.mrb[0].mxu0
        %2092 = vmatprep.mubr.bf16.mxu0 0
        %2093 = vmatmul.mubr.bf16.gmra.mrb[0].mxu0 %v1866
        %v2094 = vpop.f32.mrb[0].mxu0
        %v2095 = vadd.f32 %v1890, %v2094
        %v2096 = vpop.f32.mrb[0].mxu0
        %v2097 = vpop.f32.mrb[0].mxu0
        %v2098 = vadd.f32 %v1890, %v2097
        %v2099 = vpop.f32.mrb[0].mxu0
        %2100 = vdwg.mxu0
        %v2101 = vmax.f32 %v1975, 0.0
        %v2102 = vmax.f32 %v1978, 0.0
        %v2103 = vmax.f32 %v1983, 0.0
        %v2104 = vmax.f32 %v1986, 0.0
        %v2105 = vmax.f32 %v1991, 0.0
        %v2106 = vmax.f32 %v1994, 0.0
        %v2107 = vmax.f32 %v1999, 0.0
        %v2108 = vmax.f32 %v2002, 0.0
        %v2109 = vmax.f32 %v2007, 0.0
        %v2110 = vmax.f32 %v2010, 0.0
        %v2111 = vmax.f32 %v2015, 0.0
        %v2112 = vmax.f32 %v2018, 0.0
        %v2113 = vmax.f32 %v2023, 0.0
        %v2114 = vmax.f32 %v2026, 0.0
        %v2115 = vmax.f32 %v2031, 0.0
        %v2116 = vmax.f32 %v2034, 0.0
        %v2117 = vmax.f32 %v2039, 0.0
        %v2118 = vmax.f32 %v2042, 0.0
        %v2119 = vmax.f32 %v2047, 0.0
        %v2120 = vmax.f32 %v2050, 0.0
        %v2121 = vmax.f32 %v2055, 0.0
        %v2122 = vmax.f32 %v2058, 0.0
        %v2123 = vmax.f32 %v2063, 0.0
        %v2124 = vmax.f32 %v2066, 0.0
        %v2125 = vmax.f32 %v2071, 0.0
        %v2126 = vmax.f32 %v2074, 0.0
        %v2127 = vmax.f32 %v2079, 0.0
        %v2128 = vmax.f32 %v2082, 0.0
        %v2129 = vmax.f32 %v2087, 0.0
        %v2130 = vmax.f32 %v2090, 0.0
        %v2131 = vmax.f32 %v2095, 0.0
        %v2132 = vmax.f32 %v2098, 0.0
        %v2133 = vpack.c.bf16 %v2102, %v2101
        %v2134 = vpack.c.bf16 %v2104, %v2103
        %v2135 = vpack.c.bf16 %v2106, %v2105
        %v2136 = vpack.c.bf16 %v2108, %v2107
        %v2137 = vpack.c.bf16 %v2110, %v2109
        %v2138 = vpack.c.bf16 %v2112, %v2111
        %v2139 = vpack.c.bf16 %v2114, %v2113
        %v2140 = vpack.c.bf16 %v2116, %v2115
        %v2141 = vpack.c.bf16 %v2118, %v2117
        %v2142 = vpack.c.bf16 %v2120, %v2119
        %v2143 = vpack.c.bf16 %v2122, %v2121
        %v2144 = vpack.c.bf16 %v2124, %v2123
        %v2145 = vpack.c.bf16 %v2126, %v2125
        %v2146 = vpack.c.bf16 %v2128, %v2127
        %v2147 = vpack.c.bf16 %v2130, %v2129
        %v2148 = vpack.c.bf16 %v2132, %v2131
        %s2149 = scalar_lea.vmem %s2, 320
        %v2150 = vld [vmem:[%s2149] sm:$0xf]
        %v2151 = vld [vmem:[%s2149 + $0x4] sm:$0xf]
        %v2152 = vld [vmem:[%s2149 + $0x8] sm:$0xf]
        %v2153 = vld [vmem:[%s2149 + $0xc] sm:$0xf]
        %v2154 = vld [vmem:[%s2149 + $0x10] sm:$0xf]
        %v2155 = vld [vmem:[%s2149 + $0x14] sm:$0xf]
        %v2156 = vld [vmem:[%s2149 + $0x18] sm:$0xf]
        %v2157 = vld [vmem:[%s2149 + $0x1c] sm:$0xf]
        %v2158 = vld [vmem:[%s2149 + $0x20] sm:$0xf]
        %v2159 = vld [vmem:[%s2149 + $0x24] sm:$0xf]
        %v2160 = vld [vmem:[%s2149 + $0x28] sm:$0xf]
        %v2161 = vld [vmem:[%s2149 + $0x2c] sm:$0xf]
        %v2162 = vld [vmem:[%s2149 + $0x30] sm:$0xf]
        %v2163 = vld [vmem:[%s2149 + $0x34] sm:$0xf]
        %v2164 = vld [vmem:[%s2149 + $0x38] sm:$0xf]
        %v2165 = vld [vmem:[%s2149 + $0x3c] sm:$0xf]
        %s2166 = scalar_lea.vmem %s3, 5
        %v2167 = vld [vmem:[%s2166] sm:$0x1]
        %v2169 = vlaneseq
        %v2170 = vshrl.u32 %v2169, 7
        %v2171 = vsub.s32 0, %v2170
        %v2172 = vrot.slane %v2167, %v2171
        %v2190 = vunpack.c.l.b16 %v2150
        %v2191 = vunpack.c.l.b16 %v2151
        %v2192 = vunpack.c.l.b16 %v2152
        %v2193 = vunpack.c.l.b16 %v2153
        %v2194 = vunpack.c.l.b16 %v2154
        %v2195 = vunpack.c.l.b16 %v2155
        %v2196 = vunpack.c.l.b16 %v2156
        %v2197 = vunpack.c.l.b16 %v2157
        %v2198 = vunpack.c.l.b16 %v2158
        %v2199 = vunpack.c.l.b16 %v2159
        %v2200 = vunpack.c.l.b16 %v2160
        %v2201 = vunpack.c.l.b16 %v2161
        %v2202 = vunpack.c.l.b16 %v2162
        %v2203 = vunpack.c.l.b16 %v2163
        %v2204 = vunpack.c.l.b16 %v2164
        %v2205 = vunpack.c.l.b16 %v2165
        %v2206 = vpack.c.b16 %v2191, %v2190
        %v2207 = vpack.c.b16 %v2193, %v2192
        %v2208 = vpack.c.b16 %v2195, %v2194
        %v2209 = vpack.c.b16 %v2197, %v2196
        %v2210 = vpack.c.b16 %v2199, %v2198
        %v2211 = vpack.c.b16 %v2201, %v2200
        %v2212 = vpack.c.b16 %v2203, %v2202
        %v2213 = vpack.c.b16 %v2205, %v2204
        %2222 = vmatprep.subr.bf16.mxu0 0
        %2223 = vmatpush1.bf16.msra.mxu0 %v2206
        %2224 = vmatprep.subr.bf16.mxu0 0
        %2225 = vmatpush1.bf16.msra.mxu0 %v2207
        %2226 = vmatprep.subr.bf16.mxu0 0
        %2227 = vmatpush1.bf16.msra.mxu0 %v2208
        %2228 = vmatprep.subr.bf16.mxu0 0
        %2229 = vmatpush1.bf16.msra.mxu0 %v2209
        %2230 = vmatprep.subr.bf16.mxu0 0
        %2231 = vmatpush1.bf16.msra.mxu0 %v2210
        %2232 = vmatprep.subr.bf16.mxu0 0
        %2233 = vmatpush1.bf16.msra.mxu0 %v2211
        %2234 = vmatprep.subr.bf16.mxu0 0
        %2235 = vmatpush1.bf16.msra.mxu0 %v2212
        %2236 = vmatprep.subr.bf16.mxu0 0
        %2237 = vmatpush1.bf16.msra.mxu0 %v2213
        %2238 = vmatprep.subr.bf16.mxu0 0
        %2239 = vmatpush1.bf16.msra.mxu0 0
        %2240 = vmatprep.subr.bf16.mxu0 0
        %2241 = vmatpush1.bf16.msra.mxu0 0
        %2242 = vmatprep.subr.bf16.mxu0 0
        %2243 = vmatpush1.bf16.msra.mxu0 0
        %2244 = vmatprep.subr.bf16.mxu0 0
        %2245 = vmatpush1.bf16.msra.mxu0 0
        %2246 = vmatprep.subr.bf16.mxu0 0
        %2247 = vmatpush1.bf16.msra.mxu0 0
        %2248 = vmatprep.subr.bf16.mxu0 0
        %2249 = vmatpush1.bf16.msra.mxu0 0
        %2250 = vmatprep.subr.bf16.mxu0 0
        %2251 = vmatpush1.bf16.msra.mxu0 0
        %2252 = vmatprep.subr.bf16.mxu0 0
        %2253 = vmatpush1.bf16.msra.mxu0 0
        %2254 = vmatprep.mubr.bf16.mxu0 0
        %2255 = vmatmul.mubr.bf16.gmra.mrb[0].mxu0 %v2133
        %v2256 = vpop.f32.mrb[0].mxu0
        %v2257 = vadd.f32 %v2172, %v2256
        %v2258 = vpop.f32.mrb[0].mxu0
        %v2259 = vpop.f32.mrb[0].mxu0
        %v2260 = vadd.f32 %v2172, %v2259
        %v2261 = vpop.f32.mrb[0].mxu0
        %2262 = vmatprep.mubr.bf16.mxu0 0
        %2263 = vmatmul.mubr.bf16.gmra.mrb[0].mxu0 %v2134
        %v2264 = vpop.f32.mrb[0].mxu0
        %v2265 = vadd.f32 %v2172, %v2264
        %v2266 = vpop.f32.mrb[0].mxu0
        %v2267 = vpop.f32.mrb[0].mxu0
        %v2268 = vadd.f32 %v2172, %v2267
        %v2269 = vpop.f32.mrb[0].mxu0
        %2270 = vmatprep.mubr.bf16.mxu0 0
        %2271 = vmatmul.mubr.bf16.gmra.mrb[0].mxu0 %v2135
        %v2272 = vpop.f32.mrb[0].mxu0
        %v2273 = vadd.f32 %v2172, %v2272
        %v2274 = vpop.f32.mrb[0].mxu0
        %v2275 = vpop.f32.mrb[0].mxu0
        %v2276 = vadd.f32 %v2172, %v2275
        %v2277 = vpop.f32.mrb[0].mxu0
        %2278 = vmatprep.mubr.bf16.mxu0 0
        %2279 = vmatmul.mubr.bf16.gmra.mrb[0].mxu0 %v2136
        %v2280 = vpop.f32.mrb[0].mxu0
        %v2281 = vadd.f32 %v2172, %v2280
        %v2282 = vpop.f32.mrb[0].mxu0
        %v2283 = vpop.f32.mrb[0].mxu0
        %v2284 = vadd.f32 %v2172, %v2283
        %v2285 = vpop.f32.mrb[0].mxu0
        %2286 = vmatprep.mubr.bf16.mxu0 0
        %2287 = vmatmul.mubr.bf16.gmra.mrb[0].mxu0 %v2137
        %v2288 = vpop.f32.mrb[0].mxu0
        %v2289 = vadd.f32 %v2172, %v2288
        %v2290 = vpop.f32.mrb[0].mxu0
        %v2291 = vpop.f32.mrb[0].mxu0
        %v2292 = vadd.f32 %v2172, %v2291
        %v2293 = vpop.f32.mrb[0].mxu0
        %2294 = vmatprep.mubr.bf16.mxu0 0
        %2295 = vmatmul.mubr.bf16.gmra.mrb[0].mxu0 %v2138
        %v2296 = vpop.f32.mrb[0].mxu0
        %v2297 = vadd.f32 %v2172, %v2296
        %v2298 = vpop.f32.mrb[0].mxu0
        %v2299 = vpop.f32.mrb[0].mxu0
        %v2300 = vadd.f32 %v2172, %v2299
        %v2301 = vpop.f32.mrb[0].mxu0
        %2302 = vmatprep.mubr.bf16.mxu0 0
        %2303 = vmatmul.mubr.bf16.gmra.mrb[0].mxu0 %v2139
        %v2304 = vpop.f32.mrb[0].mxu0
        %v2305 = vadd.f32 %v2172, %v2304
        %v2306 = vpop.f32.mrb[0].mxu0
        %v2307 = vpop.f32.mrb[0].mxu0
        %v2308 = vadd.f32 %v2172, %v2307
        %v2309 = vpop.f32.mrb[0].mxu0
        %2310 = vmatprep.mubr.bf16.mxu0 0
        %2311 = vmatmul.mubr.bf16.gmra.mrb[0].mxu0 %v2140
        %v2312 = vpop.f32.mrb[0].mxu0
        %v2313 = vadd.f32 %v2172, %v2312
        %v2314 = vpop.f32.mrb[0].mxu0
        %v2315 = vpop.f32.mrb[0].mxu0
        %v2316 = vadd.f32 %v2172, %v2315
        %v2317 = vpop.f32.mrb[0].mxu0
        %2318 = vmatprep.mubr.bf16.mxu0 0
        %2319 = vmatmul.mubr.bf16.gmra.mrb[0].mxu0 %v2141
        %v2320 = vpop.f32.mrb[0].mxu0
        %v2321 = vadd.f32 %v2172, %v2320
        %v2322 = vpop.f32.mrb[0].mxu0
        %v2323 = vpop.f32.mrb[0].mxu0
        %v2324 = vadd.f32 %v2172, %v2323
        %v2325 = vpop.f32.mrb[0].mxu0
        %2326 = vmatprep.mubr.bf16.mxu0 0
        %2327 = vmatmul.mubr.bf16.gmra.mrb[0].mxu0 %v2142
        %v2328 = vpop.f32.mrb[0].mxu0
        %v2329 = vadd.f32 %v2172, %v2328
        %v2330 = vpop.f32.mrb[0].mxu0
        %v2331 = vpop.f32.mrb[0].mxu0
        %v2332 = vadd.f32 %v2172, %v2331
        %v2333 = vpop.f32.mrb[0].mxu0
        %2334 = vmatprep.mubr.bf16.mxu0 0
        %2335 = vmatmul.mubr.bf16.gmra.mrb[0].mxu0 %v2143
        %v2336 = vpop.f32.mrb[0].mxu0
        %v2337 = vadd.f32 %v2172, %v2336
        %v2338 = vpop.f32.mrb[0].mxu0
        %v2339 = vpop.f32.mrb[0].mxu0
        %v2340 = vadd.f32 %v2172, %v2339
        %v2341 = vpop.f32.mrb[0].mxu0
        %2342 = vmatprep.mubr.bf16.mxu0 0
        %2343 = vmatmul.mubr.bf16.gmra.mrb[0].mxu0 %v2144
        %v2344 = vpop.f32.mrb[0].mxu0
        %v2345 = vadd.f32 %v2172, %v2344
        %v2346 = vpop.f32.mrb[0].mxu0
        %v2347 = vpop.f32.mrb[0].mxu0
        %v2348 = vadd.f32 %v2172, %v2347
        %v2349 = vpop.f32.mrb[0].mxu0
        %2350 = vmatprep.mubr.bf16.mxu0 0
        %2351 = vmatmul.mubr.bf16.gmra.mrb[0].mxu0 %v2145
        %v2352 = vpop.f32.mrb[0].mxu0
        %v2353 = vadd.f32 %v2172, %v2352
        %v2354 = vpop.f32.mrb[0].mxu0
        %v2355 = vpop.f32.mrb[0].mxu0
        %v2356 = vadd.f32 %v2172, %v2355
        %v2357 = vpop.f32.mrb[0].mxu0
        %2358 = vmatprep.mubr.bf16.mxu0 0
        %2359 = vmatmul.mubr.bf16.gmra.mrb[0].mxu0 %v2146
        %v2360 = vpop.f32.mrb[0].mxu0
        %v2361 = vadd.f32 %v2172, %v2360
        %v2362 = vpop.f32.mrb[0].mxu0
        %v2363 = vpop.f32.mrb[0].mxu0
        %v2364 = vadd.f32 %v2172, %v2363
        %v2365 = vpop.f32.mrb[0].mxu0
        %2366 = vmatprep.mubr.bf16.mxu0 0
        %2367 = vmatmul.mubr.bf16.gmra.mrb[0].mxu0 %v2147
        %v2368 = vpop.f32.mrb[0].mxu0
        %v2369 = vadd.f32 %v2172, %v2368
        %v2370 = vpop.f32.mrb[0].mxu0
        %v2371 = vpop.f32.mrb[0].mxu0
        %v2372 = vadd.f32 %v2172, %v2371
        %v2373 = vpop.f32.mrb[0].mxu0
        %2374 = vmatprep.mubr.bf16.mxu0 0
        %2375 = vmatmul.mubr.bf16.gmra.mrb[0].mxu0 %v2148
        %v2376 = vpop.f32.mrb[0].mxu0
        %v2377 = vadd.f32 %v2172, %v2376
        %v2378 = vpop.f32.mrb[0].mxu0
        %v2379 = vpop.f32.mrb[0].mxu0
        %v2380 = vadd.f32 %v2172, %v2379
        %v2381 = vpop.f32.mrb[0].mxu0
        %2382 = vdwg.mxu0
        %v2383 = vmax.f32 %v2257, 0.0
        %v2384 = vmax.f32 %v2260, 0.0
        %v2385 = vmax.f32 %v2265, 0.0
        %v2386 = vmax.f32 %v2268, 0.0
        %v2387 = vmax.f32 %v2273, 0.0
        %v2388 = vmax.f32 %v2276, 0.0
        %v2389 = vmax.f32 %v2281, 0.0
        %v2390 = vmax.f32 %v2284, 0.0
        %v2391 = vmax.f32 %v2289, 0.0
        %v2392 = vmax.f32 %v2292, 0.0
        %v2393 = vmax.f32 %v2297, 0.0
        %v2394 = vmax.f32 %v2300, 0.0
        %v2395 = vmax.f32 %v2305, 0.0
        %v2396 = vmax.f32 %v2308, 0.0
        %v2397 = vmax.f32 %v2313, 0.0
        %v2398 = vmax.f32 %v2316, 0.0
        %v2399 = vmax.f32 %v2321, 0.0
        %v2400 = vmax.f32 %v2324, 0.0
        %v2401 = vmax.f32 %v2329, 0.0
        %v2402 = vmax.f32 %v2332, 0.0
        %v2403 = vmax.f32 %v2337, 0.0
        %v2404 = vmax.f32 %v2340, 0.0
        %v2405 = vmax.f32 %v2345, 0.0
        %v2406 = vmax.f32 %v2348, 0.0
        %v2407 = vmax.f32 %v2353, 0.0
        %v2408 = vmax.f32 %v2356, 0.0
        %v2409 = vmax.f32 %v2361, 0.0
        %v2410 = vmax.f32 %v2364, 0.0
        %v2411 = vmax.f32 %v2369, 0.0
        %v2412 = vmax.f32 %v2372, 0.0
        %v2413 = vmax.f32 %v2377, 0.0
        %v2414 = vmax.f32 %v2380, 0.0
        %v2415 = vadd.f32 %v1537, %v2383
        %v2416 = vadd.f32 %v1538, %v2384
        %v2417 = vadd.f32 %v1539, %v2385
        %v2418 = vadd.f32 %v1540, %v2386
        %v2419 = vadd.f32 %v1541, %v2387
        %v2420 = vadd.f32 %v1542, %v2388
        %v2421 = vadd.f32 %v1543, %v2389
        %v2422 = vadd.f32 %v1544, %v2390
        %v2423 = vadd.f32 %v1545, %v2391
        %v2424 = vadd.f32 %v1546, %v2392
        %v2425 = vadd.f32 %v1547, %v2393
        %v2426 = vadd.f32 %v1548, %v2394
        %v2427 = vadd.f32 %v1549, %v2395
        %v2428 = vadd.f32 %v1550, %v2396
        %v2429 = vadd.f32 %v1551, %v2397
        %v2430 = vadd.f32 %v1552, %v2398
        %v2431 = vadd.f32 %v1553, %v2399
        %v2432 = vadd.f32 %v1554, %v2400
        %v2433 = vadd.f32 %v1555, %v2401
        %v2434 = vadd.f32 %v1556, %v2402
        %v2435 = vadd.f32 %v1557, %v2403
        %v2436 = vadd.f32 %v1558, %v2404
        %v2437 = vadd.f32 %v1559, %v2405
        %v2438 = vadd.f32 %v1560, %v2406
        %v2439 = vadd.f32 %v1561, %v2407
        %v2440 = vadd.f32 %v1562, %v2408
        %v2441 = vadd.f32 %v1563, %v2409
        %v2442 = vadd.f32 %v1564, %v2410
        %v2443 = vadd.f32 %v1565, %v2411
        %v2444 = vadd.f32 %v1566, %v2412
        %v2445 = vadd.f32 %v1567, %v2413
        %v2446 = vadd.f32 %v1568, %v2414
        %v2447 = vpack.c.bf16 %v2416, %v2415
        %v2448 = vpack.c.bf16 %v2418, %v2417
        %v2449 = vpack.c.bf16 %v2420, %v2419
        %v2450 = vpack.c.bf16 %v2422, %v2421
        %v2451 = vpack.c.bf16 %v2424, %v2423
        %v2452 = vpack.c.bf16 %v2426, %v2425
        %v2453 = vpack.c.bf16 %v2428, %v2427
        %v2454 = vpack.c.bf16 %v2430, %v2429
        %v2455 = vpack.c.bf16 %v2432, %v2431
        %v2456 = vpack.c.bf16 %v2434, %v2433
        %v2457 = vpack.c.bf16 %v2436, %v2435
        %v2458 = vpack.c.bf16 %v2438, %v2437
        %v2459 = vpack.c.bf16 %v2440, %v2439
        %v2460 = vpack.c.bf16 %v2442, %v2441
        %v2461 = vpack.c.bf16 %v2444, %v2443
        %v2462 = vpack.c.bf16 %v2446, %v2445
        %v2463 = vld [vmem:[%s4] sm:$0xf]
        %v2464 = vld [vmem:[%s4 + $0x4] sm:$0xf]
        %v2465 = vld [vmem:[%s4 + $0x8] sm:$0xf]
        %v2466 = vld [vmem:[%s4 + $0xc] sm:$0xf]
        %v2467 = vld [vmem:[%s4 + $0x10] sm:$0xf]
        %v2468 = vld [vmem:[%s4 + $0x14] sm:$0xf]
        %v2469 = vld [vmem:[%s4 + $0x18] sm:$0xf]
        %v2470 = vld [vmem:[%s4 + $0x1c] sm:$0xf]
        %v2471 = vld [vmem:[%s4 + $0x20] sm:$0xf]
        %v2472 = vld [vmem:[%s4 + $0x24] sm:$0xf]
        %v2473 = vld [vmem:[%s4 + $0x28] sm:$0xf]
        %v2474 = vld [vmem:[%s4 + $0x2c] sm:$0xf]
        %v2475 = vld [vmem:[%s4 + $0x30] sm:$0xf]
        %v2476 = vld [vmem:[%s4 + $0x34] sm:$0xf]
        %v2477 = vld [vmem:[%s4 + $0x38] sm:$0xf]
        %v2478 = vld [vmem:[%s4 + $0x3c] sm:$0xf]
        %v2479 = vld [vmem:[%s5] sm:$0x1]
        %v2481 = vlaneseq
        %v2482 = vshrl.u32 %v2481, 7
        %v2483 = vsub.s32 0, %v2482
        %v2484 = vrot.slane %v2479, %v2483
        %v2502 = vunpack.c.l.b16 %v2463
        %v2503 = vunpack.c.l.b16 %v2464
        %v2504 = vunpack.c.l.b16 %v2465
        %v2505 = vunpack.c.l.b16 %v2466
        %v2506 = vunpack.c.l.b16 %v2467
        %v2507 = vunpack.c.l.b16 %v2468
        %v2508 = vunpack.c.l.b16 %v2469
        %v2509 = vunpack.c.l.b16 %v2470
        %v2510 = vunpack.c.l.b16 %v2471
        %v2511 = vunpack.c.l.b16 %v2472
        %v2512 = vunpack.c.l.b16 %v2473
        %v2513 = vunpack.c.l.b16 %v2474
        %v2514 = vunpack.c.l.b16 %v2475
        %v2515 = vunpack.c.l.b16 %v2476
        %v2516 = vunpack.c.l.b16 %v2477
        %v2517 = vunpack.c.l.b16 %v2478
        %v2518 = vpack.c.b16 %v2503, %v2502
        %v2519 = vpack.c.b16 %v2505, %v2504
        %v2520 = vpack.c.b16 %v2507, %v2506
        %v2521 = vpack.c.b16 %v2509, %v2508
        %v2522 = vpack.c.b16 %v2511, %v2510
        %v2523 = vpack.c.b16 %v2513, %v2512
        %v2524 = vpack.c.b16 %v2515, %v2514
        %v2525 = vpack.c.b16 %v2517, %v2516
        %2534 = vmatprep.subr.bf16.mxu0 0
        %2535 = vmatpush1.bf16.msra.mxu0 %v2518
        %2536 = vmatprep.subr.bf16.mxu0 0
        %2537 = vmatpush1.bf16.msra.mxu0 %v2519
        %2538 = vmatprep.subr.bf16.mxu0 0
        %2539 = vmatpush1.bf16.msra.mxu0 %v2520
        %2540 = vmatprep.subr.bf16.mxu0 0
        %2541 = vmatpush1.bf16.msra.mxu0 %v2521
        %2542 = vmatprep.subr.bf16.mxu0 0
        %2543 = vmatpush1.bf16.msra.mxu0 %v2522
        %2544 = vmatprep.subr.bf16.mxu0 0
        %2545 = vmatpush1.bf16.msra.mxu0 %v2523
        %2546 = vmatprep.subr.bf16.mxu0 0
        %2547 = vmatpush1.bf16.msra.mxu0 %v2524
        %2548 = vmatprep.subr.bf16.mxu0 0
        %2549 = vmatpush1.bf16.msra.mxu0 %v2525
        %2550 = vmatprep.subr.bf16.mxu0 0
        %2551 = vmatpush1.bf16.msra.mxu0 0
        %2552 = vmatprep.subr.bf16.mxu0 0
        %2553 = vmatpush1.bf16.msra.mxu0 0
        %2554 = vmatprep.subr.bf16.mxu0 0
        %2555 = vmatpush1.bf16.msra.mxu0 0
        %2556 = vmatprep.subr.bf16.mxu0 0
        %2557 = vmatpush1.bf16.msra.mxu0 0
        %2558 = vmatprep.subr.bf16.mxu0 0
        %2559 = vmatpush1.bf16.msra.mxu0 0
        %2560 = vmatprep.subr.bf16.mxu0 0
        %2561 = vmatpush1.bf16.msra.mxu0 0
        %2562 = vmatprep.subr.bf16.mxu0 0
        %2563 = vmatpush1.bf16.msra.mxu0 0
        %2564 = vmatprep.subr.bf16.mxu0 0
        %2565 = vmatpush1.bf16.msra.mxu0 0
        %2566 = vmatprep.mubr.bf16.mxu0 0
        %2567 = vmatmul.mubr.bf16.gmra.mrb[0].mxu0 %v2447
        %v2568 = vpop.f32.mrb[0].mxu0
        %v2569 = vadd.f32 %v2484, %v2568
        %v2570 = vpop.f32.mrb[0].mxu0
        %v2571 = vpop.f32.mrb[0].mxu0
        %v2572 = vadd.f32 %v2484, %v2571
        %v2573 = vpop.f32.mrb[0].mxu0
        %2574 = vmatprep.mubr.bf16.mxu0 0
        %2575 = vmatmul.mubr.bf16.gmra.mrb[0].mxu0 %v2448
        %v2576 = vpop.f32.mrb[0].mxu0
        %v2577 = vadd.f32 %v2484, %v2576
        %v2578 = vpop.f32.mrb[0].mxu0
        %v2579 = vpop.f32.mrb[0].mxu0
        %v2580 = vadd.f32 %v2484, %v2579
        %v2581 = vpop.f32.mrb[0].mxu0
        %2582 = vmatprep.mubr.bf16.mxu0 0
        %2583 = vmatmul.mubr.bf16.gmra.mrb[0].mxu0 %v2449
        %v2584 = vpop.f32.mrb[0].mxu0
        %v2585 = vadd.f32 %v2484, %v2584
        %v2586 = vpop.f32.mrb[0].mxu0
        %v2587 = vpop.f32.mrb[0].mxu0
        %v2588 = vadd.f32 %v2484, %v2587
        %v2589 = vpop.f32.mrb[0].mxu0
        %2590 = vmatprep.mubr.bf16.mxu0 0
        %2591 = vmatmul.mubr.bf16.gmra.mrb[0].mxu0 %v2450
        %v2592 = vpop.f32.mrb[0].mxu0
        %v2593 = vadd.f32 %v2484, %v2592
        %v2594 = vpop.f32.mrb[0].mxu0
        %v2595 = vpop.f32.mrb[0].mxu0
        %v2596 = vadd.f32 %v2484, %v2595
        %v2597 = vpop.f32.mrb[0].mxu0
        %2598 = vmatprep.mubr.bf16.mxu0 0
        %2599 = vmatmul.mubr.bf16.gmra.mrb[0].mxu0 %v2451
        %v2600 = vpop.f32.mrb[0].mxu0
        %v2601 = vadd.f32 %v2484, %v2600
        %v2602 = vpop.f32.mrb[0].mxu0
        %v2603 = vpop.f32.mrb[0].mxu0
        %v2604 = vadd.f32 %v2484, %v2603
        %v2605 = vpop.f32.mrb[0].mxu0
        %2606 = vmatprep.mubr.bf16.mxu0 0
        %2607 = vmatmul.mubr.bf16.gmra.mrb[0].mxu0 %v2452
        %v2608 = vpop.f32.mrb[0].mxu0
        %v2609 = vadd.f32 %v2484, %v2608
        %v2610 = vpop.f32.mrb[0].mxu0
        %v2611 = vpop.f32.mrb[0].mxu0
        %v2612 = vadd.f32 %v2484, %v2611
        %v2613 = vpop.f32.mrb[0].mxu0
        %2614 = vmatprep.mubr.bf16.mxu0 0
        %2615 = vmatmul.mubr.bf16.gmra.mrb[0].mxu0 %v2453
        %v2616 = vpop.f32.mrb[0].mxu0
        %v2617 = vadd.f32 %v2484, %v2616
        %v2618 = vpop.f32.mrb[0].mxu0
        %v2619 = vpop.f32.mrb[0].mxu0
        %v2620 = vadd.f32 %v2484, %v2619
        %v2621 = vpop.f32.mrb[0].mxu0
        %2622 = vmatprep.mubr.bf16.mxu0 0
        %2623 = vmatmul.mubr.bf16.gmra.mrb[0].mxu0 %v2454
        %v2624 = vpop.f32.mrb[0].mxu0
        %v2625 = vadd.f32 %v2484, %v2624
        %v2626 = vpop.f32.mrb[0].mxu0
        %v2627 = vpop.f32.mrb[0].mxu0
        %v2628 = vadd.f32 %v2484, %v2627
        %v2629 = vpop.f32.mrb[0].mxu0
        %2630 = vmatprep.mubr.bf16.mxu0 0
        %2631 = vmatmul.mubr.bf16.gmra.mrb[0].mxu0 %v2455
        %v2632 = vpop.f32.mrb[0].mxu0
        %v2633 = vadd.f32 %v2484, %v2632
        %v2634 = vpop.f32.mrb[0].mxu0
        %v2635 = vpop.f32.mrb[0].mxu0
        %v2636 = vadd.f32 %v2484, %v2635
        %v2637 = vpop.f32.mrb[0].mxu0
        %2638 = vmatprep.mubr.bf16.mxu0 0
        %2639 = vmatmul.mubr.bf16.gmra.mrb[0].mxu0 %v2456
        %v2640 = vpop.f32.mrb[0].mxu0
        %v2641 = vadd.f32 %v2484, %v2640
        %v2642 = vpop.f32.mrb[0].mxu0
        %v2643 = vpop.f32.mrb[0].mxu0
        %v2644 = vadd.f32 %v2484, %v2643
        %v2645 = vpop.f32.mrb[0].mxu0
        %2646 = vmatprep.mubr.bf16.mxu0 0
        %2647 = vmatmul.mubr.bf16.gmra.mrb[0].mxu0 %v2457
        %v2648 = vpop.f32.mrb[0].mxu0
        %v2649 = vadd.f32 %v2484, %v2648
        %v2650 = vpop.f32.mrb[0].mxu0
        %v2651 = vpop.f32.mrb[0].mxu0
        %v2652 = vadd.f32 %v2484, %v2651
        %v2653 = vpop.f32.mrb[0].mxu0
        %2654 = vmatprep.mubr.bf16.mxu0 0
        %2655 = vmatmul.mubr.bf16.gmra.mrb[0].mxu0 %v2458
        %v2656 = vpop.f32.mrb[0].mxu0
        %v2657 = vadd.f32 %v2484, %v2656
        %v2658 = vpop.f32.mrb[0].mxu0
        %v2659 = vpop.f32.mrb[0].mxu0
        %v2660 = vadd.f32 %v2484, %v2659
        %v2661 = vpop.f32.mrb[0].mxu0
        %2662 = vmatprep.mubr.bf16.mxu0 0
        %2663 = vmatmul.mubr.bf16.gmra.mrb[0].mxu0 %v2459
        %v2664 = vpop.f32.mrb[0].mxu0
        %v2665 = vadd.f32 %v2484, %v2664
        %v2666 = vpop.f32.mrb[0].mxu0
        %v2667 = vpop.f32.mrb[0].mxu0
        %v2668 = vadd.f32 %v2484, %v2667
        %v2669 = vpop.f32.mrb[0].mxu0
        %2670 = vmatprep.mubr.bf16.mxu0 0
        %2671 = vmatmul.mubr.bf16.gmra.mrb[0].mxu0 %v2460
        %v2672 = vpop.f32.mrb[0].mxu0
        %v2673 = vadd.f32 %v2484, %v2672
        %v2674 = vpop.f32.mrb[0].mxu0
        %v2675 = vpop.f32.mrb[0].mxu0
        %v2676 = vadd.f32 %v2484, %v2675
        %v2677 = vpop.f32.mrb[0].mxu0
        %2678 = vmatprep.mubr.bf16.mxu0 0
        %2679 = vmatmul.mubr.bf16.gmra.mrb[0].mxu0 %v2461
        %v2680 = vpop.f32.mrb[0].mxu0
        %v2681 = vadd.f32 %v2484, %v2680
        %v2682 = vpop.f32.mrb[0].mxu0
        %v2683 = vpop.f32.mrb[0].mxu0
        %v2684 = vadd.f32 %v2484, %v2683
        %v2685 = vpop.f32.mrb[0].mxu0
        %2686 = vmatprep.mubr.bf16.mxu0 0
        %2687 = vmatmul.mubr.bf16.gmra.mrb[0].mxu0 %v2462
        %v2688 = vpop.f32.mrb[0].mxu0
        %v2689 = vadd.f32 %v2484, %v2688
        %v2690 = vpop.f32.mrb[0].mxu0
        %v2691 = vpop.f32.mrb[0].mxu0
        %v2692 = vadd.f32 %v2484, %v2691
        %v2693 = vpop.f32.mrb[0].mxu0
        %2694 = vdwg.mxu0
        %v2695 = vmax.f32 %v2569, 0.0
        %v2696 = vmax.f32 %v2572, 0.0
        %v2697 = vmax.f32 %v2577, 0.0
        %v2698 = vmax.f32 %v2580, 0.0
        %v2699 = vmax.f32 %v2585, 0.0
        %v2700 = vmax.f32 %v2588, 0.0
        %v2701 = vmax.f32 %v2593, 0.0
        %v2702 = vmax.f32 %v2596, 0.0
        %v2703 = vmax.f32 %v2601, 0.0
        %v2704 = vmax.f32 %v2604, 0.0
        %v2705 = vmax.f32 %v2609, 0.0
        %v2706 = vmax.f32 %v2612, 0.0
        %v2707 = vmax.f32 %v2617, 0.0
        %v2708 = vmax.f32 %v2620, 0.0
        %v2709 = vmax.f32 %v2625, 0.0
        %v2710 = vmax.f32 %v2628, 0.0
        %v2711 = vmax.f32 %v2633, 0.0
        %v2712 = vmax.f32 %v2636, 0.0
        %v2713 = vmax.f32 %v2641, 0.0
        %v2714 = vmax.f32 %v2644, 0.0
        %v2715 = vmax.f32 %v2649, 0.0
        %v2716 = vmax.f32 %v2652, 0.0
        %v2717 = vmax.f32 %v2657, 0.0
        %v2718 = vmax.f32 %v2660, 0.0
        %v2719 = vmax.f32 %v2665, 0.0
        %v2720 = vmax.f32 %v2668, 0.0
        %v2721 = vmax.f32 %v2673, 0.0
        %v2722 = vmax.f32 %v2676, 0.0
        %v2723 = vmax.f32 %v2681, 0.0
        %v2724 = vmax.f32 %v2684, 0.0
        %v2725 = vmax.f32 %v2689, 0.0
        %v2726 = vmax.f32 %v2692, 0.0
        %v2727 = vpack.c.bf16 %v2696, %v2695
        %v2728 = vpack.c.bf16 %v2698, %v2697
        %v2729 = vpack.c.bf16 %v2700, %v2699
        %v2730 = vpack.c.bf16 %v2702, %v2701
        %v2731 = vpack.c.bf16 %v2704, %v2703
        %v2732 = vpack.c.bf16 %v2706, %v2705
        %v2733 = vpack.c.bf16 %v2708, %v2707
        %v2734 = vpack.c.bf16 %v2710, %v2709
        %v2735 = vpack.c.bf16 %v2712, %v2711
        %v2736 = vpack.c.bf16 %v2714, %v2713
        %v2737 = vpack.c.bf16 %v2716, %v2715
        %v2738 = vpack.c.bf16 %v2718, %v2717
        %v2739 = vpack.c.bf16 %v2720, %v2719
        %v2740 = vpack.c.bf16 %v2722, %v2721
        %v2741 = vpack.c.bf16 %v2724, %v2723
        %v2742 = vpack.c.bf16 %v2726, %v2725
        %v2743 = vld [vmem:[%s6] sm:$0xf]
        %v2744 = vld [vmem:[%s6 + $0x4] sm:$0xf]
        %v2745 = vld [vmem:[%s6 + $0x8] sm:$0xf]
        %v2746 = vld [vmem:[%s6 + $0xc] sm:$0xf]
        %v2747 = vld [vmem:[%s6 + $0x10] sm:$0xf]
        %v2748 = vld [vmem:[%s6 + $0x14] sm:$0xf]
        %v2749 = vld [vmem:[%s6 + $0x18] sm:$0xf]
        %v2750 = vld [vmem:[%s6 + $0x1c] sm:$0xf]
        %v2751 = vld [vmem:[%s6 + $0x20] sm:$0xf]
        %v2752 = vld [vmem:[%s6 + $0x24] sm:$0xf]
        %v2753 = vld [vmem:[%s6 + $0x28] sm:$0xf]
        %v2754 = vld [vmem:[%s6 + $0x2c] sm:$0xf]
        %v2755 = vld [vmem:[%s6 + $0x30] sm:$0xf]
        %v2756 = vld [vmem:[%s6 + $0x34] sm:$0xf]
        %v2757 = vld [vmem:[%s6 + $0x38] sm:$0xf]
        %v2758 = vld [vmem:[%s6 + $0x3c] sm:$0xf]
        %v2759 = vld [vmem:[%s7] sm:$0x1]
        %v2761 = vlaneseq
        %v2762 = vshrl.u32 %v2761, 7
        %v2763 = vsub.s32 0, %v2762
        %v2764 = vrot.slane %v2759, %v2763
        %v2782 = vunpack.c.l.b16 %v2743
        %v2783 = vunpack.c.l.b16 %v2744
        %v2784 = vunpack.c.l.b16 %v2745
        %v2785 = vunpack.c.l.b16 %v2746
        %v2786 = vunpack.c.l.b16 %v2747
        %v2787 = vunpack.c.l.b16 %v2748
        %v2788 = vunpack.c.l.b16 %v2749
        %v2789 = vunpack.c.l.b16 %v2750
        %v2790 = vunpack.c.l.b16 %v2751
        %v2791 = vunpack.c.l.b16 %v2752
        %v2792 = vunpack.c.l.b16 %v2753
        %v2793 = vunpack.c.l.b16 %v2754
        %v2794 = vunpack.c.l.b16 %v2755
        %v2795 = vunpack.c.l.b16 %v2756
        %v2796 = vunpack.c.l.b16 %v2757
        %v2797 = vunpack.c.l.b16 %v2758
        %v2798 = vpack.c.b16 %v2783, %v2782
        %v2799 = vpack.c.b16 %v2785, %v2784
        %v2800 = vpack.c.b16 %v2787, %v2786
        %v2801 = vpack.c.b16 %v2789, %v2788
        %v2802 = vpack.c.b16 %v2791, %v2790
        %v2803 = vpack.c.b16 %v2793, %v2792
        %v2804 = vpack.c.b16 %v2795, %v2794
        %v2805 = vpack.c.b16 %v2797, %v2796
        %2814 = vmatprep.subr.bf16.mxu0 0
        %2815 = vmatpush1.bf16.msra.mxu0 %v2798
        %2816 = vmatprep.subr.bf16.mxu0 0
        %2817 = vmatpush1.bf16.msra.mxu0 %v2799
        %2818 = vmatprep.subr.bf16.mxu0 0
        %2819 = vmatpush1.bf16.msra.mxu0 %v2800
        %2820 = vmatprep.subr.bf16.mxu0 0
        %2821 = vmatpush1.bf16.msra.mxu0 %v2801
        %2822 = vmatprep.subr.bf16.mxu0 0
        %2823 = vmatpush1.bf16.msra.mxu0 %v2802
        %2824 = vmatprep.subr.bf16.mxu0 0
        %2825 = vmatpush1.bf16.msra.mxu0 %v2803
        %2826 = vmatprep.subr.bf16.mxu0 0
        %2827 = vmatpush1.bf16.msra.mxu0 %v2804
        %2828 = vmatprep.subr.bf16.mxu0 0
        %2829 = vmatpush1.bf16.msra.mxu0 %v2805
        %2830 = vmatprep.subr.bf16.mxu0 0
        %2831 = vmatpush1.bf16.msra.mxu0 0
        %2832 = vmatprep.subr.bf16.mxu0 0
        %2833 = vmatpush1.bf16.msra.mxu0 0
        %2834 = vmatprep.subr.bf16.mxu0 0
        %2835 = vmatpush1.bf16.msra.mxu0 0
        %2836 = vmatprep.subr.bf16.mxu0 0
        %2837 = vmatpush1.bf16.msra.mxu0 0
        %2838 = vmatprep.subr.bf16.mxu0 0
        %2839 = vmatpush1.bf16.msra.mxu0 0
        %2840 = vmatprep.subr.bf16.mxu0 0
        %2841 = vmatpush1.bf16.msra.mxu0 0
        %2842 = vmatprep.subr.bf16.mxu0 0
        %2843 = vmatpush1.bf16.msra.mxu0 0
        %2844 = vmatprep.subr.bf16.mxu0 0
        %2845 = vmatpush1.bf16.msra.mxu0 0
        %2846 = vmatprep.mubr.bf16.mxu0 0
        %2847 = vmatmul.mubr.bf16.gmra.mrb[0].mxu0 %v2727
        %v2848 = vpop.f32.mrb[0].mxu0
        %v2849 = vadd.f32 %v2764, %v2848
        %v2850 = vpop.f32.mrb[0].mxu0
        %v2851 = vpop.f32.mrb[0].mxu0
        %v2852 = vadd.f32 %v2764, %v2851
        %v2853 = vpop.f32.mrb[0].mxu0
        %2854 = vmatprep.mubr.bf16.mxu0 0
        %2855 = vmatmul.mubr.bf16.gmra.mrb[0].mxu0 %v2728
        %v2856 = vpop.f32.mrb[0].mxu0
        %v2857 = vadd.f32 %v2764, %v2856
        %v2858 = vpop.f32.mrb[0].mxu0
        %v2859 = vpop.f32.mrb[0].mxu0
        %v2860 = vadd.f32 %v2764, %v2859
        %v2861 = vpop.f32.mrb[0].mxu0
        %2862 = vmatprep.mubr.bf16.mxu0 0
        %2863 = vmatmul.mubr.bf16.gmra.mrb[0].mxu0 %v2729
        %v2864 = vpop.f32.mrb[0].mxu0
        %v2865 = vadd.f32 %v2764, %v2864
        %v2866 = vpop.f32.mrb[0].mxu0
        %v2867 = vpop.f32.mrb[0].mxu0
        %v2868 = vadd.f32 %v2764, %v2867
        %v2869 = vpop.f32.mrb[0].mxu0
        %2870 = vmatprep.mubr.bf16.mxu0 0
        %2871 = vmatmul.mubr.bf16.gmra.mrb[0].mxu0 %v2730
        %v2872 = vpop.f32.mrb[0].mxu0
        %v2873 = vadd.f32 %v2764, %v2872
        %v2874 = vpop.f32.mrb[0].mxu0
        %v2875 = vpop.f32.mrb[0].mxu0
        %v2876 = vadd.f32 %v2764, %v2875
        %v2877 = vpop.f32.mrb[0].mxu0
        %2878 = vmatprep.mubr.bf16.mxu0 0
        %2879 = vmatmul.mubr.bf16.gmra.mrb[0].mxu0 %v2731
        %v2880 = vpop.f32.mrb[0].mxu0
        %v2881 = vadd.f32 %v2764, %v2880
        %v2882 = vpop.f32.mrb[0].mxu0
        %v2883 = vpop.f32.mrb[0].mxu0
        %v2884 = vadd.f32 %v2764, %v2883
        %v2885 = vpop.f32.mrb[0].mxu0
        %2886 = vmatprep.mubr.bf16.mxu0 0
        %2887 = vmatmul.mubr.bf16.gmra.mrb[0].mxu0 %v2732
        %v2888 = vpop.f32.mrb[0].mxu0
        %v2889 = vadd.f32 %v2764, %v2888
        %v2890 = vpop.f32.mrb[0].mxu0
        %v2891 = vpop.f32.mrb[0].mxu0
        %v2892 = vadd.f32 %v2764, %v2891
        %v2893 = vpop.f32.mrb[0].mxu0
        %2894 = vmatprep.mubr.bf16.mxu0 0
        %2895 = vmatmul.mubr.bf16.gmra.mrb[0].mxu0 %v2733
        %v2896 = vpop.f32.mrb[0].mxu0
        %v2897 = vadd.f32 %v2764, %v2896
        %v2898 = vpop.f32.mrb[0].mxu0
        %v2899 = vpop.f32.mrb[0].mxu0
        %v2900 = vadd.f32 %v2764, %v2899
        %v2901 = vpop.f32.mrb[0].mxu0
        %2902 = vmatprep.mubr.bf16.mxu0 0
        %2903 = vmatmul.mubr.bf16.gmra.mrb[0].mxu0 %v2734
        %v2904 = vpop.f32.mrb[0].mxu0
        %v2905 = vadd.f32 %v2764, %v2904
        %v2906 = vpop.f32.mrb[0].mxu0
        %v2907 = vpop.f32.mrb[0].mxu0
        %v2908 = vadd.f32 %v2764, %v2907
        %v2909 = vpop.f32.mrb[0].mxu0
        %2910 = vmatprep.mubr.bf16.mxu0 0
        %2911 = vmatmul.mubr.bf16.gmra.mrb[0].mxu0 %v2735
        %v2912 = vpop.f32.mrb[0].mxu0
        %v2913 = vadd.f32 %v2764, %v2912
        %v2914 = vpop.f32.mrb[0].mxu0
        %v2915 = vpop.f32.mrb[0].mxu0
        %v2916 = vadd.f32 %v2764, %v2915
        %v2917 = vpop.f32.mrb[0].mxu0
        %2918 = vmatprep.mubr.bf16.mxu0 0
        %2919 = vmatmul.mubr.bf16.gmra.mrb[0].mxu0 %v2736
        %v2920 = vpop.f32.mrb[0].mxu0
        %v2921 = vadd.f32 %v2764, %v2920
        %v2922 = vpop.f32.mrb[0].mxu0
        %v2923 = vpop.f32.mrb[0].mxu0
        %v2924 = vadd.f32 %v2764, %v2923
        %v2925 = vpop.f32.mrb[0].mxu0
        %2926 = vmatprep.mubr.bf16.mxu0 0
        %2927 = vmatmul.mubr.bf16.gmra.mrb[0].mxu0 %v2737
        %v2928 = vpop.f32.mrb[0].mxu0
        %v2929 = vadd.f32 %v2764, %v2928
        %v2930 = vpop.f32.mrb[0].mxu0
        %v2931 = vpop.f32.mrb[0].mxu0
        %v2932 = vadd.f32 %v2764, %v2931
        %v2933 = vpop.f32.mrb[0].mxu0
        %2934 = vmatprep.mubr.bf16.mxu0 0
        %2935 = vmatmul.mubr.bf16.gmra.mrb[0].mxu0 %v2738
        %v2936 = vpop.f32.mrb[0].mxu0
        %v2937 = vadd.f32 %v2764, %v2936
        %v2938 = vpop.f32.mrb[0].mxu0
        %v2939 = vpop.f32.mrb[0].mxu0
        %v2940 = vadd.f32 %v2764, %v2939
        %v2941 = vpop.f32.mrb[0].mxu0
        %2942 = vmatprep.mubr.bf16.mxu0 0
        %2943 = vmatmul.mubr.bf16.gmra.mrb[0].mxu0 %v2739
        %v2944 = vpop.f32.mrb[0].mxu0
        %v2945 = vadd.f32 %v2764, %v2944
        %v2946 = vpop.f32.mrb[0].mxu0
        %v2947 = vpop.f32.mrb[0].mxu0
        %v2948 = vadd.f32 %v2764, %v2947
        %v2949 = vpop.f32.mrb[0].mxu0
        %2950 = vmatprep.mubr.bf16.mxu0 0
        %2951 = vmatmul.mubr.bf16.gmra.mrb[0].mxu0 %v2740
        %v2952 = vpop.f32.mrb[0].mxu0
        %v2953 = vadd.f32 %v2764, %v2952
        %v2954 = vpop.f32.mrb[0].mxu0
        %v2955 = vpop.f32.mrb[0].mxu0
        %v2956 = vadd.f32 %v2764, %v2955
        %v2957 = vpop.f32.mrb[0].mxu0
        %2958 = vmatprep.mubr.bf16.mxu0 0
        %2959 = vmatmul.mubr.bf16.gmra.mrb[0].mxu0 %v2741
        %v2960 = vpop.f32.mrb[0].mxu0
        %v2961 = vadd.f32 %v2764, %v2960
        %v2962 = vpop.f32.mrb[0].mxu0
        %v2963 = vpop.f32.mrb[0].mxu0
        %v2964 = vadd.f32 %v2764, %v2963
        %v2965 = vpop.f32.mrb[0].mxu0
        %2966 = vmatprep.mubr.bf16.mxu0 0
        %2967 = vmatmul.mubr.bf16.gmra.mrb[0].mxu0 %v2742
        %v2968 = vpop.f32.mrb[0].mxu0
        %v2969 = vadd.f32 %v2764, %v2968
        %v2970 = vpop.f32.mrb[0].mxu0
        %v2971 = vpop.f32.mrb[0].mxu0
        %v2972 = vadd.f32 %v2764, %v2971
        %v2973 = vpop.f32.mrb[0].mxu0
        %2974 = vdwg.mxu0
        %2975 = vst [vmem:[%s299] sm:$0xff] %v2849
        %2976 = vst [vmem:[%s299 + $0x8] sm:$0xff] %v2852
        %2977 = vst [vmem:[%s299 + $0x10] sm:$0xff] %v2857
        %2978 = vst [vmem:[%s299 + $0x18] sm:$0xff] %v2860
        %2979 = vst [vmem:[%s299 + $0x20] sm:$0xff] %v2865
        %2980 = vst [vmem:[%s299 + $0x28] sm:$0xff] %v2868
        %2981 = vst [vmem:[%s299 + $0x30] sm:$0xff] %v2873
        %2982 = vst [vmem:[%s299 + $0x38] sm:$0xff] %v2876
        %2983 = vst [vmem:[%s299 + $0x40] sm:$0xff] %v2881
        %2984 = vst [vmem:[%s299 + $0x48] sm:$0xff] %v2884
        %2985 = vst [vmem:[%s299 + $0x50] sm:$0xff] %v2889
        %2986 = vst [vmem:[%s299 + $0x58] sm:$0xff] %v2892
        %2987 = vst [vmem:[%s299 + $0x60] sm:$0xff] %v2897
        %2988 = vst [vmem:[%s299 + $0x68] sm:$0xff] %v2900
        %2989 = vst [vmem:[%s299 + $0x70] sm:$0xff] %v2905
        %2990 = vst [vmem:[%s299 + $0x78] sm:$0xff] %v2908
        %2991 = vst [vmem:[%s299 + $0x80] sm:$0xff] %v2913
        %2992 = vst [vmem:[%s299 + $0x88] sm:$0xff] %v2916
        %2993 = vst [vmem:[%s299 + $0x90] sm:$0xff] %v2921
        %2994 = vst [vmem:[%s299 + $0x98] sm:$0xff] %v2924
        %2995 = vst [vmem:[%s299 + $0xa0] sm:$0xff] %v2929
        %2996 = vst [vmem:[%s299 + $0xa8] sm:$0xff] %v2932
        %2997 = vst [vmem:[%s299 + $0xb0] sm:$0xff] %v2937
        %2998 = vst [vmem:[%s299 + $0xb8] sm:$0xff] %v2940
        %2999 = vst [vmem:[%s299 + $0xc0] sm:$0xff] %v2945
        %3000 = vst [vmem:[%s299 + $0xc8] sm:$0xff] %v2948
        %3001 = vst [vmem:[%s299 + $0xd0] sm:$0xff] %v2953
        %3002 = vst [vmem:[%s299 + $0xd8] sm:$0xff] %v2956
        %3003 = vst [vmem:[%s299 + $0xe0] sm:$0xff] %v2961
        %3004 = vst [vmem:[%s299 + $0xe8] sm:$0xff] %v2964
        %3005 = vst [vmem:[%s299 + $0xf0] sm:$0xff] %v2969
        %3006 = vst [vmem:[%s299 + $0xf8] sm:$0xff] %v2972
        %s3007 = sand.u32 %s203, 1
        %s3008 = scalar_lea.sflag [#allocation3], %s3007
        %s3009 = sand.u32 %s203, 1
        %s3010 = smul.addr %s3009, 256
        %s3011 = scalar_lea.vmem [#allocation2], %s3010
        // Predicated region
        $region53: #{local_pixelcnn_forward.1} parent=51 // pred_check
          %p3012 = pneg %p213
        $region54: #{local_pixelcnn_forward.1} parent=51 // pred_check_branch
          %3014 = sbr.rel (%p3012) target = $region56
        $region55: #{local_pixelcnn_forward.1} parent=51 // pred_region
          %s3015 = smul.u32 32, %s22
          %s3017 = ssub.s32 4096, 4096
          %3018 = vsyncadd %s3008, %s3017
          %s3019 = smul.addr %s3015, 128
          %s3020 = scalar_lea.hbm %s8, %s3019
          %s3021 = sshll.u32 %s3011, 4
          %s3022 = int_to_ptr.vmem [resolvable:$true] %s3021
          %3027 = dma.vmem_to_hbm [thread:$0]  %s3022, 4096, %s3020, %s3008, 128, 128, 8
        $region56: #{local_pixelcnn_forward.1} parent=51 // pred_fallthru
          _
      $region52: #{local_pixelcnn_forward.1} parent=5 // pred_fallthru
        _
      %p3028 = scmp.le.s32.totalorder 2, %s17
      // Predicated region
      $region57: #{local_pixelcnn_forward.1} parent=5 // pred_check
        %p3029 = pneg %p3028
      $region58: #{local_pixelcnn_forward.1} parent=5 // pred_check_branch
        %3031 = sbr.rel (%p3029) target = $region60
      $region59: #{local_pixelcnn_forward.1} parent=5 // pred_region
        %s3032 = ssub.s32 %s17, 2
        // Predicated region
        $region61: #{local_pixelcnn_forward.1} parent=59 // pred_check
          %p3033 = pneg %p219
        $region62: #{local_pixelcnn_forward.1} parent=59 // pred_check_branch
          %3035 = sbr.rel (%p3033) target = $region64
        $region63: #{local_pixelcnn_forward.1} parent=59 // pred_region
          %s3036 = sand.u32 %s204, 1
          %s3037 = scalar_lea.sflag [#allocation3], %s3036
          %s3038 = sand.u32 %s204, 1
          %s3039 = smul.addr %s3038, 256
          %s3040 = scalar_lea.vmem [#allocation2], %s3039
          %3041 = dma.done %s3037, 4096
        $region64: #{local_pixelcnn_forward.1} parent=59 // pred_fallthru
          _
      $region60: #{local_pixelcnn_forward.1} parent=5 // pred_fallthru
        _
    $region6: #{local_pixelcnn_forward.1} parent=1 // loop_footer
      %s21 = sadd.s32 1, %s17
    $region7: #{local_pixelcnn_forward.1} parent=1 // loop_footer_branch
      %16 = sbr.rel target = $region3
    $region8: #{local_pixelcnn_forward.1} parent=1 // loop_exit
      _
    %3042 = vsyncpa [#allocation3], 1
    %s3043 = scalar_lea.sflag [#allocation3], 1
    %3044 = vsyncpa %s3043, 1

</llo_original>
